<compile_context>
chip_gen: v7x
topology: tpu7x:2x2x1
jax: 0.10.0
libtpu: 0.0.40
codegen_flags: <defaults>
</compile_context>

<pallas_src>
import functools

import jax
import jax.numpy as jnp
from jax import lax
from jax.experimental import pallas as pl
from jax.experimental.pallas import tpu as pltpu


def _round_up(x: int, m: int) -> int:
    return ((x + m - 1) // m) * m


def pgf_kernel(ts_ref, w1_ref, p_logit_ref, p_row_ref, out_ref, *, compute_dtype):
    ts = ts_ref[...]                                   # (TM, D) f32 tile
    # gate logits = ts @ W1.T + (text @ W2.T + b)
    #   W1 stays in PyTorch (out, in) layout; contract ts dim 1 with W1 dim 1
    #   so no transposed copy of the weight is ever materialized.
    #   The second term is the precomputed (1, D) row; it broadcasts over TM.
    logits = lax.dot_general(
        ts.astype(compute_dtype),
        w1_ref[...],
        dimension_numbers=(((1,), (1,)), ((), ())),
        preferred_element_type=jnp.float32,
    ) + p_logit_ref[...]
    gate = jax.nn.sigmoid(logits)                      # f32 (EUP), keep elementwise in f32
    p = p_row_ref[...]                                 # (1, D) text row, broadcasts over TM
    out_ref[...] = (gate * ts + (1.0 - gate) * p).astype(out_ref.dtype)


def pgf_forward(ts_embeddings, text_embedding, weight, bias, *,
                tile_t: int = 256, compute_dtype=jnp.float32):
    """ts_embeddings: (T, D) f32; text_embedding: (D,) f32;
    weight: (D, 2D) f32 (PyTorch Linear layout); bias: (D,) f32."""
    T, D = ts_embeddings.shape
    assert weight.shape == (D, 2 * D)
    assert text_embedding.shape == (D,) and bias.shape == (D,)

    ts = ts_embeddings.astype(jnp.float32)

    # One-time wrapper-side precompute: fold the (row-constant) p_mean @ W2 + b
    # into a single (1, D) logit row; only pass that + the text row itself.
    w1 = weight[:, :D].astype(compute_dtype)                               # (D, D)
    p_logit = (weight[:, D:] @ text_embedding + bias).reshape(1, D).astype(jnp.float32)
    p_row = text_embedding.reshape(1, D).astype(jnp.float32)

    # Tile T; pad rows so every block is full (padded rows sliced away below).
    tm = _round_up(min(tile_t, _round_up(T, 8)), 8)
    t_pad = _round_up(T, tm)
    if t_pad != T:
        ts = jnp.pad(ts, ((0, t_pad - T), (0, 0)))
    grid = (t_pad // tm,)

    out = pl.pallas_call(
        functools.partial(pgf_kernel, compute_dtype=compute_dtype),
        out_shape=jax.ShapeDtypeStruct((t_pad, D), jnp.float32),
        grid=grid,
        in_specs=[
            pl.BlockSpec((tm, D), lambda i: (i, 0)),   # ts tiles: pipelined over the grid
            pl.BlockSpec((D, D), lambda i: (0, 0)),    # W1: VMEM-resident across all tiles
            pl.BlockSpec((1, D), lambda i: (0, 0)),    # precomputed p-logit row
            pl.BlockSpec((1, D), lambda i: (0, 0)),    # text embedding row
        ],
        out_specs=pl.BlockSpec((tm, D), lambda i: (i, 0)),
        compiler_params=pltpu.CompilerParams(
            dimension_semantics=("parallel",),         # v7x: split row tiles across both TCs
        ),
    )(ts, w1, p_logit, p_row)

    return out[:T] if t_pad != T else out


if __name__ == "__main__":
    # Module's embedding dim (768, a multiple of 128 -> lane-dense), small T.
    T, D = 512, 768

    key = jax.random.PRNGKey(0)
    k_ts, k_txt, k_w, k_b = jax.random.split(key, 4)

    ts_embeddings = jax.random.normal(k_ts, (T, D), dtype=jnp.float32)
    text_embedding = jax.random.normal(k_txt, (D,), dtype=jnp.float32)

    # Deterministic init matching nn.Linear(2D, D): weight (D, 2D), bias (D,)
    bound = 1.0 / jnp.sqrt(2.0 * D)
    weight = jax.random.uniform(k_w, (D, 2 * D), jnp.float32, -bound, bound)
    bias = jax.random.uniform(k_b, (D,), jnp.float32, -bound, bound)

    # Pure-JAX reference (same math as the PyTorch forward).
    p_mean = jnp.broadcast_to(text_embedding[None, :], (T, D))
    concat = jnp.concatenate([ts_embeddings, p_mean], axis=1)
    gate = jax.nn.sigmoid(concat @ weight.T + bias)
    ref = gate * ts_embeddings + (1.0 - gate) * p_mean

    # f32 MXU path (exact module semantics).
    fused = pgf_forward(ts_embeddings, text_embedding, weight, bias,
                        tile_t=256, compute_dtype=jnp.float32)
    fused = jax.block_until_ready(fused)
    assert jnp.allclose(fused, ref, atol=2e-5, rtol=2e-5)

    # bf16 MXU-input path (v6e/v5e bandwidth optimization); looser tolerance.
    fused_bf16 = pgf_forward(ts_embeddings, text_embedding, weight, bias,
                             tile_t=256, compute_dtype=jnp.bfloat16)
    fused_bf16 = jax.block_until_ready(fused_bf16)
    assert jnp.allclose(fused_bf16, ref, atol=2e-2, rtol=2e-2)

    print("KERNEL_OK")
</pallas_src>

<mosaic_0001>
module attributes {stable_mosaic.version = 11 : i64} {
  func.func @pgf_kernel(%arg0: i32, %arg1: memref<256x768xf32, #tpu.memory_space<vmem>>, %arg2: memref<768x768xf32, #tpu.memory_space<vmem>>, %arg3: memref<1x768xf32, #tpu.memory_space<vmem>>, %arg4: memref<1x768xf32, #tpu.memory_space<vmem>>, %arg5: memref<256x768xf32, #tpu.memory_space<vmem>>) attributes {dimension_semantics = [#tpu.dimension_semantics<parallel>], iteration_bounds = array<i64: 2>, scalar_prefetch = 0 : i64, scratch_operands = 0 : i64, tpu.core_type = #tpu.core_type<tc>, window_params = [{transform_indices = @transform_0, window_bounds = array<i64: 256, 768>}, {pipeline_mode = #tpu.pipeline_mode<synchronous>, transform_indices = @transform_1, window_bounds = array<i64: 768, 768>}, {pipeline_mode = #tpu.pipeline_mode<synchronous>, transform_indices = @transform_2, window_bounds = array<i64: 1, 768>}, {pipeline_mode = #tpu.pipeline_mode<synchronous>, transform_indices = @transform_3, window_bounds = array<i64: 1, 768>}, {transform_indices = @transform_4, window_bounds = array<i64: 256, 768>}]} {
    %c0 = arith.constant 0 : index
    %c0_0 = arith.constant 0 : index
    %0 = vector.load %arg1[%c0, %c0_0] : memref<256x768xf32, #tpu.memory_space<vmem>>, vector<256x768xf32>
    %c0_1 = arith.constant 0 : index
    %c0_2 = arith.constant 0 : index
    %1 = vector.load %arg2[%c0_1, %c0_2] : memref<768x768xf32, #tpu.memory_space<vmem>>, vector<768x768xf32>
    %cst = arith.constant dense<0.000000e+00> : vector<256x768xf32>
    %2 = tpu.matmul %0, %1, %cst {dimension_numbers = #tpu.dot_dimension_numbers<[1], [1], [0], [0], [0, 0, 1, 0], [], []>} : vector<256x768xf32>, vector<768x768xf32>, vector<256x768xf32> -> vector<256x768xf32>
    %c0_3 = arith.constant 0 : index
    %c0_4 = arith.constant 0 : index
    %3 = vector.load %arg3[%c0_3, %c0_4] : memref<1x768xf32, #tpu.memory_space<vmem>>, vector<1x768xf32>
    %4 = vector.broadcast %3 : vector<1x768xf32> to vector<256x768xf32>
    %5 = arith.addf %2, %4 : vector<256x768xf32>
    %6 = arith.negf %5 : vector<256x768xf32>
    %7 = math.exp %6 : vector<256x768xf32>
    %cst_5 = arith.constant 1.000000e+00 : f32
    %8 = vector.broadcast %cst_5 : f32 to vector<256x768xf32>
    %9 = arith.addf %8, %7 : vector<256x768xf32>
    %10 = arith.divf %8, %9 : vector<256x768xf32>
    %c0_6 = arith.constant 0 : index
    %c0_7 = arith.constant 0 : index
    %11 = vector.load %arg4[%c0_6, %c0_7] : memref<1x768xf32, #tpu.memory_space<vmem>>, vector<1x768xf32>
    %12 = arith.mulf %10, %0 : vector<256x768xf32>
    %cst_8 = arith.constant 1.000000e+00 : f32
    %13 = vector.broadcast %cst_8 : f32 to vector<256x768xf32>
    %14 = arith.subf %13, %10 : vector<256x768xf32>
    %15 = vector.broadcast %11 : vector<1x768xf32> to vector<256x768xf32>
    %16 = arith.mulf %14, %15 : vector<256x768xf32>
    %17 = arith.addf %12, %16 : vector<256x768xf32>
    %c0_9 = arith.constant 0 : index
    %c0_10 = arith.constant 0 : index
    %18 = vector.load %arg5[%c0_9, %c0_10] : memref<256x768xf32, #tpu.memory_space<vmem>>, vector<256x768xf32>
    tpu.vector_store %arg5[%c0_9, %c0_10], %17 {strides = array<i32>} : memref<256x768xf32, #tpu.memory_space<vmem>>, vector<256x768xf32>,
    return
  }
  func.func @transform_0(%arg0: i32) -> (i32, i32) {
    %c0_i32 = arith.constant 0 : i32
    %c0_i32_0 = arith.constant 0 : i32
    return %arg0, %c0_i32 : i32, i32
  }
  func.func @transform_1(%arg0: i32) -> (i32, i32) {
    %c0_i32 = arith.constant 0 : i32
    %c0_i32_0 = arith.constant 0 : i32
    %c0_i32_1 = arith.constant 0 : i32
    return %c0_i32, %c0_i32_0 : i32, i32
  }
  func.func @transform_2(%arg0: i32) -> (i32, i32) {
    %c0_i32 = arith.constant 0 : i32
    %c0_i32_0 = arith.constant 0 : i32
    %c0_i32_1 = arith.constant 0 : i32
    return %c0_i32, %c0_i32_0 : i32, i32
  }
  func.func @transform_3(%arg0: i32) -> (i32, i32) {
    %c0_i32 = arith.constant 0 : i32
    %c0_i32_0 = arith.constant 0 : i32
    %c0_i32_1 = arith.constant 0 : i32
    return %c0_i32, %c0_i32_0 : i32, i32
  }
  func.func @transform_4(%arg0: i32) -> (i32, i32) {
    %c0_i32 = arith.constant 0 : i32
    %c0_i32_0 = arith.constant 0 : i32
    return %arg0, %c0_i32 : i32, i32
  }
}

</mosaic_0001>

<llo_original>
// kernel: tpu_custom_call.1
$region0: #{tpu_custom_call.1}
  #allocation0 [shape = 'u32[]', space=smem, size = 0x4, offset = 0x4, fixed_abs, tag = 'smem constant byte address 0x4 - core index']
  #allocation1 [shape = 'u32[144,128]{1,0:T(1,128)}', space=vmem, size = 0x12000, scoped, tag = 'internal scratch']
  %s0 = inlined_call_operand.hbm [shape: f32[512,768], index: 0, kind: input, shape index: {}]
  %s1 = inlined_call_operand.hbm [shape: f32[768,768], index: 1, kind: input, shape index: {}]
  %s2 = inlined_call_operand.hbm [shape: f32[1,768], index: 2, kind: input, shape index: {}]
  %s3 = inlined_call_operand.hbm [shape: f32[1,768], index: 3, kind: input, shape index: {}]
  %s4 = inlined_call_operand.hbm [shape: f32[512,768], index: 4, kind: output, shape index: {}]
  %s5 = sld [smem:[#allocation0]]
  $region65: #{tpu_custom_call.1} parent=0
    _
  %s7 = ssub.s32 1, %s5
  %s8 = scalar_select 0, %s7, %s5
  $region1: #{tpu_custom_call.1} parent=0
    #allocation2 [shape = 'u8[1572864]{0}', space=vmem, size = 0x180000, scoped, tag = 'input window, operand 0']
    #allocation3 [shape = 's32[2]{0}', space=sflag, size = 0x8, scoped, tag = 'scoped memory for tpu_custom_call.1']
    #allocation4 [shape = 's32[2]{0}', space=sflag, size = 0x8, scoped, tag = 'scoped memory for tpu_custom_call.1']
    #allocation5 [shape = 'u8[2359296]{0}', space=vmem, size = 0x240000, scoped, tag = 'input window, operand 1, single buffered']
    #allocation6 [shape = 's32[1]{0}', space=sflag, size = 0x4, scoped, tag = 'scoped memory for tpu_custom_call.1']
    #allocation7 [shape = 'u8[3072]{0}', space=vmem, size = 0xc00, scoped, tag = 'input window, operand 2, single buffered']
    #allocation8 [shape = 'u8[3072]{0}', space=vmem, size = 0xc00, scoped, tag = 'input window, operand 3, single buffered']
    #allocation9 [shape = 's32[1]{0}', space=sflag, size = 0x4, scoped, tag = 'scoped memory for tpu_custom_call.1']
    #allocation10 [shape = 'u8[1572864]{0}', space=vmem, size = 0x180000, scoped, tag = 'output window, operand 0']
    %9 = vsyncpa [#allocation3], 0
    %s10 = scalar_lea.sflag [#allocation3], 1
    %11 = vsyncpa %s10, 0
    %12 = vsyncpa [#allocation6], 0
    %13 = vsyncpa [#allocation9], 0
    %14 = vsyncpa [#allocation4], 0
    %s15 = scalar_lea.sflag [#allocation4], 1
    %16 = vsyncpa %s15, 0
    loop: start=0, step=1, limit=4
    $region2: #{tpu_custom_call.1} parent=1 // loop_pre_header
      _
    $region3: #{tpu_custom_call.1} parent=1 // loop_header
      %s18 = sphi 0, %s22
      %p19 = scmp.ge.s32.totalorder %s18, 4
      %s28 = sphi 0, %s30
      %s31 = sphi 0, %s28
      %s32 = sphi 0, %s31
      %s48 = sphi 0, %s32
      %s52 = sphi 0, %s52
      %s54 = sphi 0, %s52
      %s55 = sphi 0, %s54
      %s69 = sphi 0, %s55
      %s73 = sphi 0, %s73
      %s75 = sphi 0, %s73
      %s76 = sphi 0, %s75
      %s90 = sphi 0, %s76
      %s94 = sphi 0, %s94
      %s96 = sphi 0, %s94
      %s97 = sphi 0, %s96
      %s111 = sphi 0, %s97
      %s117 = sphi 0, %s119
      %s120 = sphi 0, %s117
      %s121 = sphi 0, %s120
      %s137 = sphi 0, %s121
    $region4: #{tpu_custom_call.1} parent=1 // loop_header_branch
      %21 = sbr.rel (%p19) target = $region8
    $region5: #{tpu_custom_call.1} parent=1 // loop_body
      %s23 = ssub.s32 %s18, 1
      %s24 = ssub.s32 %s18, 2
      %s25 = sadd.s32 %s18, 1
      %s26 = ssub.s32 %s18, %s25
      %p27 = scmp.eq.s32.totalorder %s26, 0
      %s29 = sadd.s32 %s28, 1
      %s30 = scalar_select %p27, %s28, %s29
      %p33 = pneg %p27
      %p34 = scmp.eq.s32.totalorder %s18, 1
      %p35 = por %p33, %p34
      %p36 = scmp.ne.s32.totalorder %s28, %s31
      %p37 = scmp.eq.s32.totalorder %s18, 0
      %p38 = por %p36, %p37
      %p39 = scmp.ne.s32.totalorder %s28, %s31
      %p40 = scmp.eq.s32.totalorder %s23, 1
      %p41 = por %p39, %p40
      %p42 = scmp.ne.s32.totalorder %s31, %s32
      %p43 = scmp.eq.s32.totalorder %s23, 0
      %p44 = por %p42, %p43
      %p45 = scmp.ne.s32.totalorder %s31, %s32
      %p46 = scmp.eq.s32.totalorder %s24, 1
      %p47 = por %p45, %p46
      %p49 = scmp.ne.s32.totalorder %s32, %s48
      %p50 = scmp.eq.s32.totalorder %s24, 0
      %p51 = por %p49, %p50
      %s53 = sadd.s32 %s52, 1
      %p56 = scmp.eq.s32.totalorder %s18, 1
      %p57 = scmp.ne.s32.totalorder %s52, %s54
      %p58 = scmp.eq.s32.totalorder %s18, 0
      %p59 = por %p57, %p58
      %p60 = scmp.ne.s32.totalorder %s52, %s54
      %p61 = scmp.eq.s32.totalorder %s23, 1
      %p62 = por %p60, %p61
      %p63 = scmp.ne.s32.totalorder %s54, %s55
      %p64 = scmp.eq.s32.totalorder %s23, 0
      %p65 = por %p63, %p64
      %p66 = scmp.ne.s32.totalorder %s54, %s55
      %p67 = scmp.eq.s32.totalorder %s24, 1
      %p68 = por %p66, %p67
      %p70 = scmp.ne.s32.totalorder %s55, %s69
      %p71 = scmp.eq.s32.totalorder %s24, 0
      %p72 = por %p70, %p71
      %s74 = sadd.s32 %s73, 1
      %p77 = scmp.eq.s32.totalorder %s18, 1
      %p78 = scmp.ne.s32.totalorder %s73, %s75
      %p79 = scmp.eq.s32.totalorder %s18, 0
      %p80 = por %p78, %p79
      %p81 = scmp.ne.s32.totalorder %s73, %s75
      %p82 = scmp.eq.s32.totalorder %s23, 1
      %p83 = por %p81, %p82
      %p84 = scmp.ne.s32.totalorder %s75, %s76
      %p85 = scmp.eq.s32.totalorder %s23, 0
      %p86 = por %p84, %p85
      %p87 = scmp.ne.s32.totalorder %s75, %s76
      %p88 = scmp.eq.s32.totalorder %s24, 1
      %p89 = por %p87, %p88
      %p91 = scmp.ne.s32.totalorder %s76, %s90
      %p92 = scmp.eq.s32.totalorder %s24, 0
      %p93 = por %p91, %p92
      %s95 = sadd.s32 %s94, 1
      %p98 = scmp.eq.s32.totalorder %s18, 1
      %p99 = scmp.ne.s32.totalorder %s94, %s96
      %p100 = scmp.eq.s32.totalorder %s18, 0
      %p101 = por %p99, %p100
      %p102 = scmp.ne.s32.totalorder %s94, %s96
      %p103 = scmp.eq.s32.totalorder %s23, 1
      %p104 = por %p102, %p103
      %p105 = scmp.ne.s32.totalorder %s96, %s97
      %p106 = scmp.eq.s32.totalorder %s23, 0
      %p107 = por %p105, %p106
      %p108 = scmp.ne.s32.totalorder %s96, %s97
      %p109 = scmp.eq.s32.totalorder %s24, 1
      %p110 = por %p108, %p109
      %p112 = scmp.ne.s32.totalorder %s97, %s111
      %p113 = scmp.eq.s32.totalorder %s24, 0
      %p114 = por %p112, %p113
      %s115 = ssub.s32 %s18, %s25
      %p116 = scmp.eq.s32.totalorder %s115, 0
      %s118 = sadd.s32 %s117, 1
      %s119 = scalar_select %p116, %s117, %s118
      %p122 = pneg %p116
      %p123 = scmp.eq.s32.totalorder %s18, 1
      %p124 = por %p122, %p123
      %p125 = scmp.ne.s32.totalorder %s117, %s120
      %p126 = scmp.eq.s32.totalorder %s18, 0
      %p127 = por %p125, %p126
      %p128 = scmp.ne.s32.totalorder %s117, %s120
      %p129 = scmp.eq.s32.totalorder %s23, 1
      %p130 = por %p128, %p129
      %p131 = scmp.ne.s32.totalorder %s120, %s121
      %p132 = scmp.eq.s32.totalorder %s23, 0
      %p133 = por %p131, %p132
      %p134 = scmp.ne.s32.totalorder %s120, %s121
      %p135 = scmp.eq.s32.totalorder %s24, 1
      %p136 = por %p134, %p135
      %p138 = scmp.ne.s32.totalorder %s121, %s137
      %p139 = scmp.eq.s32.totalorder %s24, 0
      %p140 = por %p138, %p139
      %p141 = scmp.le.s32.totalorder 1, %s18
      %p142 = scmp.lt.s32.totalorder %s18, 3
      %p143 = pnand %p141, %p142
      %p144 = pneg %p143
      // Predicated region
      $region9: #{tpu_custom_call.1} parent=5 // pred_check
        _
      $region10: #{tpu_custom_call.1} parent=5 // pred_check_branch
        %146 = sbr.rel (%p143) target = $region12
      $region11: #{tpu_custom_call.1} parent=5 // pred_region
        %s147 = ssub.s32 %s18, 1
        // Predicated region
        $region13: #{tpu_custom_call.1} parent=11 // pred_check
          %p148 = pneg %p65
        $region14: #{tpu_custom_call.1} parent=11 // pred_check_branch
          %150 = sbr.rel (%p148) target = $region16
        $region15: #{tpu_custom_call.1} parent=11 // pred_region
          %s152 = ssub.s32 73728, 73728
          %153 = vsyncadd [#allocation6], %s152
          %s154 = sshll.u32 [#allocation5], 4
          %s155 = int_to_ptr.vmem [resolvable:$true] %s154
          %160 = dma.hbm_to_vmem [thread:$0]  %s1, 73728, %s155, [#allocation6], 768, 768, 48
        $region16: #{tpu_custom_call.1} parent=11 // pred_fallthru
          _
        // Predicated region
        $region17: #{tpu_custom_call.1} parent=11 // pred_check
          %p161 = pneg %p86
        $region18: #{tpu_custom_call.1} parent=11 // pred_check_branch
          %163 = sbr.rel (%p161) target = $region20
        $region19: #{tpu_custom_call.1} parent=11 // pred_region
          %s165 = ssub.s32 96, 96
          %166 = vsyncadd [#allocation6], %s165
          %s168 = sshll.u32 [#allocation7], 4
          %s169 = int_to_ptr.vmem [resolvable:$true] %s168
          %171 = dma.hbm_to_vmem [thread:$0]  %s2, 96, %s169, [#allocation6]
        $region20: #{tpu_custom_call.1} parent=11 // pred_fallthru
          _
        // Predicated region
        $region21: #{tpu_custom_call.1} parent=11 // pred_check
          %p172 = pneg %p107
        $region22: #{tpu_custom_call.1} parent=11 // pred_check_branch
          %174 = sbr.rel (%p172) target = $region24
        $region23: #{tpu_custom_call.1} parent=11 // pred_region
          %s176 = ssub.s32 96, 96
          %177 = vsyncadd [#allocation9], %s176
          %s179 = sshll.u32 [#allocation8], 4
          %s180 = int_to_ptr.vmem [resolvable:$true] %s179
          %182 = dma.hbm_to_vmem [thread:$0]  %s3, 96, %s180, [#allocation9]
        $region24: #{tpu_custom_call.1} parent=11 // pred_fallthru
          _
      $region12: #{tpu_custom_call.1} parent=5 // pred_fallthru
        _
      %p183 = scmp.lt.s32.totalorder %s18, 2
      // Predicated region
      $region25: #{tpu_custom_call.1} parent=5 // pred_check
        %p184 = pneg %p183
      $region26: #{tpu_custom_call.1} parent=5 // pred_check_branch
        %186 = sbr.rel (%p184) target = $region28
      $region27: #{tpu_custom_call.1} parent=5 // pred_region
        // Predicated region
        $region29: #{tpu_custom_call.1} parent=27 // pred_check
          %p187 = pneg %p38
        $region30: #{tpu_custom_call.1} parent=27 // pred_check_branch
          %189 = sbr.rel (%p187) target = $region32
        $region31: #{tpu_custom_call.1} parent=27 // pred_region
          %s190 = sand.u32 %s28, 1
          %s191 = scalar_lea.sflag [#allocation3], %s190
          %s192 = sand.u32 %s28, 1
          %s193 = smul.addr %s192, 1536
          %s194 = scalar_lea.vmem [#allocation2], %s193
          %s195 = smul.u32 32, %s18
          %s197 = ssub.s32 24576, 24576
          %198 = vsyncadd %s191, %s197
          %s199 = smul.addr %s195, 6
          %s200 = smul.addr %s199, 128
          %s201 = scalar_lea.hbm %s0, %s200
          %s202 = sshll.u32 %s194, 4
          %s203 = int_to_ptr.vmem [resolvable:$true] %s202
          %208 = dma.hbm_to_vmem [thread:$0]  %s201, 24576, %s203, %s191, 768, 768, 48
        $region32: #{tpu_custom_call.1} parent=27 // pred_fallthru
          _
      $region28: #{tpu_custom_call.1} parent=5 // pred_fallthru
        _
      %p209 = scmp.le.s32.totalorder 1, %s18
      %p210 = scmp.lt.s32.totalorder %s18, 3
      %p211 = pnand %p209, %p210
      %p212 = pneg %p211
      // Predicated region
      $region33: #{tpu_custom_call.1} parent=5 // pred_check
        _
      $region34: #{tpu_custom_call.1} parent=5 // pred_check_branch
        %214 = sbr.rel (%p211) target = $region36
      $region35: #{tpu_custom_call.1} parent=5 // pred_region
        %s215 = ssub.s32 %s18, 1
        %s216 = sand.u32 %s31, 1
        %s217 = scalar_lea.sflag [#allocation3], %s216
        %s218 = sand.u32 %s31, 1
        %s219 = smul.addr %s218, 1536
        %s220 = scalar_lea.vmem [#allocation2], %s219
        // Predicated region
        $region37: #{tpu_custom_call.1} parent=35 // pred_check
          %p221 = pneg %p44
        $region38: #{tpu_custom_call.1} parent=35 // pred_check_branch
          %223 = sbr.rel (%p221) target = $region40
        $region39: #{tpu_custom_call.1} parent=35 // pred_region
          %224 = dma.done %s217, 24576
        $region40: #{tpu_custom_call.1} parent=35 // pred_fallthru
          _
        // Predicated region
        $region41: #{tpu_custom_call.1} parent=35 // pred_check
          %p225 = pneg %p65
        $region42: #{tpu_custom_call.1} parent=35 // pred_check_branch
          %227 = sbr.rel (%p225) target = $region44
        $region43: #{tpu_custom_call.1} parent=35 // pred_region
          %228 = dma.done [#allocation6], 73728
        $region44: #{tpu_custom_call.1} parent=35 // pred_fallthru
          _
        // Predicated region
        $region45: #{tpu_custom_call.1} parent=35 // pred_check
          %p229 = pneg %p86
        $region46: #{tpu_custom_call.1} parent=35 // pred_check_branch
          %231 = sbr.rel (%p229) target = $region48
        $region47: #{tpu_custom_call.1} parent=35 // pred_region
          %232 = dma.done [#allocation6], 96
        $region48: #{tpu_custom_call.1} parent=35 // pred_fallthru
          _
        // Predicated region
        $region49: #{tpu_custom_call.1} parent=35 // pred_check
          %p233 = pneg %p107
        $region50: #{tpu_custom_call.1} parent=35 // pred_check_branch
          %235 = sbr.rel (%p233) target = $region52
        $region51: #{tpu_custom_call.1} parent=35 // pred_region
          %236 = dma.done [#allocation9], 96
        $region52: #{tpu_custom_call.1} parent=35 // pred_fallthru
          _
        %s237 = sand.u32 %s31, 1
        %s238 = scalar_lea.sflag [#allocation3], %s237
        %s239 = sand.u32 %s31, 1
        %s240 = smul.addr %s239, 1536
        %s241 = scalar_lea.vmem [#allocation2], %s240
        %p242 = pneg %p44
        %p243 = pneg %p41
        %p244 = pneg %p65
        %p245 = pneg %p62
        %p246 = pneg %p86
        %p247 = pneg %p83
        %p248 = pneg %p107
        %p249 = pneg %p104
        %p250 = pneg %p133
        %p251 = pneg %p130
        %s252 = sand.u32 %s120, 1
        %s253 = scalar_lea.sflag [#allocation4], %s252
        %s254 = sand.u32 %s120, 1
        %s255 = smul.addr %s254, 1536
        %s256 = scalar_lea.vmem [#allocation10], %s255
        %s257 = smul.u32 32, %s23
        %s258 = smul.u32 32, %s23
        %v259 = vld [vmem:[%s220] sm:$0xff]
        %v260 = vld [vmem:[%s220 + $0x8] sm:$0xff]
        %v261 = vld [vmem:[%s220 + $0x10] sm:$0xff]
        %v262 = vld [vmem:[%s220 + $0x18] sm:$0xff]
        %v263 = vld [vmem:[%s220 + $0x20] sm:$0xff]
        %v264 = vld [vmem:[%s220 + $0x28] sm:$0xff]
        %v265 = vld [vmem:[%s220 + $0x30] sm:$0xff]
        %v266 = vld [vmem:[%s220 + $0x38] sm:$0xff]
        %v267 = vld [vmem:[%s220 + $0x40] sm:$0xff]
        %v268 = vld [vmem:[%s220 + $0x48] sm:$0xff]
        %v269 = vld [vmem:[%s220 + $0x50] sm:$0xff]
        %v270 = vld [vmem:[%s220 + $0x58] sm:$0xff]
        %v271 = vld [vmem:[%s220 + $0x60] sm:$0xff]
        %v272 = vld [vmem:[%s220 + $0x68] sm:$0xff]
        %v273 = vld [vmem:[%s220 + $0x70] sm:$0xff]
        %v274 = vld [vmem:[%s220 + $0x78] sm:$0xff]
        %v275 = vld [vmem:[%s220 + $0x80] sm:$0xff]
        %v276 = vld [vmem:[%s220 + $0x88] sm:$0xff]
        %v277 = vld [vmem:[%s220 + $0x90] sm:$0xff]
        %v278 = vld [vmem:[%s220 + $0x98] sm:$0xff]
        %v279 = vld [vmem:[%s220 + $0xa0] sm:$0xff]
        %v280 = vld [vmem:[%s220 + $0xa8] sm:$0xff]
        %v281 = vld [vmem:[%s220 + $0xb0] sm:$0xff]
        %v282 = vld [vmem:[%s220 + $0xb8] sm:$0xff]
        %v283 = vld [vmem:[%s220 + $0xc0] sm:$0xff]
        %v284 = vld [vmem:[%s220 + $0xc8] sm:$0xff]
        %v285 = vld [vmem:[%s220 + $0xd0] sm:$0xff]
        %v286 = vld [vmem:[%s220 + $0xd8] sm:$0xff]
        %v287 = vld [vmem:[%s220 + $0xe0] sm:$0xff]
        %v288 = vld [vmem:[%s220 + $0xe8] sm:$0xff]
        %v289 = vld [vmem:[%s220 + $0xf0] sm:$0xff]
        %v290 = vld [vmem:[%s220 + $0xf8] sm:$0xff]
        %v291 = vld [vmem:[%s220 + $0x100] sm:$0xff]
        %v292 = vld [vmem:[%s220 + $0x108] sm:$0xff]
        %v293 = vld [vmem:[%s220 + $0x110] sm:$0xff]
        %v294 = vld [vmem:[%s220 + $0x118] sm:$0xff]
        %v295 = vld [vmem:[%s220 + $0x120] sm:$0xff]
        %v296 = vld [vmem:[%s220 + $0x128] sm:$0xff]
        %v297 = vld [vmem:[%s220 + $0x130] sm:$0xff]
        %v298 = vld [vmem:[%s220 + $0x138] sm:$0xff]
        %v299 = vld [vmem:[%s220 + $0x140] sm:$0xff]
        %v300 = vld [vmem:[%s220 + $0x148] sm:$0xff]
        %v301 = vld [vmem:[%s220 + $0x150] sm:$0xff]
        %v302 = vld [vmem:[%s220 + $0x158] sm:$0xff]
        %v303 = vld [vmem:[%s220 + $0x160] sm:$0xff]
        %v304 = vld [vmem:[%s220 + $0x168] sm:$0xff]
        %v305 = vld [vmem:[%s220 + $0x170] sm:$0xff]
        %v306 = vld [vmem:[%s220 + $0x178] sm:$0xff]
        %v307 = vld [vmem:[%s220 + $0x180] sm:$0xff]
        %v308 = vld [vmem:[%s220 + $0x188] sm:$0xff]
        %v309 = vld [vmem:[%s220 + $0x190] sm:$0xff]
        %v310 = vld [vmem:[%s220 + $0x198] sm:$0xff]
        %v311 = vld [vmem:[%s220 + $0x1a0] sm:$0xff]
        %v312 = vld [vmem:[%s220 + $0x1a8] sm:$0xff]
        %v313 = vld [vmem:[%s220 + $0x1b0] sm:$0xff]
        %v314 = vld [vmem:[%s220 + $0x1b8] sm:$0xff]
        %v315 = vld [vmem:[%s220 + $0x1c0] sm:$0xff]
        %v316 = vld [vmem:[%s220 + $0x1c8] sm:$0xff]
        %v317 = vld [vmem:[%s220 + $0x1d0] sm:$0xff]
        %v318 = vld [vmem:[%s220 + $0x1d8] sm:$0xff]
        %v319 = vld [vmem:[%s220 + $0x1e0] sm:$0xff]
        %v320 = vld [vmem:[%s220 + $0x1e8] sm:$0xff]
        %v321 = vld [vmem:[%s220 + $0x1f0] sm:$0xff]
        %v322 = vld [vmem:[%s220 + $0x1f8] sm:$0xff]
        %v323 = vld [vmem:[%s220 + $0x200] sm:$0xff]
        %v324 = vld [vmem:[%s220 + $0x208] sm:$0xff]
        %v325 = vld [vmem:[%s220 + $0x210] sm:$0xff]
        %v326 = vld [vmem:[%s220 + $0x218] sm:$0xff]
        %v327 = vld [vmem:[%s220 + $0x220] sm:$0xff]
        %v328 = vld [vmem:[%s220 + $0x228] sm:$0xff]
        %v329 = vld [vmem:[%s220 + $0x230] sm:$0xff]
        %v330 = vld [vmem:[%s220 + $0x238] sm:$0xff]
        %v331 = vld [vmem:[%s220 + $0x240] sm:$0xff]
        %v332 = vld [vmem:[%s220 + $0x248] sm:$0xff]
        %v333 = vld [vmem:[%s220 + $0x250] sm:$0xff]
        %v334 = vld [vmem:[%s220 + $0x258] sm:$0xff]
        %v335 = vld [vmem:[%s220 + $0x260] sm:$0xff]
        %v336 = vld [vmem:[%s220 + $0x268] sm:$0xff]
        %v337 = vld [vmem:[%s220 + $0x270] sm:$0xff]
        %v338 = vld [vmem:[%s220 + $0x278] sm:$0xff]
        %v339 = vld [vmem:[%s220 + $0x280] sm:$0xff]
        %v340 = vld [vmem:[%s220 + $0x288] sm:$0xff]
        %v341 = vld [vmem:[%s220 + $0x290] sm:$0xff]
        %v342 = vld [vmem:[%s220 + $0x298] sm:$0xff]
        %v343 = vld [vmem:[%s220 + $0x2a0] sm:$0xff]
        %v344 = vld [vmem:[%s220 + $0x2a8] sm:$0xff]
        %v345 = vld [vmem:[%s220 + $0x2b0] sm:$0xff]
        %v346 = vld [vmem:[%s220 + $0x2b8] sm:$0xff]
        %v347 = vld [vmem:[%s220 + $0x2c0] sm:$0xff]
        %v348 = vld [vmem:[%s220 + $0x2c8] sm:$0xff]
        %v349 = vld [vmem:[%s220 + $0x2d0] sm:$0xff]
        %v350 = vld [vmem:[%s220 + $0x2d8] sm:$0xff]
        %v351 = vld [vmem:[%s220 + $0x2e0] sm:$0xff]
        %v352 = vld [vmem:[%s220 + $0x2e8] sm:$0xff]
        %v353 = vld [vmem:[%s220 + $0x2f0] sm:$0xff]
        %v354 = vld [vmem:[%s220 + $0x2f8] sm:$0xff]
        %v355 = vld [vmem:[%s220 + $0x300] sm:$0xff]
        %v356 = vld [vmem:[%s220 + $0x308] sm:$0xff]
        %v357 = vld [vmem:[%s220 + $0x310] sm:$0xff]
        %v358 = vld [vmem:[%s220 + $0x318] sm:$0xff]
        %v359 = vld [vmem:[%s220 + $0x320] sm:$0xff]
        %v360 = vld [vmem:[%s220 + $0x328] sm:$0xff]
        %v361 = vld [vmem:[%s220 + $0x330] sm:$0xff]
        %v362 = vld [vmem:[%s220 + $0x338] sm:$0xff]
        %v363 = vld [vmem:[%s220 + $0x340] sm:$0xff]
        %v364 = vld [vmem:[%s220 + $0x348] sm:$0xff]
        %v365 = vld [vmem:[%s220 + $0x350] sm:$0xff]
        %v366 = vld [vmem:[%s220 + $0x358] sm:$0xff]
        %v367 = vld [vmem:[%s220 + $0x360] sm:$0xff]
        %v368 = vld [vmem:[%s220 + $0x368] sm:$0xff]
        %v369 = vld [vmem:[%s220 + $0x370] sm:$0xff]
        %v370 = vld [vmem:[%s220 + $0x378] sm:$0xff]
        %v371 = vld [vmem:[%s220 + $0x380] sm:$0xff]
        %v372 = vld [vmem:[%s220 + $0x388] sm:$0xff]
        %v373 = vld [vmem:[%s220 + $0x390] sm:$0xff]
        %v374 = vld [vmem:[%s220 + $0x398] sm:$0xff]
        %v375 = vld [vmem:[%s220 + $0x3a0] sm:$0xff]
        %v376 = vld [vmem:[%s220 + $0x3a8] sm:$0xff]
        %v377 = vld [vmem:[%s220 + $0x3b0] sm:$0xff]
        %v378 = vld [vmem:[%s220 + $0x3b8] sm:$0xff]
        %v379 = vld [vmem:[%s220 + $0x3c0] sm:$0xff]
        %v380 = vld [vmem:[%s220 + $0x3c8] sm:$0xff]
        %v381 = vld [vmem:[%s220 + $0x3d0] sm:$0xff]
        %v382 = vld [vmem:[%s220 + $0x3d8] sm:$0xff]
        %v383 = vld [vmem:[%s220 + $0x3e0] sm:$0xff]
        %v384 = vld [vmem:[%s220 + $0x3e8] sm:$0xff]
        %v385 = vld [vmem:[%s220 + $0x3f0] sm:$0xff]
        %v386 = vld [vmem:[%s220 + $0x3f8] sm:$0xff]
        %v387 = vld [vmem:[%s220 + $0x400] sm:$0xff]
        %v388 = vld [vmem:[%s220 + $0x408] sm:$0xff]
        %v389 = vld [vmem:[%s220 + $0x410] sm:$0xff]
        %v390 = vld [vmem:[%s220 + $0x418] sm:$0xff]
        %v391 = vld [vmem:[%s220 + $0x420] sm:$0xff]
        %v392 = vld [vmem:[%s220 + $0x428] sm:$0xff]
        %v393 = vld [vmem:[%s220 + $0x430] sm:$0xff]
        %v394 = vld [vmem:[%s220 + $0x438] sm:$0xff]
        %v395 = vld [vmem:[%s220 + $0x440] sm:$0xff]
        %v396 = vld [vmem:[%s220 + $0x448] sm:$0xff]
        %v397 = vld [vmem:[%s220 + $0x450] sm:$0xff]
        %v398 = vld [vmem:[%s220 + $0x458] sm:$0xff]
        %v399 = vld [vmem:[%s220 + $0x460] sm:$0xff]
        %v400 = vld [vmem:[%s220 + $0x468] sm:$0xff]
        %v401 = vld [vmem:[%s220 + $0x470] sm:$0xff]
        %v402 = vld [vmem:[%s220 + $0x478] sm:$0xff]
        %v403 = vld [vmem:[%s220 + $0x480] sm:$0xff]
        %v404 = vld [vmem:[%s220 + $0x488] sm:$0xff]
        %v405 = vld [vmem:[%s220 + $0x490] sm:$0xff]
        %v406 = vld [vmem:[%s220 + $0x498] sm:$0xff]
        %v407 = vld [vmem:[%s220 + $0x4a0] sm:$0xff]
        %v408 = vld [vmem:[%s220 + $0x4a8] sm:$0xff]
        %v409 = vld [vmem:[%s220 + $0x4b0] sm:$0xff]
        %v410 = vld [vmem:[%s220 + $0x4b8] sm:$0xff]
        %v411 = vld [vmem:[%s220 + $0x4c0] sm:$0xff]
        %v412 = vld [vmem:[%s220 + $0x4c8] sm:$0xff]
        %v413 = vld [vmem:[%s220 + $0x4d0] sm:$0xff]
        %v414 = vld [vmem:[%s220 + $0x4d8] sm:$0xff]
        %v415 = vld [vmem:[%s220 + $0x4e0] sm:$0xff]
        %v416 = vld [vmem:[%s220 + $0x4e8] sm:$0xff]
        %v417 = vld [vmem:[%s220 + $0x4f0] sm:$0xff]
        %v418 = vld [vmem:[%s220 + $0x4f8] sm:$0xff]
        %v419 = vld [vmem:[%s220 + $0x500] sm:$0xff]
        %v420 = vld [vmem:[%s220 + $0x508] sm:$0xff]
        %v421 = vld [vmem:[%s220 + $0x510] sm:$0xff]
        %v422 = vld [vmem:[%s220 + $0x518] sm:$0xff]
        %v423 = vld [vmem:[%s220 + $0x520] sm:$0xff]
        %v424 = vld [vmem:[%s220 + $0x528] sm:$0xff]
        %v425 = vld [vmem:[%s220 + $0x530] sm:$0xff]
        %v426 = vld [vmem:[%s220 + $0x538] sm:$0xff]
        %v427 = vld [vmem:[%s220 + $0x540] sm:$0xff]
        %v428 = vld [vmem:[%s220 + $0x548] sm:$0xff]
        %v429 = vld [vmem:[%s220 + $0x550] sm:$0xff]
        %v430 = vld [vmem:[%s220 + $0x558] sm:$0xff]
        %v431 = vld [vmem:[%s220 + $0x560] sm:$0xff]
        %v432 = vld [vmem:[%s220 + $0x568] sm:$0xff]
        %v433 = vld [vmem:[%s220 + $0x570] sm:$0xff]
        %v434 = vld [vmem:[%s220 + $0x578] sm:$0xff]
        %v435 = vld [vmem:[%s220 + $0x580] sm:$0xff]
        %v436 = vld [vmem:[%s220 + $0x588] sm:$0xff]
        %v437 = vld [vmem:[%s220 + $0x590] sm:$0xff]
        %v438 = vld [vmem:[%s220 + $0x598] sm:$0xff]
        %v439 = vld [vmem:[%s220 + $0x5a0] sm:$0xff]
        %v440 = vld [vmem:[%s220 + $0x5a8] sm:$0xff]
        %v441 = vld [vmem:[%s220 + $0x5b0] sm:$0xff]
        %v442 = vld [vmem:[%s220 + $0x5b8] sm:$0xff]
        %v443 = vld [vmem:[%s220 + $0x5c0] sm:$0xff]
        %v444 = vld [vmem:[%s220 + $0x5c8] sm:$0xff]
        %v445 = vld [vmem:[%s220 + $0x5d0] sm:$0xff]
        %v446 = vld [vmem:[%s220 + $0x5d8] sm:$0xff]
        %v447 = vld [vmem:[%s220 + $0x5e0] sm:$0xff]
        %v448 = vld [vmem:[%s220 + $0x5e8] sm:$0xff]
        %v449 = vld [vmem:[%s220 + $0x5f0] sm:$0xff]
        %v450 = vld [vmem:[%s220 + $0x5f8] sm:$0xff]
        %v451 = vld [vmem:[#allocation5] sm:$0xff]
        %v452 = vld [vmem:[#allocation5 + $0x8] sm:$0xff]
        %v453 = vld [vmem:[#allocation5 + $0x10] sm:$0xff]
        %v454 = vld [vmem:[#allocation5 + $0x18] sm:$0xff]
        %v455 = vld [vmem:[#allocation5 + $0x20] sm:$0xff]
        %v456 = vld [vmem:[#allocation5 + $0x28] sm:$0xff]
        %v457 = vld [vmem:[#allocation5 + $0x30] sm:$0xff]
        %v458 = vld [vmem:[#allocation5 + $0x38] sm:$0xff]
        %v459 = vld [vmem:[#allocation5 + $0x40] sm:$0xff]
        %v460 = vld [vmem:[#allocation5 + $0x48] sm:$0xff]
        %v461 = vld [vmem:[#allocation5 + $0x50] sm:$0xff]
        %v462 = vld [vmem:[#allocation5 + $0x58] sm:$0xff]
        %v463 = vld [vmem:[#allocation5 + $0x60] sm:$0xff]
        %v464 = vld [vmem:[#allocation5 + $0x68] sm:$0xff]
        %v465 = vld [vmem:[#allocation5 + $0x70] sm:$0xff]
        %v466 = vld [vmem:[#allocation5 + $0x78] sm:$0xff]
        %v467 = vld [vmem:[#allocation5 + $0x80] sm:$0xff]
        %v468 = vld [vmem:[#allocation5 + $0x88] sm:$0xff]
        %v469 = vld [vmem:[#allocation5 + $0x90] sm:$0xff]
        %v470 = vld [vmem:[#allocation5 + $0x98] sm:$0xff]
        %v471 = vld [vmem:[#allocation5 + $0xa0] sm:$0xff]
        %v472 = vld [vmem:[#allocation5 + $0xa8] sm:$0xff]
        %v473 = vld [vmem:[#allocation5 + $0xb0] sm:$0xff]
        %v474 = vld [vmem:[#allocation5 + $0xb8] sm:$0xff]
        %v475 = vld [vmem:[#allocation5 + $0xc0] sm:$0xff]
        %v476 = vld [vmem:[#allocation5 + $0xc8] sm:$0xff]
        %v477 = vld [vmem:[#allocation5 + $0xd0] sm:$0xff]
        %v478 = vld [vmem:[#allocation5 + $0xd8] sm:$0xff]
        %v479 = vld [vmem:[#allocation5 + $0xe0] sm:$0xff]
        %v480 = vld [vmem:[#allocation5 + $0xe8] sm:$0xff]
        %v481 = vld [vmem:[#allocation5 + $0xf0] sm:$0xff]
        %v482 = vld [vmem:[#allocation5 + $0xf8] sm:$0xff]
        %v483 = vld [vmem:[#allocation5 + $0x100] sm:$0xff]
        %v484 = vld [vmem:[#allocation5 + $0x108] sm:$0xff]
        %v485 = vld [vmem:[#allocation5 + $0x110] sm:$0xff]
        %v486 = vld [vmem:[#allocation5 + $0x118] sm:$0xff]
        %v487 = vld [vmem:[#allocation5 + $0x120] sm:$0xff]
        %v488 = vld [vmem:[#allocation5 + $0x128] sm:$0xff]
        %v489 = vld [vmem:[#allocation5 + $0x130] sm:$0xff]
        %v490 = vld [vmem:[#allocation5 + $0x138] sm:$0xff]
        %v491 = vld [vmem:[#allocation5 + $0x140] sm:$0xff]
        %v492 = vld [vmem:[#allocation5 + $0x148] sm:$0xff]
        %v493 = vld [vmem:[#allocation5 + $0x150] sm:$0xff]
        %v494 = vld [vmem:[#allocation5 + $0x158] sm:$0xff]
        %v495 = vld [vmem:[#allocation5 + $0x160] sm:$0xff]
        %v496 = vld [vmem:[#allocation5 + $0x168] sm:$0xff]
        %v497 = vld [vmem:[#allocation5 + $0x170] sm:$0xff]
        %v498 = vld [vmem:[#allocation5 + $0x178] sm:$0xff]
        %v499 = vld [vmem:[#allocation5 + $0x180] sm:$0xff]
        %v500 = vld [vmem:[#allocation5 + $0x188] sm:$0xff]
        %v501 = vld [vmem:[#allocation5 + $0x190] sm:$0xff]
        %v502 = vld [vmem:[#allocation5 + $0x198] sm:$0xff]
        %v503 = vld [vmem:[#allocation5 + $0x1a0] sm:$0xff]
        %v504 = vld [vmem:[#allocation5 + $0x1a8] sm:$0xff]
        %v505 = vld [vmem:[#allocation5 + $0x1b0] sm:$0xff]
        %v506 = vld [vmem:[#allocation5 + $0x1b8] sm:$0xff]
        %v507 = vld [vmem:[#allocation5 + $0x1c0] sm:$0xff]
        %v508 = vld [vmem:[#allocation5 + $0x1c8] sm:$0xff]
        %v509 = vld [vmem:[#allocation5 + $0x1d0] sm:$0xff]
        %v510 = vld [vmem:[#allocation5 + $0x1d8] sm:$0xff]
        %v511 = vld [vmem:[#allocation5 + $0x1e0] sm:$0xff]
        %v512 = vld [vmem:[#allocation5 + $0x1e8] sm:$0xff]
        %v513 = vld [vmem:[#allocation5 + $0x1f0] sm:$0xff]
        %v514 = vld [vmem:[#allocation5 + $0x1f8] sm:$0xff]
        %v515 = vld [vmem:[#allocation5 + $0x200] sm:$0xff]
        %v516 = vld [vmem:[#allocation5 + $0x208] sm:$0xff]
        %v517 = vld [vmem:[#allocation5 + $0x210] sm:$0xff]
        %v518 = vld [vmem:[#allocation5 + $0x218] sm:$0xff]
        %v519 = vld [vmem:[#allocation5 + $0x220] sm:$0xff]
        %v520 = vld [vmem:[#allocation5 + $0x228] sm:$0xff]
        %v521 = vld [vmem:[#allocation5 + $0x230] sm:$0xff]
        %v522 = vld [vmem:[#allocation5 + $0x238] sm:$0xff]
        %v523 = vld [vmem:[#allocation5 + $0x240] sm:$0xff]
        %v524 = vld [vmem:[#allocation5 + $0x248] sm:$0xff]
        %v525 = vld [vmem:[#allocation5 + $0x250] sm:$0xff]
        %v526 = vld [vmem:[#allocation5 + $0x258] sm:$0xff]
        %v527 = vld [vmem:[#allocation5 + $0x260] sm:$0xff]
        %v528 = vld [vmem:[#allocation5 + $0x268] sm:$0xff]
        %v529 = vld [vmem:[#allocation5 + $0x270] sm:$0xff]
        %v530 = vld [vmem:[#allocation5 + $0x278] sm:$0xff]
        %v531 = vld [vmem:[#allocation5 + $0x280] sm:$0xff]
        %v532 = vld [vmem:[#allocation5 + $0x288] sm:$0xff]
        %v533 = vld [vmem:[#allocation5 + $0x290] sm:$0xff]
        %v534 = vld [vmem:[#allocation5 + $0x298] sm:$0xff]
        %v535 = vld [vmem:[#allocation5 + $0x2a0] sm:$0xff]
        %v536 = vld [vmem:[#allocation5 + $0x2a8] sm:$0xff]
        %v537 = vld [vmem:[#allocation5 + $0x2b0] sm:$0xff]
        %v538 = vld [vmem:[#allocation5 + $0x2b8] sm:$0xff]
        %v539 = vld [vmem:[#allocation5 + $0x2c0] sm:$0xff]
        %v540 = vld [vmem:[#allocation5 + $0x2c8] sm:$0xff]
        %v541 = vld [vmem:[#allocation5 + $0x2d0] sm:$0xff]
        %v542 = vld [vmem:[#allocation5 + $0x2d8] sm:$0xff]
        %v543 = vld [vmem:[#allocation5 + $0x2e0] sm:$0xff]
        %v544 = vld [vmem:[#allocation5 + $0x2e8] sm:$0xff]
        %v545 = vld [vmem:[#allocation5 + $0x2f0] sm:$0xff]
        %v546 = vld [vmem:[#allocation5 + $0x2f8] sm:$0xff]
        %v547 = vld [vmem:[#allocation5 + $0x300] sm:$0xff]
        %v548 = vld [vmem:[#allocation5 + $0x308] sm:$0xff]
        %v549 = vld [vmem:[#allocation5 + $0x310] sm:$0xff]
        %v550 = vld [vmem:[#allocation5 + $0x318] sm:$0xff]
        %v551 = vld [vmem:[#allocation5 + $0x320] sm:$0xff]
        %v552 = vld [vmem:[#allocation5 + $0x328] sm:$0xff]
        %v553 = vld [vmem:[#allocation5 + $0x330] sm:$0xff]
        %v554 = vld [vmem:[#allocation5 + $0x338] sm:$0xff]
        %v555 = vld [vmem:[#allocation5 + $0x340] sm:$0xff]
        %v556 = vld [vmem:[#allocation5 + $0x348] sm:$0xff]
        %v557 = vld [vmem:[#allocation5 + $0x350] sm:$0xff]
        %v558 = vld [vmem:[#allocation5 + $0x358] sm:$0xff]
        %v559 = vld [vmem:[#allocation5 + $0x360] sm:$0xff]
        %v560 = vld [vmem:[#allocation5 + $0x368] sm:$0xff]
        %v561 = vld [vmem:[#allocation5 + $0x370] sm:$0xff]
        %v562 = vld [vmem:[#allocation5 + $0x378] sm:$0xff]
        %v563 = vld [vmem:[#allocation5 + $0x380] sm:$0xff]
        %v564 = vld [vmem:[#allocation5 + $0x388] sm:$0xff]
        %v565 = vld [vmem:[#allocation5 + $0x390] sm:$0xff]
        %v566 = vld [vmem:[#allocation5 + $0x398] sm:$0xff]
        %v567 = vld [vmem:[#allocation5 + $0x3a0] sm:$0xff]
        %v568 = vld [vmem:[#allocation5 + $0x3a8] sm:$0xff]
        %v569 = vld [vmem:[#allocation5 + $0x3b0] sm:$0xff]
        %v570 = vld [vmem:[#allocation5 + $0x3b8] sm:$0xff]
        %v571 = vld [vmem:[#allocation5 + $0x3c0] sm:$0xff]
        %v572 = vld [vmem:[#allocation5 + $0x3c8] sm:$0xff]
        %v573 = vld [vmem:[#allocation5 + $0x3d0] sm:$0xff]
        %v574 = vld [vmem:[#allocation5 + $0x3d8] sm:$0xff]
        %v575 = vld [vmem:[#allocation5 + $0x3e0] sm:$0xff]
        %v576 = vld [vmem:[#allocation5 + $0x3e8] sm:$0xff]
        %v577 = vld [vmem:[#allocation5 + $0x3f0] sm:$0xff]
        %v578 = vld [vmem:[#allocation5 + $0x3f8] sm:$0xff]
        %v579 = vld [vmem:[#allocation5 + $0x400] sm:$0xff]
        %v580 = vld [vmem:[#allocation5 + $0x408] sm:$0xff]
        %v581 = vld [vmem:[#allocation5 + $0x410] sm:$0xff]
        %v582 = vld [vmem:[#allocation5 + $0x418] sm:$0xff]
        %v583 = vld [vmem:[#allocation5 + $0x420] sm:$0xff]
        %v584 = vld [vmem:[#allocation5 + $0x428] sm:$0xff]
        %v585 = vld [vmem:[#allocation5 + $0x430] sm:$0xff]
        %v586 = vld [vmem:[#allocation5 + $0x438] sm:$0xff]
        %v587 = vld [vmem:[#allocation5 + $0x440] sm:$0xff]
        %v588 = vld [vmem:[#allocation5 + $0x448] sm:$0xff]
        %v589 = vld [vmem:[#allocation5 + $0x450] sm:$0xff]
        %v590 = vld [vmem:[#allocation5 + $0x458] sm:$0xff]
        %v591 = vld [vmem:[#allocation5 + $0x460] sm:$0xff]
        %v592 = vld [vmem:[#allocation5 + $0x468] sm:$0xff]
        %v593 = vld [vmem:[#allocation5 + $0x470] sm:$0xff]
        %v594 = vld [vmem:[#allocation5 + $0x478] sm:$0xff]
        %v595 = vld [vmem:[#allocation5 + $0x480] sm:$0xff]
        %v596 = vld [vmem:[#allocation5 + $0x488] sm:$0xff]
        %v597 = vld [vmem:[#allocation5 + $0x490] sm:$0xff]
        %v598 = vld [vmem:[#allocation5 + $0x498] sm:$0xff]
        %v599 = vld [vmem:[#allocation5 + $0x4a0] sm:$0xff]
        %v600 = vld [vmem:[#allocation5 + $0x4a8] sm:$0xff]
        %v601 = vld [vmem:[#allocation5 + $0x4b0] sm:$0xff]
        %v602 = vld [vmem:[#allocation5 + $0x4b8] sm:$0xff]
        %v603 = vld [vmem:[#allocation5 + $0x4c0] sm:$0xff]
        %v604 = vld [vmem:[#allocation5 + $0x4c8] sm:$0xff]
        %v605 = vld [vmem:[#allocation5 + $0x4d0] sm:$0xff]
        %v606 = vld [vmem:[#allocation5 + $0x4d8] sm:$0xff]
        %v607 = vld [vmem:[#allocation5 + $0x4e0] sm:$0xff]
        %v608 = vld [vmem:[#allocation5 + $0x4e8] sm:$0xff]
        %v609 = vld [vmem:[#allocation5 + $0x4f0] sm:$0xff]
        %v610 = vld [vmem:[#allocation5 + $0x4f8] sm:$0xff]
        %v611 = vld [vmem:[#allocation5 + $0x500] sm:$0xff]
        %v612 = vld [vmem:[#allocation5 + $0x508] sm:$0xff]
        %v613 = vld [vmem:[#allocation5 + $0x510] sm:$0xff]
        %v614 = vld [vmem:[#allocation5 + $0x518] sm:$0xff]
        %v615 = vld [vmem:[#allocation5 + $0x520] sm:$0xff]
        %v616 = vld [vmem:[#allocation5 + $0x528] sm:$0xff]
        %v617 = vld [vmem:[#allocation5 + $0x530] sm:$0xff]
        %v618 = vld [vmem:[#allocation5 + $0x538] sm:$0xff]
        %v619 = vld [vmem:[#allocation5 + $0x540] sm:$0xff]
        %v620 = vld [vmem:[#allocation5 + $0x548] sm:$0xff]
        %v621 = vld [vmem:[#allocation5 + $0x550] sm:$0xff]
        %v622 = vld [vmem:[#allocation5 + $0x558] sm:$0xff]
        %v623 = vld [vmem:[#allocation5 + $0x560] sm:$0xff]
        %v624 = vld [vmem:[#allocation5 + $0x568] sm:$0xff]
        %v625 = vld [vmem:[#allocation5 + $0x570] sm:$0xff]
        %v626 = vld [vmem:[#allocation5 + $0x578] sm:$0xff]
        %v627 = vld [vmem:[#allocation5 + $0x580] sm:$0xff]
        %v628 = vld [vmem:[#allocation5 + $0x588] sm:$0xff]
        %v629 = vld [vmem:[#allocation5 + $0x590] sm:$0xff]
        %v630 = vld [vmem:[#allocation5 + $0x598] sm:$0xff]
        %v631 = vld [vmem:[#allocation5 + $0x5a0] sm:$0xff]
        %v632 = vld [vmem:[#allocation5 + $0x5a8] sm:$0xff]
        %v633 = vld [vmem:[#allocation5 + $0x5b0] sm:$0xff]
        %v634 = vld [vmem:[#allocation5 + $0x5b8] sm:$0xff]
        %v635 = vld [vmem:[#allocation5 + $0x5c0] sm:$0xff]
        %v636 = vld [vmem:[#allocation5 + $0x5c8] sm:$0xff]
        %v637 = vld [vmem:[#allocation5 + $0x5d0] sm:$0xff]
        %v638 = vld [vmem:[#allocation5 + $0x5d8] sm:$0xff]
        %v639 = vld [vmem:[#allocation5 + $0x5e0] sm:$0xff]
        %v640 = vld [vmem:[#allocation5 + $0x5e8] sm:$0xff]
        %v641 = vld [vmem:[#allocation5 + $0x5f0] sm:$0xff]
        %v642 = vld [vmem:[#allocation5 + $0x5f8] sm:$0xff]
        %v643 = vld [vmem:[#allocation5 + $0x600] sm:$0xff]
        %v644 = vld [vmem:[#allocation5 + $0x608] sm:$0xff]
        %v645 = vld [vmem:[#allocation5 + $0x610] sm:$0xff]
        %v646 = vld [vmem:[#allocation5 + $0x618] sm:$0xff]
        %v647 = vld [vmem:[#allocation5 + $0x620] sm:$0xff]
        %v648 = vld [vmem:[#allocation5 + $0x628] sm:$0xff]
        %v649 = vld [vmem:[#allocation5 + $0x630] sm:$0xff]
        %v650 = vld [vmem:[#allocation5 + $0x638] sm:$0xff]
        %v651 = vld [vmem:[#allocation5 + $0x640] sm:$0xff]
        %v652 = vld [vmem:[#allocation5 + $0x648] sm:$0xff]
        %v653 = vld [vmem:[#allocation5 + $0x650] sm:$0xff]
        %v654 = vld [vmem:[#allocation5 + $0x658] sm:$0xff]
        %v655 = vld [vmem:[#allocation5 + $0x660] sm:$0xff]
        %v656 = vld [vmem:[#allocation5 + $0x668] sm:$0xff]
        %v657 = vld [vmem:[#allocation5 + $0x670] sm:$0xff]
        %v658 = vld [vmem:[#allocation5 + $0x678] sm:$0xff]
        %v659 = vld [vmem:[#allocation5 + $0x680] sm:$0xff]
        %v660 = vld [vmem:[#allocation5 + $0x688] sm:$0xff]
        %v661 = vld [vmem:[#allocation5 + $0x690] sm:$0xff]
        %v662 = vld [vmem:[#allocation5 + $0x698] sm:$0xff]
        %v663 = vld [vmem:[#allocation5 + $0x6a0] sm:$0xff]
        %v664 = vld [vmem:[#allocation5 + $0x6a8] sm:$0xff]
        %v665 = vld [vmem:[#allocation5 + $0x6b0] sm:$0xff]
        %v666 = vld [vmem:[#allocation5 + $0x6b8] sm:$0xff]
        %v667 = vld [vmem:[#allocation5 + $0x6c0] sm:$0xff]
        %v668 = vld [vmem:[#allocation5 + $0x6c8] sm:$0xff]
        %v669 = vld [vmem:[#allocation5 + $0x6d0] sm:$0xff]
        %v670 = vld [vmem:[#allocation5 + $0x6d8] sm:$0xff]
        %v671 = vld [vmem:[#allocation5 + $0x6e0] sm:$0xff]
        %v672 = vld [vmem:[#allocation5 + $0x6e8] sm:$0xff]
        %v673 = vld [vmem:[#allocation5 + $0x6f0] sm:$0xff]
        %v674 = vld [vmem:[#allocation5 + $0x6f8] sm:$0xff]
        %v675 = vld [vmem:[#allocation5 + $0x700] sm:$0xff]
        %v676 = vld [vmem:[#allocation5 + $0x708] sm:$0xff]
        %v677 = vld [vmem:[#allocation5 + $0x710] sm:$0xff]
        %v678 = vld [vmem:[#allocation5 + $0x718] sm:$0xff]
        %v679 = vld [vmem:[#allocation5 + $0x720] sm:$0xff]
        %v680 = vld [vmem:[#allocation5 + $0x728] sm:$0xff]
        %v681 = vld [vmem:[#allocation5 + $0x730] sm:$0xff]
        %v682 = vld [vmem:[#allocation5 + $0x738] sm:$0xff]
        %v683 = vld [vmem:[#allocation5 + $0x740] sm:$0xff]
        %v684 = vld [vmem:[#allocation5 + $0x748] sm:$0xff]
        %v685 = vld [vmem:[#allocation5 + $0x750] sm:$0xff]
        %v686 = vld [vmem:[#allocation5 + $0x758] sm:$0xff]
        %v687 = vld [vmem:[#allocation5 + $0x760] sm:$0xff]
        %v688 = vld [vmem:[#allocation5 + $0x768] sm:$0xff]
        %v689 = vld [vmem:[#allocation5 + $0x770] sm:$0xff]
        %v690 = vld [vmem:[#allocation5 + $0x778] sm:$0xff]
        %v691 = vld [vmem:[#allocation5 + $0x780] sm:$0xff]
        %v692 = vld [vmem:[#allocation5 + $0x788] sm:$0xff]
        %v693 = vld [vmem:[#allocation5 + $0x790] sm:$0xff]
        %v694 = vld [vmem:[#allocation5 + $0x798] sm:$0xff]
        %v695 = vld [vmem:[#allocation5 + $0x7a0] sm:$0xff]
        %v696 = vld [vmem:[#allocation5 + $0x7a8] sm:$0xff]
        %v697 = vld [vmem:[#allocation5 + $0x7b0] sm:$0xff]
        %v698 = vld [vmem:[#allocation5 + $0x7b8] sm:$0xff]
        %v699 = vld [vmem:[#allocation5 + $0x7c0] sm:$0xff]
        %v700 = vld [vmem:[#allocation5 + $0x7c8] sm:$0xff]
        %v701 = vld [vmem:[#allocation5 + $0x7d0] sm:$0xff]
        %v702 = vld [vmem:[#allocation5 + $0x7d8] sm:$0xff]
        %v703 = vld [vmem:[#allocation5 + $0x7e0] sm:$0xff]
        %v704 = vld [vmem:[#allocation5 + $0x7e8] sm:$0xff]
        %v705 = vld [vmem:[#allocation5 + $0x7f0] sm:$0xff]
        %v706 = vld [vmem:[#allocation5 + $0x7f8] sm:$0xff]
        %v707 = vld [vmem:[#allocation5 + $0x800] sm:$0xff]
        %v708 = vld [vmem:[#allocation5 + $0x808] sm:$0xff]
        %v709 = vld [vmem:[#allocation5 + $0x810] sm:$0xff]
        %v710 = vld [vmem:[#allocation5 + $0x818] sm:$0xff]
        %v711 = vld [vmem:[#allocation5 + $0x820] sm:$0xff]
        %v712 = vld [vmem:[#allocation5 + $0x828] sm:$0xff]
        %v713 = vld [vmem:[#allocation5 + $0x830] sm:$0xff]
        %v714 = vld [vmem:[#allocation5 + $0x838] sm:$0xff]
        %v715 = vld [vmem:[#allocation5 + $0x840] sm:$0xff]
        %v716 = vld [vmem:[#allocation5 + $0x848] sm:$0xff]
        %v717 = vld [vmem:[#allocation5 + $0x850] sm:$0xff]
        %v718 = vld [vmem:[#allocation5 + $0x858] sm:$0xff]
        %v719 = vld [vmem:[#allocation5 + $0x860] sm:$0xff]
        %v720 = vld [vmem:[#allocation5 + $0x868] sm:$0xff]
        %v721 = vld [vmem:[#allocation5 + $0x870] sm:$0xff]
        %v722 = vld [vmem:[#allocation5 + $0x878] sm:$0xff]
        %v723 = vld [vmem:[#allocation5 + $0x880] sm:$0xff]
        %v724 = vld [vmem:[#allocation5 + $0x888] sm:$0xff]
        %v725 = vld [vmem:[#allocation5 + $0x890] sm:$0xff]
        %v726 = vld [vmem:[#allocation5 + $0x898] sm:$0xff]
        %v727 = vld [vmem:[#allocation5 + $0x8a0] sm:$0xff]
        %v728 = vld [vmem:[#allocation5 + $0x8a8] sm:$0xff]
        %v729 = vld [vmem:[#allocation5 + $0x8b0] sm:$0xff]
        %v730 = vld [vmem:[#allocation5 + $0x8b8] sm:$0xff]
        %v731 = vld [vmem:[#allocation5 + $0x8c0] sm:$0xff]
        %v732 = vld [vmem:[#allocation5 + $0x8c8] sm:$0xff]
        %v733 = vld [vmem:[#allocation5 + $0x8d0] sm:$0xff]
        %v734 = vld [vmem:[#allocation5 + $0x8d8] sm:$0xff]
        %v735 = vld [vmem:[#allocation5 + $0x8e0] sm:$0xff]
        %v736 = vld [vmem:[#allocation5 + $0x8e8] sm:$0xff]
        %v737 = vld [vmem:[#allocation5 + $0x8f0] sm:$0xff]
        %v738 = vld [vmem:[#allocation5 + $0x8f8] sm:$0xff]
        %v739 = vld [vmem:[#allocation5 + $0x900] sm:$0xff]
        %v740 = vld [vmem:[#allocation5 + $0x908] sm:$0xff]
        %v741 = vld [vmem:[#allocation5 + $0x910] sm:$0xff]
        %v742 = vld [vmem:[#allocation5 + $0x918] sm:$0xff]
        %v743 = vld [vmem:[#allocation5 + $0x920] sm:$0xff]
        %v744 = vld [vmem:[#allocation5 + $0x928] sm:$0xff]
        %v745 = vld [vmem:[#allocation5 + $0x930] sm:$0xff]
        %v746 = vld [vmem:[#allocation5 + $0x938] sm:$0xff]
        %v747 = vld [vmem:[#allocation5 + $0x940] sm:$0xff]
        %v748 = vld [vmem:[#allocation5 + $0x948] sm:$0xff]
        %v749 = vld [vmem:[#allocation5 + $0x950] sm:$0xff]
        %v750 = vld [vmem:[#allocation5 + $0x958] sm:$0xff]
        %v751 = vld [vmem:[#allocation5 + $0x960] sm:$0xff]
        %v752 = vld [vmem:[#allocation5 + $0x968] sm:$0xff]
        %v753 = vld [vmem:[#allocation5 + $0x970] sm:$0xff]
        %v754 = vld [vmem:[#allocation5 + $0x978] sm:$0xff]
        %v755 = vld [vmem:[#allocation5 + $0x980] sm:$0xff]
        %v756 = vld [vmem:[#allocation5 + $0x988] sm:$0xff]
        %v757 = vld [vmem:[#allocation5 + $0x990] sm:$0xff]
        %v758 = vld [vmem:[#allocation5 + $0x998] sm:$0xff]
        %v759 = vld [vmem:[#allocation5 + $0x9a0] sm:$0xff]
        %v760 = vld [vmem:[#allocation5 + $0x9a8] sm:$0xff]
        %v761 = vld [vmem:[#allocation5 + $0x9b0] sm:$0xff]
        %v762 = vld [vmem:[#allocation5 + $0x9b8] sm:$0xff]
        %v763 = vld [vmem:[#allocation5 + $0x9c0] sm:$0xff]
        %v764 = vld [vmem:[#allocation5 + $0x9c8] sm:$0xff]
        %v765 = vld [vmem:[#allocation5 + $0x9d0] sm:$0xff]
        %v766 = vld [vmem:[#allocation5 + $0x9d8] sm:$0xff]
        %v767 = vld [vmem:[#allocation5 + $0x9e0] sm:$0xff]
        %v768 = vld [vmem:[#allocation5 + $0x9e8] sm:$0xff]
        %v769 = vld [vmem:[#allocation5 + $0x9f0] sm:$0xff]
        %v770 = vld [vmem:[#allocation5 + $0x9f8] sm:$0xff]
        %v771 = vld [vmem:[#allocation5 + $0xa00] sm:$0xff]
        %v772 = vld [vmem:[#allocation5 + $0xa08] sm:$0xff]
        %v773 = vld [vmem:[#allocation5 + $0xa10] sm:$0xff]
        %v774 = vld [vmem:[#allocation5 + $0xa18] sm:$0xff]
        %v775 = vld [vmem:[#allocation5 + $0xa20] sm:$0xff]
        %v776 = vld [vmem:[#allocation5 + $0xa28] sm:$0xff]
        %v777 = vld [vmem:[#allocation5 + $0xa30] sm:$0xff]
        %v778 = vld [vmem:[#allocation5 + $0xa38] sm:$0xff]
        %v779 = vld [vmem:[#allocation5 + $0xa40] sm:$0xff]
        %v780 = vld [vmem:[#allocation5 + $0xa48] sm:$0xff]
        %v781 = vld [vmem:[#allocation5 + $0xa50] sm:$0xff]
        %v782 = vld [vmem:[#allocation5 + $0xa58] sm:$0xff]
        %v783 = vld [vmem:[#allocation5 + $0xa60] sm:$0xff]
        %v784 = vld [vmem:[#allocation5 + $0xa68] sm:$0xff]
        %v785 = vld [vmem:[#allocation5 + $0xa70] sm:$0xff]
        %v786 = vld [vmem:[#allocation5 + $0xa78] sm:$0xff]
        %v787 = vld [vmem:[#allocation5 + $0xa80] sm:$0xff]
        %v788 = vld [vmem:[#allocation5 + $0xa88] sm:$0xff]
        %v789 = vld [vmem:[#allocation5 + $0xa90] sm:$0xff]
        %v790 = vld [vmem:[#allocation5 + $0xa98] sm:$0xff]
        %v791 = vld [vmem:[#allocation5 + $0xaa0] sm:$0xff]
        %v792 = vld [vmem:[#allocation5 + $0xaa8] sm:$0xff]
        %v793 = vld [vmem:[#allocation5 + $0xab0] sm:$0xff]
        %v794 = vld [vmem:[#allocation5 + $0xab8] sm:$0xff]
        %v795 = vld [vmem:[#allocation5 + $0xac0] sm:$0xff]
        %v796 = vld [vmem:[#allocation5 + $0xac8] sm:$0xff]
        %v797 = vld [vmem:[#allocation5 + $0xad0] sm:$0xff]
        %v798 = vld [vmem:[#allocation5 + $0xad8] sm:$0xff]
        %v799 = vld [vmem:[#allocation5 + $0xae0] sm:$0xff]
        %v800 = vld [vmem:[#allocation5 + $0xae8] sm:$0xff]
        %v801 = vld [vmem:[#allocation5 + $0xaf0] sm:$0xff]
        %v802 = vld [vmem:[#allocation5 + $0xaf8] sm:$0xff]
        %v803 = vld [vmem:[#allocation5 + $0xb00] sm:$0xff]
        %v804 = vld [vmem:[#allocation5 + $0xb08] sm:$0xff]
        %v805 = vld [vmem:[#allocation5 + $0xb10] sm:$0xff]
        %v806 = vld [vmem:[#allocation5 + $0xb18] sm:$0xff]
        %v807 = vld [vmem:[#allocation5 + $0xb20] sm:$0xff]
        %v808 = vld [vmem:[#allocation5 + $0xb28] sm:$0xff]
        %v809 = vld [vmem:[#allocation5 + $0xb30] sm:$0xff]
        %v810 = vld [vmem:[#allocation5 + $0xb38] sm:$0xff]
        %v811 = vld [vmem:[#allocation5 + $0xb40] sm:$0xff]
        %v812 = vld [vmem:[#allocation5 + $0xb48] sm:$0xff]
        %v813 = vld [vmem:[#allocation5 + $0xb50] sm:$0xff]
        %v814 = vld [vmem:[#allocation5 + $0xb58] sm:$0xff]
        %v815 = vld [vmem:[#allocation5 + $0xb60] sm:$0xff]
        %v816 = vld [vmem:[#allocation5 + $0xb68] sm:$0xff]
        %v817 = vld [vmem:[#allocation5 + $0xb70] sm:$0xff]
        %v818 = vld [vmem:[#allocation5 + $0xb78] sm:$0xff]
        %v819 = vld [vmem:[#allocation5 + $0xb80] sm:$0xff]
        %v820 = vld [vmem:[#allocation5 + $0xb88] sm:$0xff]
        %v821 = vld [vmem:[#allocation5 + $0xb90] sm:$0xff]
        %v822 = vld [vmem:[#allocation5 + $0xb98] sm:$0xff]
        %v823 = vld [vmem:[#allocation5 + $0xba0] sm:$0xff]
        %v824 = vld [vmem:[#allocation5 + $0xba8] sm:$0xff]
        %v825 = vld [vmem:[#allocation5 + $0xbb0] sm:$0xff]
        %v826 = vld [vmem:[#allocation5 + $0xbb8] sm:$0xff]
        %v827 = vld [vmem:[#allocation5 + $0xbc0] sm:$0xff]
        %v828 = vld [vmem:[#allocation5 + $0xbc8] sm:$0xff]
        %v829 = vld [vmem:[#allocation5 + $0xbd0] sm:$0xff]
        %v830 = vld [vmem:[#allocation5 + $0xbd8] sm:$0xff]
        %v831 = vld [vmem:[#allocation5 + $0xbe0] sm:$0xff]
        %v832 = vld [vmem:[#allocation5 + $0xbe8] sm:$0xff]
        %v833 = vld [vmem:[#allocation5 + $0xbf0] sm:$0xff]
        %v834 = vld [vmem:[#allocation5 + $0xbf8] sm:$0xff]
        %v835 = vld [vmem:[#allocation5 + $0xc00] sm:$0xff]
        %v836 = vld [vmem:[#allocation5 + $0xc08] sm:$0xff]
        %v837 = vld [vmem:[#allocation5 + $0xc10] sm:$0xff]
        %v838 = vld [vmem:[#allocation5 + $0xc18] sm:$0xff]
        %v839 = vld [vmem:[#allocation5 + $0xc20] sm:$0xff]
        %v840 = vld [vmem:[#allocation5 + $0xc28] sm:$0xff]
        %v841 = vld [vmem:[#allocation5 + $0xc30] sm:$0xff]
        %v842 = vld [vmem:[#allocation5 + $0xc38] sm:$0xff]
        %v843 = vld [vmem:[#allocation5 + $0xc40] sm:$0xff]
        %v844 = vld [vmem:[#allocation5 + $0xc48] sm:$0xff]
        %v845 = vld [vmem:[#allocation5 + $0xc50] sm:$0xff]
        %v846 = vld [vmem:[#allocation5 + $0xc58] sm:$0xff]
        %v847 = vld [vmem:[#allocation5 + $0xc60] sm:$0xff]
        %v848 = vld [vmem:[#allocation5 + $0xc68] sm:$0xff]
        %v849 = vld [vmem:[#allocation5 + $0xc70] sm:$0xff]
        %v850 = vld [vmem:[#allocation5 + $0xc78] sm:$0xff]
        %v851 = vld [vmem:[#allocation5 + $0xc80] sm:$0xff]
        %v852 = vld [vmem:[#allocation5 + $0xc88] sm:$0xff]
        %v853 = vld [vmem:[#allocation5 + $0xc90] sm:$0xff]
        %v854 = vld [vmem:[#allocation5 + $0xc98] sm:$0xff]
        %v855 = vld [vmem:[#allocation5 + $0xca0] sm:$0xff]
        %v856 = vld [vmem:[#allocation5 + $0xca8] sm:$0xff]
        %v857 = vld [vmem:[#allocation5 + $0xcb0] sm:$0xff]
        %v858 = vld [vmem:[#allocation5 + $0xcb8] sm:$0xff]
        %v859 = vld [vmem:[#allocation5 + $0xcc0] sm:$0xff]
        %v860 = vld [vmem:[#allocation5 + $0xcc8] sm:$0xff]
        %v861 = vld [vmem:[#allocation5 + $0xcd0] sm:$0xff]
        %v862 = vld [vmem:[#allocation5 + $0xcd8] sm:$0xff]
        %v863 = vld [vmem:[#allocation5 + $0xce0] sm:$0xff]
        %v864 = vld [vmem:[#allocation5 + $0xce8] sm:$0xff]
        %v865 = vld [vmem:[#allocation5 + $0xcf0] sm:$0xff]
        %v866 = vld [vmem:[#allocation5 + $0xcf8] sm:$0xff]
        %v867 = vld [vmem:[#allocation5 + $0xd00] sm:$0xff]
        %v868 = vld [vmem:[#allocation5 + $0xd08] sm:$0xff]
        %v869 = vld [vmem:[#allocation5 + $0xd10] sm:$0xff]
        %v870 = vld [vmem:[#allocation5 + $0xd18] sm:$0xff]
        %v871 = vld [vmem:[#allocation5 + $0xd20] sm:$0xff]
        %v872 = vld [vmem:[#allocation5 + $0xd28] sm:$0xff]
        %v873 = vld [vmem:[#allocation5 + $0xd30] sm:$0xff]
        %v874 = vld [vmem:[#allocation5 + $0xd38] sm:$0xff]
        %v875 = vld [vmem:[#allocation5 + $0xd40] sm:$0xff]
        %v876 = vld [vmem:[#allocation5 + $0xd48] sm:$0xff]
        %v877 = vld [vmem:[#allocation5 + $0xd50] sm:$0xff]
        %v878 = vld [vmem:[#allocation5 + $0xd58] sm:$0xff]
        %v879 = vld [vmem:[#allocation5 + $0xd60] sm:$0xff]
        %v880 = vld [vmem:[#allocation5 + $0xd68] sm:$0xff]
        %v881 = vld [vmem:[#allocation5 + $0xd70] sm:$0xff]
        %v882 = vld [vmem:[#allocation5 + $0xd78] sm:$0xff]
        %v883 = vld [vmem:[#allocation5 + $0xd80] sm:$0xff]
        %v884 = vld [vmem:[#allocation5 + $0xd88] sm:$0xff]
        %v885 = vld [vmem:[#allocation5 + $0xd90] sm:$0xff]
        %v886 = vld [vmem:[#allocation5 + $0xd98] sm:$0xff]
        %v887 = vld [vmem:[#allocation5 + $0xda0] sm:$0xff]
        %v888 = vld [vmem:[#allocation5 + $0xda8] sm:$0xff]
        %v889 = vld [vmem:[#allocation5 + $0xdb0] sm:$0xff]
        %v890 = vld [vmem:[#allocation5 + $0xdb8] sm:$0xff]
        %v891 = vld [vmem:[#allocation5 + $0xdc0] sm:$0xff]
        %v892 = vld [vmem:[#allocation5 + $0xdc8] sm:$0xff]
        %v893 = vld [vmem:[#allocation5 + $0xdd0] sm:$0xff]
        %v894 = vld [vmem:[#allocation5 + $0xdd8] sm:$0xff]
        %v895 = vld [vmem:[#allocation5 + $0xde0] sm:$0xff]
        %v896 = vld [vmem:[#allocation5 + $0xde8] sm:$0xff]
        %v897 = vld [vmem:[#allocation5 + $0xdf0] sm:$0xff]
        %v898 = vld [vmem:[#allocation5 + $0xdf8] sm:$0xff]
        %v899 = vld [vmem:[#allocation5 + $0xe00] sm:$0xff]
        %v900 = vld [vmem:[#allocation5 + $0xe08] sm:$0xff]
        %v901 = vld [vmem:[#allocation5 + $0xe10] sm:$0xff]
        %v902 = vld [vmem:[#allocation5 + $0xe18] sm:$0xff]
        %v903 = vld [vmem:[#allocation5 + $0xe20] sm:$0xff]
        %v904 = vld [vmem:[#allocation5 + $0xe28] sm:$0xff]
        %v905 = vld [vmem:[#allocation5 + $0xe30] sm:$0xff]
        %v906 = vld [vmem:[#allocation5 + $0xe38] sm:$0xff]
        %v907 = vld [vmem:[#allocation5 + $0xe40] sm:$0xff]
        %v908 = vld [vmem:[#allocation5 + $0xe48] sm:$0xff]
        %v909 = vld [vmem:[#allocation5 + $0xe50] sm:$0xff]
        %v910 = vld [vmem:[#allocation5 + $0xe58] sm:$0xff]
        %v911 = vld [vmem:[#allocation5 + $0xe60] sm:$0xff]
        %v912 = vld [vmem:[#allocation5 + $0xe68] sm:$0xff]
        %v913 = vld [vmem:[#allocation5 + $0xe70] sm:$0xff]
        %v914 = vld [vmem:[#allocation5 + $0xe78] sm:$0xff]
        %v915 = vld [vmem:[#allocation5 + $0xe80] sm:$0xff]
        %v916 = vld [vmem:[#allocation5 + $0xe88] sm:$0xff]
        %v917 = vld [vmem:[#allocation5 + $0xe90] sm:$0xff]
        %v918 = vld [vmem:[#allocation5 + $0xe98] sm:$0xff]
        %v919 = vld [vmem:[#allocation5 + $0xea0] sm:$0xff]
        %v920 = vld [vmem:[#allocation5 + $0xea8] sm:$0xff]
        %v921 = vld [vmem:[#allocation5 + $0xeb0] sm:$0xff]
        %v922 = vld [vmem:[#allocation5 + $0xeb8] sm:$0xff]
        %v923 = vld [vmem:[#allocation5 + $0xec0] sm:$0xff]
        %v924 = vld [vmem:[#allocation5 + $0xec8] sm:$0xff]
        %v925 = vld [vmem:[#allocation5 + $0xed0] sm:$0xff]
        %v926 = vld [vmem:[#allocation5 + $0xed8] sm:$0xff]
        %v927 = vld [vmem:[#allocation5 + $0xee0] sm:$0xff]
        %v928 = vld [vmem:[#allocation5 + $0xee8] sm:$0xff]
        %v929 = vld [vmem:[#allocation5 + $0xef0] sm:$0xff]
        %v930 = vld [vmem:[#allocation5 + $0xef8] sm:$0xff]
        %v931 = vld [vmem:[#allocation5 + $0xf00] sm:$0xff]
        %v932 = vld [vmem:[#allocation5 + $0xf08] sm:$0xff]
        %v933 = vld [vmem:[#allocation5 + $0xf10] sm:$0xff]
        %v934 = vld [vmem:[#allocation5 + $0xf18] sm:$0xff]
        %v935 = vld [vmem:[#allocation5 + $0xf20] sm:$0xff]
        %v936 = vld [vmem:[#allocation5 + $0xf28] sm:$0xff]
        %v937 = vld [vmem:[#allocation5 + $0xf30] sm:$0xff]
        %v938 = vld [vmem:[#allocation5 + $0xf38] sm:$0xff]
        %v939 = vld [vmem:[#allocation5 + $0xf40] sm:$0xff]
        %v940 = vld [vmem:[#allocation5 + $0xf48] sm:$0xff]
        %v941 = vld [vmem:[#allocation5 + $0xf50] sm:$0xff]
        %v942 = vld [vmem:[#allocation5 + $0xf58] sm:$0xff]
        %v943 = vld [vmem:[#allocation5 + $0xf60] sm:$0xff]
        %v944 = vld [vmem:[#allocation5 + $0xf68] sm:$0xff]
        %v945 = vld [vmem:[#allocation5 + $0xf70] sm:$0xff]
        %v946 = vld [vmem:[#allocation5 + $0xf78] sm:$0xff]
        %v947 = vld [vmem:[#allocation5 + $0xf80] sm:$0xff]
        %v948 = vld [vmem:[#allocation5 + $0xf88] sm:$0xff]
        %v949 = vld [vmem:[#allocation5 + $0xf90] sm:$0xff]
        %v950 = vld [vmem:[#allocation5 + $0xf98] sm:$0xff]
        %v951 = vld [vmem:[#allocation5 + $0xfa0] sm:$0xff]
        %v952 = vld [vmem:[#allocation5 + $0xfa8] sm:$0xff]
        %v953 = vld [vmem:[#allocation5 + $0xfb0] sm:$0xff]
        %v954 = vld [vmem:[#allocation5 + $0xfb8] sm:$0xff]
        %v955 = vld [vmem:[#allocation5 + $0xfc0] sm:$0xff]
        %v956 = vld [vmem:[#allocation5 + $0xfc8] sm:$0xff]
        %v957 = vld [vmem:[#allocation5 + $0xfd0] sm:$0xff]
        %v958 = vld [vmem:[#allocation5 + $0xfd8] sm:$0xff]
        %v959 = vld [vmem:[#allocation5 + $0xfe0] sm:$0xff]
        %v960 = vld [vmem:[#allocation5 + $0xfe8] sm:$0xff]
        %v961 = vld [vmem:[#allocation5 + $0xff0] sm:$0xff]
        %v962 = vld [vmem:[#allocation5 + $0xff8] sm:$0xff]
        %v963 = vld [vmem:[#allocation5 + $0x1000] sm:$0xff]
        %v964 = vld [vmem:[#allocation5 + $0x1008] sm:$0xff]
        %v965 = vld [vmem:[#allocation5 + $0x1010] sm:$0xff]
        %v966 = vld [vmem:[#allocation5 + $0x1018] sm:$0xff]
        %v967 = vld [vmem:[#allocation5 + $0x1020] sm:$0xff]
        %v968 = vld [vmem:[#allocation5 + $0x1028] sm:$0xff]
        %v969 = vld [vmem:[#allocation5 + $0x1030] sm:$0xff]
        %v970 = vld [vmem:[#allocation5 + $0x1038] sm:$0xff]
        %v971 = vld [vmem:[#allocation5 + $0x1040] sm:$0xff]
        %v972 = vld [vmem:[#allocation5 + $0x1048] sm:$0xff]
        %v973 = vld [vmem:[#allocation5 + $0x1050] sm:$0xff]
        %v974 = vld [vmem:[#allocation5 + $0x1058] sm:$0xff]
        %v975 = vld [vmem:[#allocation5 + $0x1060] sm:$0xff]
        %v976 = vld [vmem:[#allocation5 + $0x1068] sm:$0xff]
        %v977 = vld [vmem:[#allocation5 + $0x1070] sm:$0xff]
        %v978 = vld [vmem:[#allocation5 + $0x1078] sm:$0xff]
        %v979 = vld [vmem:[#allocation5 + $0x1080] sm:$0xff]
        %v980 = vld [vmem:[#allocation5 + $0x1088] sm:$0xff]
        %v981 = vld [vmem:[#allocation5 + $0x1090] sm:$0xff]
        %v982 = vld [vmem:[#allocation5 + $0x1098] sm:$0xff]
        %v983 = vld [vmem:[#allocation5 + $0x10a0] sm:$0xff]
        %v984 = vld [vmem:[#allocation5 + $0x10a8] sm:$0xff]
        %v985 = vld [vmem:[#allocation5 + $0x10b0] sm:$0xff]
        %v986 = vld [vmem:[#allocation5 + $0x10b8] sm:$0xff]
        %v987 = vld [vmem:[#allocation5 + $0x10c0] sm:$0xff]
        %v988 = vld [vmem:[#allocation5 + $0x10c8] sm:$0xff]
        %v989 = vld [vmem:[#allocation5 + $0x10d0] sm:$0xff]
        %v990 = vld [vmem:[#allocation5 + $0x10d8] sm:$0xff]
        %v991 = vld [vmem:[#allocation5 + $0x10e0] sm:$0xff]
        %v992 = vld [vmem:[#allocation5 + $0x10e8] sm:$0xff]
        %v993 = vld [vmem:[#allocation5 + $0x10f0] sm:$0xff]
        %v994 = vld [vmem:[#allocation5 + $0x10f8] sm:$0xff]
        %v995 = vld [vmem:[#allocation5 + $0x1100] sm:$0xff]
        %v996 = vld [vmem:[#allocation5 + $0x1108] sm:$0xff]
        %v997 = vld [vmem:[#allocation5 + $0x1110] sm:$0xff]
        %v998 = vld [vmem:[#allocation5 + $0x1118] sm:$0xff]
        %v999 = vld [vmem:[#allocation5 + $0x1120] sm:$0xff]
        %v1000 = vld [vmem:[#allocation5 + $0x1128] sm:$0xff]
        %v1001 = vld [vmem:[#allocation5 + $0x1130] sm:$0xff]
        %v1002 = vld [vmem:[#allocation5 + $0x1138] sm:$0xff]
        %v1003 = vld [vmem:[#allocation5 + $0x1140] sm:$0xff]
        %v1004 = vld [vmem:[#allocation5 + $0x1148] sm:$0xff]
        %v1005 = vld [vmem:[#allocation5 + $0x1150] sm:$0xff]
        %v1006 = vld [vmem:[#allocation5 + $0x1158] sm:$0xff]
        %v1007 = vld [vmem:[#allocation5 + $0x1160] sm:$0xff]
        %v1008 = vld [vmem:[#allocation5 + $0x1168] sm:$0xff]
        %v1009 = vld [vmem:[#allocation5 + $0x1170] sm:$0xff]
        %v1010 = vld [vmem:[#allocation5 + $0x1178] sm:$0xff]
        %v1011 = vld [vmem:[#allocation5 + $0x1180] sm:$0xff]
        %v1012 = vld [vmem:[#allocation5 + $0x1188] sm:$0xff]
        %v1013 = vld [vmem:[#allocation5 + $0x1190] sm:$0xff]
        %v1014 = vld [vmem:[#allocation5 + $0x1198] sm:$0xff]
        %v1015 = vld [vmem:[#allocation5 + $0x11a0] sm:$0xff]
        %v1016 = vld [vmem:[#allocation5 + $0x11a8] sm:$0xff]
        %v1017 = vld [vmem:[#allocation5 + $0x11b0] sm:$0xff]
        %v1018 = vld [vmem:[#allocation5 + $0x11b8] sm:$0xff]
        %v1019 = vld [vmem:[#allocation5 + $0x11c0] sm:$0xff]
        %v1020 = vld [vmem:[#allocation5 + $0x11c8] sm:$0xff]
        %v1021 = vld [vmem:[#allocation5 + $0x11d0] sm:$0xff]
        %v1022 = vld [vmem:[#allocation5 + $0x11d8] sm:$0xff]
        %v1023 = vld [vmem:[#allocation5 + $0x11e0] sm:$0xff]
        %v1024 = vld [vmem:[#allocation5 + $0x11e8] sm:$0xff]
        %v1025 = vld [vmem:[#allocation5 + $0x11f0] sm:$0xff]
        %v1026 = vld [vmem:[#allocation5 + $0x11f8] sm:$0xff]
        %v1027 = vld [vmem:[#allocation7] sm:$0x3f]
        %v1029 = vlaneseq
        %v1030 = vshrl.u32 %v1029, 7
        %v1031 = vsub.s32 0, %v1030
        %v1032 = vrot.slane %v1027, %v1031
        %v1033 = vlaneseq
        %v1034 = vshrl.u32 %v1033, 7
        %v1035 = vsub.s32 1, %v1034
        %v1036 = vrot.slane %v1027, %v1035
        %v1037 = vlaneseq
        %v1038 = vshrl.u32 %v1037, 7
        %v1039 = vsub.s32 2, %v1038
        %v1040 = vrot.slane %v1027, %v1039
        %v1041 = vlaneseq
        %v1042 = vshrl.u32 %v1041, 7
        %v1043 = vsub.s32 3, %v1042
        %v1044 = vrot.slane %v1027, %v1043
        %v1045 = vlaneseq
        %v1046 = vshrl.u32 %v1045, 7
        %v1047 = vsub.s32 4, %v1046
        %v1048 = vrot.slane %v1027, %v1047
        %v1049 = vlaneseq
        %v1050 = vshrl.u32 %v1049, 7
        %v1051 = vsub.s32 5, %v1050
        %v1052 = vrot.slane %v1027, %v1051
        %1059 = vmatprep.subr.mxu0 %v452
        %1060 = vmatpush1.xpose.msra.mxu0 %v451
        %1061 = vmatprep.subr.mxu0 %v458
        %1062 = vmatpush1.xpose.msra.mxu0 %v457
        %1063 = vmatprep.subr.mxu0 %v464
        %1064 = vmatpush1.xpose.msra.mxu0 %v463
        %1065 = vmatprep.subr.mxu0 %v470
        %1066 = vmatpush1.xpose.msra.mxu0 %v469
        %1067 = vmatprep.subr.mxu0 %v476
        %1068 = vmatpush1.xpose.msra.mxu0 %v475
        %1069 = vmatprep.subr.mxu0 %v482
        %1070 = vmatpush1.xpose.msra.mxu0 %v481
        %1071 = vmatprep.subr.mxu0 %v488
        %1072 = vmatpush1.xpose.msra.mxu0 %v487
        %1073 = vmatprep.subr.mxu0 %v494
        %1074 = vmatpush1.xpose.msra.mxu0 %v493
        %1075 = vmatprep.subr.mxu0 %v500
        %1076 = vmatpush1.xpose.msra.mxu0 %v499
        %1077 = vmatprep.subr.mxu0 %v506
        %1078 = vmatpush1.xpose.msra.mxu0 %v505
        %1079 = vmatprep.subr.mxu0 %v512
        %1080 = vmatpush1.xpose.msra.mxu0 %v511
        %1081 = vmatprep.subr.mxu0 %v518
        %1082 = vmatpush1.xpose.msra.mxu0 %v517
        %1083 = vmatprep.subr.mxu0 %v524
        %1084 = vmatpush1.xpose.msra.mxu0 %v523
        %1085 = vmatprep.subr.mxu0 %v530
        %1086 = vmatpush1.xpose.msra.mxu0 %v529
        %1087 = vmatprep.subr.mxu0 %v536
        %1088 = vmatpush1.xpose.msra.mxu0 %v535
        %1089 = vmatprep.subr.mxu0 %v542
        %1090 = vmatpush1.xpose.msra.mxu0 %v541
        %1091 = vmatprep.subr.mxu0 %v548
        %1092 = vmatpush1.xpose.msra.mxu0 %v547
        %1093 = vmatprep.subr.mxu0 %v554
        %1094 = vmatpush1.xpose.msra.mxu0 %v553
        %1095 = vmatprep.subr.mxu0 %v560
        %1096 = vmatpush1.xpose.msra.mxu0 %v559
        %1097 = vmatprep.subr.mxu0 %v566
        %1098 = vmatpush1.xpose.msra.mxu0 %v565
        %1099 = vmatprep.subr.mxu0 %v572
        %1100 = vmatpush1.xpose.msra.mxu0 %v571
        %1101 = vmatprep.subr.mxu0 %v578
        %1102 = vmatpush1.xpose.msra.mxu0 %v577
        %1103 = vmatprep.subr.mxu0 %v584
        %1104 = vmatpush1.xpose.msra.mxu0 %v583
        %1105 = vmatprep.subr.mxu0 %v590
        %1106 = vmatpush1.xpose.msra.mxu0 %v589
        %1107 = vmatprep.subr.mxu0 %v596
        %1108 = vmatpush1.xpose.msra.mxu0 %v595
        %1109 = vmatprep.subr.mxu0 %v602
        %1110 = vmatpush1.xpose.msra.mxu0 %v601
        %1111 = vmatprep.subr.mxu0 %v608
        %1112 = vmatpush1.xpose.msra.mxu0 %v607
        %1113 = vmatprep.subr.mxu0 %v614
        %1114 = vmatpush1.xpose.msra.mxu0 %v613
        %1115 = vmatprep.subr.mxu0 %v620
        %1116 = vmatpush1.xpose.msra.mxu0 %v619
        %1117 = vmatprep.subr.mxu0 %v626
        %1118 = vmatpush1.xpose.msra.mxu0 %v625
        %1119 = vmatprep.subr.mxu0 %v632
        %1120 = vmatpush1.xpose.msra.mxu0 %v631
        %1121 = vmatprep.subr.mxu0 %v638
        %1122 = vmatpush1.xpose.msra.mxu0 %v637
        %1123 = vmatprep.mubr.f32.mxu0 %v260
        %1124 = vmatmul.mubr.f32.gmra.mrb[0].mxu0 %v259
        %v1125 = vpop.f32.mrb[0].mxu0
        %v1126 = vadd.f32 %v1032, %v1125
        %v1127 = vpop.f32.mrb[0].mxu0
        %v1128 = vadd.f32 %v1036, %v1127
        %1129 = vmatprep.mubr.f32.mxu0 %v266
        %1130 = vmatmul.mubr.f32.gmra.mrb[0].mxu0 %v265
        %v1131 = vpop.f32.mrb[0].mxu0
        %v1132 = vadd.f32 %v1032, %v1131
        %v1133 = vpop.f32.mrb[0].mxu0
        %v1134 = vadd.f32 %v1036, %v1133
        %1135 = vmatprep.mubr.f32.mxu0 %v272
        %1136 = vmatmul.mubr.f32.gmra.mrb[0].mxu0 %v271
        %v1137 = vpop.f32.mrb[0].mxu0
        %v1138 = vadd.f32 %v1032, %v1137
        %v1139 = vpop.f32.mrb[0].mxu0
        %v1140 = vadd.f32 %v1036, %v1139
        %1141 = vmatprep.mubr.f32.mxu0 %v278
        %1142 = vmatmul.mubr.f32.gmra.mrb[0].mxu0 %v277
        %v1143 = vpop.f32.mrb[0].mxu0
        %v1144 = vadd.f32 %v1032, %v1143
        %v1145 = vpop.f32.mrb[0].mxu0
        %v1146 = vadd.f32 %v1036, %v1145
        %1147 = vmatprep.mubr.f32.mxu0 %v284
        %1148 = vmatmul.mubr.f32.gmra.mrb[0].mxu0 %v283
        %v1149 = vpop.f32.mrb[0].mxu0
        %v1150 = vadd.f32 %v1032, %v1149
        %v1151 = vpop.f32.mrb[0].mxu0
        %v1152 = vadd.f32 %v1036, %v1151
        %1153 = vmatprep.mubr.f32.mxu0 %v290
        %1154 = vmatmul.mubr.f32.gmra.mrb[0].mxu0 %v289
        %v1155 = vpop.f32.mrb[0].mxu0
        %v1156 = vadd.f32 %v1032, %v1155
        %v1157 = vpop.f32.mrb[0].mxu0
        %v1158 = vadd.f32 %v1036, %v1157
        %1159 = vmatprep.mubr.f32.mxu0 %v296
        %1160 = vmatmul.mubr.f32.gmra.mrb[0].mxu0 %v295
        %v1161 = vpop.f32.mrb[0].mxu0
        %v1162 = vadd.f32 %v1032, %v1161
        %v1163 = vpop.f32.mrb[0].mxu0
        %v1164 = vadd.f32 %v1036, %v1163
        %1165 = vmatprep.mubr.f32.mxu0 %v302
        %1166 = vmatmul.mubr.f32.gmra.mrb[0].mxu0 %v301
        %v1167 = vpop.f32.mrb[0].mxu0
        %v1168 = vadd.f32 %v1032, %v1167
        %v1169 = vpop.f32.mrb[0].mxu0
        %v1170 = vadd.f32 %v1036, %v1169
        %1171 = vmatprep.mubr.f32.mxu0 %v308
        %1172 = vmatmul.mubr.f32.gmra.mrb[0].mxu0 %v307
        %v1173 = vpop.f32.mrb[0].mxu0
        %v1174 = vadd.f32 %v1032, %v1173
        %v1175 = vpop.f32.mrb[0].mxu0
        %v1176 = vadd.f32 %v1036, %v1175
        %1177 = vmatprep.mubr.f32.mxu0 %v314
        %1178 = vmatmul.mubr.f32.gmra.mrb[0].mxu0 %v313
        %v1179 = vpop.f32.mrb[0].mxu0
        %v1180 = vadd.f32 %v1032, %v1179
        %v1181 = vpop.f32.mrb[0].mxu0
        %v1182 = vadd.f32 %v1036, %v1181
        %1183 = vmatprep.mubr.f32.mxu0 %v320
        %1184 = vmatmul.mubr.f32.gmra.mrb[0].mxu0 %v319
        %v1185 = vpop.f32.mrb[0].mxu0
        %v1186 = vadd.f32 %v1032, %v1185
        %v1187 = vpop.f32.mrb[0].mxu0
        %v1188 = vadd.f32 %v1036, %v1187
        %1189 = vmatprep.mubr.f32.mxu0 %v326
        %1190 = vmatmul.mubr.f32.gmra.mrb[0].mxu0 %v325
        %v1191 = vpop.f32.mrb[0].mxu0
        %v1192 = vadd.f32 %v1032, %v1191
        %v1193 = vpop.f32.mrb[0].mxu0
        %v1194 = vadd.f32 %v1036, %v1193
        %1195 = vmatprep.mubr.f32.mxu0 %v332
        %1196 = vmatmul.mubr.f32.gmra.mrb[0].mxu0 %v331
        %v1197 = vpop.f32.mrb[0].mxu0
        %v1198 = vadd.f32 %v1032, %v1197
        %v1199 = vpop.f32.mrb[0].mxu0
        %v1200 = vadd.f32 %v1036, %v1199
        %1201 = vmatprep.mubr.f32.mxu0 %v338
        %1202 = vmatmul.mubr.f32.gmra.mrb[0].mxu0 %v337
        %v1203 = vpop.f32.mrb[0].mxu0
        %v1204 = vadd.f32 %v1032, %v1203
        %v1205 = vpop.f32.mrb[0].mxu0
        %v1206 = vadd.f32 %v1036, %v1205
        %1207 = vmatprep.mubr.f32.mxu0 %v344
        %1208 = vmatmul.mubr.f32.gmra.mrb[0].mxu0 %v343
        %v1209 = vpop.f32.mrb[0].mxu0
        %v1210 = vadd.f32 %v1032, %v1209
        %v1211 = vpop.f32.mrb[0].mxu0
        %v1212 = vadd.f32 %v1036, %v1211
        %1213 = vmatprep.mubr.f32.mxu0 %v350
        %1214 = vmatmul.mubr.f32.gmra.mrb[0].mxu0 %v349
        %v1215 = vpop.f32.mrb[0].mxu0
        %v1216 = vadd.f32 %v1032, %v1215
        %v1217 = vpop.f32.mrb[0].mxu0
        %v1218 = vadd.f32 %v1036, %v1217
        %1219 = vmatprep.mubr.f32.mxu0 %v356
        %1220 = vmatmul.mubr.f32.gmra.mrb[0].mxu0 %v355
        %v1221 = vpop.f32.mrb[0].mxu0
        %v1222 = vadd.f32 %v1032, %v1221
        %v1223 = vpop.f32.mrb[0].mxu0
        %v1224 = vadd.f32 %v1036, %v1223
        %1225 = vmatprep.mubr.f32.mxu0 %v362
        %1226 = vmatmul.mubr.f32.gmra.mrb[0].mxu0 %v361
        %v1227 = vpop.f32.mrb[0].mxu0
        %v1228 = vadd.f32 %v1032, %v1227
        %v1229 = vpop.f32.mrb[0].mxu0
        %v1230 = vadd.f32 %v1036, %v1229
        %1231 = vmatprep.mubr.f32.mxu0 %v368
        %1232 = vmatmul.mubr.f32.gmra.mrb[0].mxu0 %v367
        %v1233 = vpop.f32.mrb[0].mxu0
        %v1234 = vadd.f32 %v1032, %v1233
        %v1235 = vpop.f32.mrb[0].mxu0
        %v1236 = vadd.f32 %v1036, %v1235
        %1237 = vmatprep.mubr.f32.mxu0 %v374
        %1238 = vmatmul.mubr.f32.gmra.mrb[0].mxu0 %v373
        %v1239 = vpop.f32.mrb[0].mxu0
        %v1240 = vadd.f32 %v1032, %v1239
        %v1241 = vpop.f32.mrb[0].mxu0
        %v1242 = vadd.f32 %v1036, %v1241
        %1243 = vmatprep.mubr.f32.mxu0 %v380
        %1244 = vmatmul.mubr.f32.gmra.mrb[0].mxu0 %v379
        %v1245 = vpop.f32.mrb[0].mxu0
        %v1246 = vadd.f32 %v1032, %v1245
        %v1247 = vpop.f32.mrb[0].mxu0
        %v1248 = vadd.f32 %v1036, %v1247
        %1249 = vmatprep.mubr.f32.mxu0 %v386
        %1250 = vmatmul.mubr.f32.gmra.mrb[0].mxu0 %v385
        %v1251 = vpop.f32.mrb[0].mxu0
        %v1252 = vadd.f32 %v1032, %v1251
        %v1253 = vpop.f32.mrb[0].mxu0
        %v1254 = vadd.f32 %v1036, %v1253
        %1255 = vmatprep.mubr.f32.mxu0 %v392
        %1256 = vmatmul.mubr.f32.gmra.mrb[0].mxu0 %v391
        %v1257 = vpop.f32.mrb[0].mxu0
        %v1258 = vadd.f32 %v1032, %v1257
        %v1259 = vpop.f32.mrb[0].mxu0
        %v1260 = vadd.f32 %v1036, %v1259
        %1261 = vmatprep.mubr.f32.mxu0 %v398
        %1262 = vmatmul.mubr.f32.gmra.mrb[0].mxu0 %v397
        %v1263 = vpop.f32.mrb[0].mxu0
        %v1264 = vadd.f32 %v1032, %v1263
        %v1265 = vpop.f32.mrb[0].mxu0
        %v1266 = vadd.f32 %v1036, %v1265
        %1267 = vmatprep.mubr.f32.mxu0 %v404
        %1268 = vmatmul.mubr.f32.gmra.mrb[0].mxu0 %v403
        %v1269 = vpop.f32.mrb[0].mxu0
        %v1270 = vadd.f32 %v1032, %v1269
        %v1271 = vpop.f32.mrb[0].mxu0
        %v1272 = vadd.f32 %v1036, %v1271
        %1273 = vmatprep.mubr.f32.mxu0 %v410
        %1274 = vmatmul.mubr.f32.gmra.mrb[0].mxu0 %v409
        %v1275 = vpop.f32.mrb[0].mxu0
        %v1276 = vadd.f32 %v1032, %v1275
        %v1277 = vpop.f32.mrb[0].mxu0
        %v1278 = vadd.f32 %v1036, %v1277
        %1279 = vmatprep.mubr.f32.mxu0 %v416
        %1280 = vmatmul.mubr.f32.gmra.mrb[0].mxu0 %v415
        %v1281 = vpop.f32.mrb[0].mxu0
        %v1282 = vadd.f32 %v1032, %v1281
        %v1283 = vpop.f32.mrb[0].mxu0
        %v1284 = vadd.f32 %v1036, %v1283
        %1285 = vmatprep.mubr.f32.mxu0 %v422
        %1286 = vmatmul.mubr.f32.gmra.mrb[0].mxu0 %v421
        %v1287 = vpop.f32.mrb[0].mxu0
        %v1288 = vadd.f32 %v1032, %v1287
        %v1289 = vpop.f32.mrb[0].mxu0
        %v1290 = vadd.f32 %v1036, %v1289
        %1291 = vmatprep.mubr.f32.mxu0 %v428
        %1292 = vmatmul.mubr.f32.gmra.mrb[0].mxu0 %v427
        %v1293 = vpop.f32.mrb[0].mxu0
        %v1294 = vadd.f32 %v1032, %v1293
        %v1295 = vpop.f32.mrb[0].mxu0
        %v1296 = vadd.f32 %v1036, %v1295
        %1297 = vmatprep.mubr.f32.mxu0 %v434
        %1298 = vmatmul.mubr.f32.gmra.mrb[0].mxu0 %v433
        %v1299 = vpop.f32.mrb[0].mxu0
        %v1300 = vadd.f32 %v1032, %v1299
        %v1301 = vpop.f32.mrb[0].mxu0
        %v1302 = vadd.f32 %v1036, %v1301
        %1303 = vmatprep.mubr.f32.mxu0 %v440
        %1304 = vmatmul.mubr.f32.gmra.mrb[0].mxu0 %v439
        %v1305 = vpop.f32.mrb[0].mxu0
        %v1306 = vadd.f32 %v1032, %v1305
        %v1307 = vpop.f32.mrb[0].mxu0
        %v1308 = vadd.f32 %v1036, %v1307
        %1309 = vmatprep.mubr.f32.mxu0 %v446
        %1310 = vmatmul.mubr.f32.gmra.mrb[0].mxu0 %v445
        %v1311 = vpop.f32.mrb[0].mxu0
        %v1312 = vadd.f32 %v1032, %v1311
        %v1313 = vpop.f32.mrb[0].mxu0
        %v1314 = vadd.f32 %v1036, %v1313
        %1315 = vdwg.mxu0
        %1316 = vmatprep.subr.mxu0 %v454
        %1317 = vmatpush1.xpose.msra.mxu0 %v453
        %1318 = vmatprep.subr.mxu0 %v460
        %1319 = vmatpush1.xpose.msra.mxu0 %v459
        %1320 = vmatprep.subr.mxu0 %v466
        %1321 = vmatpush1.xpose.msra.mxu0 %v465
        %1322 = vmatprep.subr.mxu0 %v472
        %1323 = vmatpush1.xpose.msra.mxu0 %v471
        %1324 = vmatprep.subr.mxu0 %v478
        %1325 = vmatpush1.xpose.msra.mxu0 %v477
        %1326 = vmatprep.subr.mxu0 %v484
        %1327 = vmatpush1.xpose.msra.mxu0 %v483
        %1328 = vmatprep.subr.mxu0 %v490
        %1329 = vmatpush1.xpose.msra.mxu0 %v489
        %1330 = vmatprep.subr.mxu0 %v496
        %1331 = vmatpush1.xpose.msra.mxu0 %v495
        %1332 = vmatprep.subr.mxu0 %v502
        %1333 = vmatpush1.xpose.msra.mxu0 %v501
        %1334 = vmatprep.subr.mxu0 %v508
        %1335 = vmatpush1.xpose.msra.mxu0 %v507
        %1336 = vmatprep.subr.mxu0 %v514
        %1337 = vmatpush1.xpose.msra.mxu0 %v513
        %1338 = vmatprep.subr.mxu0 %v520
        %1339 = vmatpush1.xpose.msra.mxu0 %v519
        %1340 = vmatprep.subr.mxu0 %v526
        %1341 = vmatpush1.xpose.msra.mxu0 %v525
        %1342 = vmatprep.subr.mxu0 %v532
        %1343 = vmatpush1.xpose.msra.mxu0 %v531
        %1344 = vmatprep.subr.mxu0 %v538
        %1345 = vmatpush1.xpose.msra.mxu0 %v537
        %1346 = vmatprep.subr.mxu0 %v544
        %1347 = vmatpush1.xpose.msra.mxu0 %v543
        %1348 = vmatprep.subr.mxu0 %v550
        %1349 = vmatpush1.xpose.msra.mxu0 %v549
        %1350 = vmatprep.subr.mxu0 %v556
        %1351 = vmatpush1.xpose.msra.mxu0 %v555
        %1352 = vmatprep.subr.mxu0 %v562
        %1353 = vmatpush1.xpose.msra.mxu0 %v561
        %1354 = vmatprep.subr.mxu0 %v568
        %1355 = vmatpush1.xpose.msra.mxu0 %v567
        %1356 = vmatprep.subr.mxu0 %v574
        %1357 = vmatpush1.xpose.msra.mxu0 %v573
        %1358 = vmatprep.subr.mxu0 %v580
        %1359 = vmatpush1.xpose.msra.mxu0 %v579
        %1360 = vmatprep.subr.mxu0 %v586
        %1361 = vmatpush1.xpose.msra.mxu0 %v585
        %1362 = vmatprep.subr.mxu0 %v592
        %1363 = vmatpush1.xpose.msra.mxu0 %v591
        %1364 = vmatprep.subr.mxu0 %v598
        %1365 = vmatpush1.xpose.msra.mxu0 %v597
        %1366 = vmatprep.subr.mxu0 %v604
        %1367 = vmatpush1.xpose.msra.mxu0 %v603
        %1368 = vmatprep.subr.mxu0 %v610
        %1369 = vmatpush1.xpose.msra.mxu0 %v609
        %1370 = vmatprep.subr.mxu0 %v616
        %1371 = vmatpush1.xpose.msra.mxu0 %v615
        %1372 = vmatprep.subr.mxu0 %v622
        %1373 = vmatpush1.xpose.msra.mxu0 %v621
        %1374 = vmatprep.subr.mxu0 %v628
        %1375 = vmatpush1.xpose.msra.mxu0 %v627
        %1376 = vmatprep.subr.mxu0 %v634
        %1377 = vmatpush1.xpose.msra.mxu0 %v633
        %1378 = vmatprep.subr.mxu0 %v640
        %1379 = vmatpush1.xpose.msra.mxu0 %v639
        %1380 = vmatprep.mubr.f32.mxu0 %v262
        %1381 = vmatmul.mubr.f32.gmra.mrb[0].mxu0 %v261
        %v1382 = vpop.f32.mrb[0].mxu0
        %v1383 = vadd.f32 %v1126, %v1382
        %v1384 = vpop.f32.mrb[0].mxu0
        %v1385 = vadd.f32 %v1128, %v1384
        %1386 = vmatprep.mubr.f32.mxu0 %v268
        %1387 = vmatmul.mubr.f32.gmra.mrb[0].mxu0 %v267
        %v1388 = vpop.f32.mrb[0].mxu0
        %v1389 = vadd.f32 %v1132, %v1388
        %v1390 = vpop.f32.mrb[0].mxu0
        %v1391 = vadd.f32 %v1134, %v1390
        %1392 = vmatprep.mubr.f32.mxu0 %v274
        %1393 = vmatmul.mubr.f32.gmra.mrb[0].mxu0 %v273
        %v1394 = vpop.f32.mrb[0].mxu0
        %v1395 = vadd.f32 %v1138, %v1394
        %v1396 = vpop.f32.mrb[0].mxu0
        %v1397 = vadd.f32 %v1140, %v1396
        %1398 = vmatprep.mubr.f32.mxu0 %v280
        %1399 = vmatmul.mubr.f32.gmra.mrb[0].mxu0 %v279
        %v1400 = vpop.f32.mrb[0].mxu0
        %v1401 = vadd.f32 %v1144, %v1400
        %v1402 = vpop.f32.mrb[0].mxu0
        %v1403 = vadd.f32 %v1146, %v1402
        %1404 = vmatprep.mubr.f32.mxu0 %v286
        %1405 = vmatmul.mubr.f32.gmra.mrb[0].mxu0 %v285
        %v1406 = vpop.f32.mrb[0].mxu0
        %v1407 = vadd.f32 %v1150, %v1406
        %v1408 = vpop.f32.mrb[0].mxu0
        %v1409 = vadd.f32 %v1152, %v1408
        %1410 = vmatprep.mubr.f32.mxu0 %v292
        %1411 = vmatmul.mubr.f32.gmra.mrb[0].mxu0 %v291
        %v1412 = vpop.f32.mrb[0].mxu0
        %v1413 = vadd.f32 %v1156, %v1412
        %v1414 = vpop.f32.mrb[0].mxu0
        %v1415 = vadd.f32 %v1158, %v1414
        %1416 = vmatprep.mubr.f32.mxu0 %v298
        %1417 = vmatmul.mubr.f32.gmra.mrb[0].mxu0 %v297
        %v1418 = vpop.f32.mrb[0].mxu0
        %v1419 = vadd.f32 %v1162, %v1418
        %v1420 = vpop.f32.mrb[0].mxu0
        %v1421 = vadd.f32 %v1164, %v1420
        %1422 = vmatprep.mubr.f32.mxu0 %v304
        %1423 = vmatmul.mubr.f32.gmra.mrb[0].mxu0 %v303
        %v1424 = vpop.f32.mrb[0].mxu0
        %v1425 = vadd.f32 %v1168, %v1424
        %v1426 = vpop.f32.mrb[0].mxu0
        %v1427 = vadd.f32 %v1170, %v1426
        %1428 = vmatprep.mubr.f32.mxu0 %v310
        %1429 = vmatmul.mubr.f32.gmra.mrb[0].mxu0 %v309
        %v1430 = vpop.f32.mrb[0].mxu0
        %v1431 = vadd.f32 %v1174, %v1430
        %v1432 = vpop.f32.mrb[0].mxu0
        %v1433 = vadd.f32 %v1176, %v1432
        %1434 = vmatprep.mubr.f32.mxu0 %v316
        %1435 = vmatmul.mubr.f32.gmra.mrb[0].mxu0 %v315
        %v1436 = vpop.f32.mrb[0].mxu0
        %v1437 = vadd.f32 %v1180, %v1436
        %v1438 = vpop.f32.mrb[0].mxu0
        %v1439 = vadd.f32 %v1182, %v1438
        %1440 = vmatprep.mubr.f32.mxu0 %v322
        %1441 = vmatmul.mubr.f32.gmra.mrb[0].mxu0 %v321
        %v1442 = vpop.f32.mrb[0].mxu0
        %v1443 = vadd.f32 %v1186, %v1442
        %v1444 = vpop.f32.mrb[0].mxu0
        %v1445 = vadd.f32 %v1188, %v1444
        %1446 = vmatprep.mubr.f32.mxu0 %v328
        %1447 = vmatmul.mubr.f32.gmra.mrb[0].mxu0 %v327
        %v1448 = vpop.f32.mrb[0].mxu0
        %v1449 = vadd.f32 %v1192, %v1448
        %v1450 = vpop.f32.mrb[0].mxu0
        %v1451 = vadd.f32 %v1194, %v1450
        %1452 = vmatprep.mubr.f32.mxu0 %v334
        %1453 = vmatmul.mubr.f32.gmra.mrb[0].mxu0 %v333
        %v1454 = vpop.f32.mrb[0].mxu0
        %v1455 = vadd.f32 %v1198, %v1454
        %v1456 = vpop.f32.mrb[0].mxu0
        %v1457 = vadd.f32 %v1200, %v1456
        %1458 = vmatprep.mubr.f32.mxu0 %v340
        %1459 = vmatmul.mubr.f32.gmra.mrb[0].mxu0 %v339
        %v1460 = vpop.f32.mrb[0].mxu0
        %v1461 = vadd.f32 %v1204, %v1460
        %v1462 = vpop.f32.mrb[0].mxu0
        %v1463 = vadd.f32 %v1206, %v1462
        %1464 = vmatprep.mubr.f32.mxu0 %v346
        %1465 = vmatmul.mubr.f32.gmra.mrb[0].mxu0 %v345
        %v1466 = vpop.f32.mrb[0].mxu0
        %v1467 = vadd.f32 %v1210, %v1466
        %v1468 = vpop.f32.mrb[0].mxu0
        %v1469 = vadd.f32 %v1212, %v1468
        %1470 = vmatprep.mubr.f32.mxu0 %v352
        %1471 = vmatmul.mubr.f32.gmra.mrb[0].mxu0 %v351
        %v1472 = vpop.f32.mrb[0].mxu0
        %v1473 = vadd.f32 %v1216, %v1472
        %v1474 = vpop.f32.mrb[0].mxu0
        %v1475 = vadd.f32 %v1218, %v1474
        %1476 = vmatprep.mubr.f32.mxu0 %v358
        %1477 = vmatmul.mubr.f32.gmra.mrb[0].mxu0 %v357
        %v1478 = vpop.f32.mrb[0].mxu0
        %v1479 = vadd.f32 %v1222, %v1478
        %v1480 = vpop.f32.mrb[0].mxu0
        %v1481 = vadd.f32 %v1224, %v1480
        %1482 = vmatprep.mubr.f32.mxu0 %v364
        %1483 = vmatmul.mubr.f32.gmra.mrb[0].mxu0 %v363
        %v1484 = vpop.f32.mrb[0].mxu0
        %v1485 = vadd.f32 %v1228, %v1484
        %v1486 = vpop.f32.mrb[0].mxu0
        %v1487 = vadd.f32 %v1230, %v1486
        %1488 = vmatprep.mubr.f32.mxu0 %v370
        %1489 = vmatmul.mubr.f32.gmra.mrb[0].mxu0 %v369
        %v1490 = vpop.f32.mrb[0].mxu0
        %v1491 = vadd.f32 %v1234, %v1490
        %v1492 = vpop.f32.mrb[0].mxu0
        %v1493 = vadd.f32 %v1236, %v1492
        %1494 = vmatprep.mubr.f32.mxu0 %v376
        %1495 = vmatmul.mubr.f32.gmra.mrb[0].mxu0 %v375
        %v1496 = vpop.f32.mrb[0].mxu0
        %v1497 = vadd.f32 %v1240, %v1496
        %v1498 = vpop.f32.mrb[0].mxu0
        %v1499 = vadd.f32 %v1242, %v1498
        %1500 = vmatprep.mubr.f32.mxu0 %v382
        %1501 = vmatmul.mubr.f32.gmra.mrb[0].mxu0 %v381
        %v1502 = vpop.f32.mrb[0].mxu0
        %v1503 = vadd.f32 %v1246, %v1502
        %v1504 = vpop.f32.mrb[0].mxu0
        %v1505 = vadd.f32 %v1248, %v1504
        %1506 = vmatprep.mubr.f32.mxu0 %v388
        %1507 = vmatmul.mubr.f32.gmra.mrb[0].mxu0 %v387
        %v1508 = vpop.f32.mrb[0].mxu0
        %v1509 = vadd.f32 %v1252, %v1508
        %v1510 = vpop.f32.mrb[0].mxu0
        %v1511 = vadd.f32 %v1254, %v1510
        %1512 = vmatprep.mubr.f32.mxu0 %v394
        %1513 = vmatmul.mubr.f32.gmra.mrb[0].mxu0 %v393
        %v1514 = vpop.f32.mrb[0].mxu0
        %v1515 = vadd.f32 %v1258, %v1514
        %v1516 = vpop.f32.mrb[0].mxu0
        %v1517 = vadd.f32 %v1260, %v1516
        %1518 = vmatprep.mubr.f32.mxu0 %v400
        %1519 = vmatmul.mubr.f32.gmra.mrb[0].mxu0 %v399
        %v1520 = vpop.f32.mrb[0].mxu0
        %v1521 = vadd.f32 %v1264, %v1520
        %v1522 = vpop.f32.mrb[0].mxu0
        %v1523 = vadd.f32 %v1266, %v1522
        %1524 = vmatprep.mubr.f32.mxu0 %v406
        %1525 = vmatmul.mubr.f32.gmra.mrb[0].mxu0 %v405
        %v1526 = vpop.f32.mrb[0].mxu0
        %v1527 = vadd.f32 %v1270, %v1526
        %v1528 = vpop.f32.mrb[0].mxu0
        %v1529 = vadd.f32 %v1272, %v1528
        %1530 = vmatprep.mubr.f32.mxu0 %v412
        %1531 = vmatmul.mubr.f32.gmra.mrb[0].mxu0 %v411
        %v1532 = vpop.f32.mrb[0].mxu0
        %v1533 = vadd.f32 %v1276, %v1532
        %v1534 = vpop.f32.mrb[0].mxu0
        %v1535 = vadd.f32 %v1278, %v1534
        %1536 = vmatprep.mubr.f32.mxu0 %v418
        %1537 = vmatmul.mubr.f32.gmra.mrb[0].mxu0 %v417
        %v1538 = vpop.f32.mrb[0].mxu0
        %v1539 = vadd.f32 %v1282, %v1538
        %v1540 = vpop.f32.mrb[0].mxu0
        %v1541 = vadd.f32 %v1284, %v1540
        %1542 = vmatprep.mubr.f32.mxu0 %v424
        %1543 = vmatmul.mubr.f32.gmra.mrb[0].mxu0 %v423
        %v1544 = vpop.f32.mrb[0].mxu0
        %v1545 = vadd.f32 %v1288, %v1544
        %v1546 = vpop.f32.mrb[0].mxu0
        %v1547 = vadd.f32 %v1290, %v1546
        %1548 = vmatprep.mubr.f32.mxu0 %v430
        %1549 = vmatmul.mubr.f32.gmra.mrb[0].mxu0 %v429
        %v1550 = vpop.f32.mrb[0].mxu0
        %v1551 = vadd.f32 %v1294, %v1550
        %v1552 = vpop.f32.mrb[0].mxu0
        %v1553 = vadd.f32 %v1296, %v1552
        %1554 = vmatprep.mubr.f32.mxu0 %v436
        %1555 = vmatmul.mubr.f32.gmra.mrb[0].mxu0 %v435
        %v1556 = vpop.f32.mrb[0].mxu0
        %v1557 = vadd.f32 %v1300, %v1556
        %v1558 = vpop.f32.mrb[0].mxu0
        %v1559 = vadd.f32 %v1302, %v1558
        %1560 = vmatprep.mubr.f32.mxu0 %v442
        %1561 = vmatmul.mubr.f32.gmra.mrb[0].mxu0 %v441
        %v1562 = vpop.f32.mrb[0].mxu0
        %v1563 = vadd.f32 %v1306, %v1562
        %v1564 = vpop.f32.mrb[0].mxu0
        %v1565 = vadd.f32 %v1308, %v1564
        %1566 = vmatprep.mubr.f32.mxu0 %v448
        %1567 = vmatmul.mubr.f32.gmra.mrb[0].mxu0 %v447
        %v1568 = vpop.f32.mrb[0].mxu0
        %v1569 = vadd.f32 %v1312, %v1568
        %v1570 = vpop.f32.mrb[0].mxu0
        %v1571 = vadd.f32 %v1314, %v1570
        %1572 = vdwg.mxu0
        %1573 = vmatprep.subr.mxu0 %v456
        %1574 = vmatpush1.xpose.msra.mxu0 %v455
        %1575 = vmatprep.subr.mxu0 %v462
        %1576 = vmatpush1.xpose.msra.mxu0 %v461
        %1577 = vmatprep.subr.mxu0 %v468
        %1578 = vmatpush1.xpose.msra.mxu0 %v467
        %1579 = vmatprep.subr.mxu0 %v474
        %1580 = vmatpush1.xpose.msra.mxu0 %v473
        %1581 = vmatprep.subr.mxu0 %v480
        %1582 = vmatpush1.xpose.msra.mxu0 %v479
        %1583 = vmatprep.subr.mxu0 %v486
        %1584 = vmatpush1.xpose.msra.mxu0 %v485
        %1585 = vmatprep.subr.mxu0 %v492
        %1586 = vmatpush1.xpose.msra.mxu0 %v491
        %1587 = vmatprep.subr.mxu0 %v498
        %1588 = vmatpush1.xpose.msra.mxu0 %v497
        %1589 = vmatprep.subr.mxu0 %v504
        %1590 = vmatpush1.xpose.msra.mxu0 %v503
        %1591 = vmatprep.subr.mxu0 %v510
        %1592 = vmatpush1.xpose.msra.mxu0 %v509
        %1593 = vmatprep.subr.mxu0 %v516
        %1594 = vmatpush1.xpose.msra.mxu0 %v515
        %1595 = vmatprep.subr.mxu0 %v522
        %1596 = vmatpush1.xpose.msra.mxu0 %v521
        %1597 = vmatprep.subr.mxu0 %v528
        %1598 = vmatpush1.xpose.msra.mxu0 %v527
        %1599 = vmatprep.subr.mxu0 %v534
        %1600 = vmatpush1.xpose.msra.mxu0 %v533
        %1601 = vmatprep.subr.mxu0 %v540
        %1602 = vmatpush1.xpose.msra.mxu0 %v539
        %1603 = vmatprep.subr.mxu0 %v546
        %1604 = vmatpush1.xpose.msra.mxu0 %v545
        %1605 = vmatprep.subr.mxu0 %v552
        %1606 = vmatpush1.xpose.msra.mxu0 %v551
        %1607 = vmatprep.subr.mxu0 %v558
        %1608 = vmatpush1.xpose.msra.mxu0 %v557
        %1609 = vmatprep.subr.mxu0 %v564
        %1610 = vmatpush1.xpose.msra.mxu0 %v563
        %1611 = vmatprep.subr.mxu0 %v570
        %1612 = vmatpush1.xpose.msra.mxu0 %v569
        %1613 = vmatprep.subr.mxu0 %v576
        %1614 = vmatpush1.xpose.msra.mxu0 %v575
        %1615 = vmatprep.subr.mxu0 %v582
        %1616 = vmatpush1.xpose.msra.mxu0 %v581
        %1617 = vmatprep.subr.mxu0 %v588
        %1618 = vmatpush1.xpose.msra.mxu0 %v587
        %1619 = vmatprep.subr.mxu0 %v594
        %1620 = vmatpush1.xpose.msra.mxu0 %v593
        %1621 = vmatprep.subr.mxu0 %v600
        %1622 = vmatpush1.xpose.msra.mxu0 %v599
        %1623 = vmatprep.subr.mxu0 %v606
        %1624 = vmatpush1.xpose.msra.mxu0 %v605
        %1625 = vmatprep.subr.mxu0 %v612
        %1626 = vmatpush1.xpose.msra.mxu0 %v611
        %1627 = vmatprep.subr.mxu0 %v618
        %1628 = vmatpush1.xpose.msra.mxu0 %v617
        %1629 = vmatprep.subr.mxu0 %v624
        %1630 = vmatpush1.xpose.msra.mxu0 %v623
        %1631 = vmatprep.subr.mxu0 %v630
        %1632 = vmatpush1.xpose.msra.mxu0 %v629
        %1633 = vmatprep.subr.mxu0 %v636
        %1634 = vmatpush1.xpose.msra.mxu0 %v635
        %1635 = vmatprep.subr.mxu0 %v642
        %1636 = vmatpush1.xpose.msra.mxu0 %v641
        %1637 = vmatprep.mubr.f32.mxu0 %v264
        %1638 = vmatmul.mubr.f32.gmra.mrb[0].mxu0 %v263
        %v1639 = vpop.f32.mrb[0].mxu0
        %v1640 = vadd.f32 %v1383, %v1639
        %v1641 = vpop.f32.mrb[0].mxu0
        %v1642 = vadd.f32 %v1385, %v1641
        %1643 = vmatprep.mubr.f32.mxu0 %v270
        %1644 = vmatmul.mubr.f32.gmra.mrb[0].mxu0 %v269
        %v1645 = vpop.f32.mrb[0].mxu0
        %v1646 = vadd.f32 %v1389, %v1645
        %v1647 = vpop.f32.mrb[0].mxu0
        %v1648 = vadd.f32 %v1391, %v1647
        %1649 = vmatprep.mubr.f32.mxu0 %v276
        %1650 = vmatmul.mubr.f32.gmra.mrb[0].mxu0 %v275
        %v1651 = vpop.f32.mrb[0].mxu0
        %v1652 = vadd.f32 %v1395, %v1651
        %v1653 = vpop.f32.mrb[0].mxu0
        %v1654 = vadd.f32 %v1397, %v1653
        %1655 = vmatprep.mubr.f32.mxu0 %v282
        %1656 = vmatmul.mubr.f32.gmra.mrb[0].mxu0 %v281
        %v1657 = vpop.f32.mrb[0].mxu0
        %v1658 = vadd.f32 %v1401, %v1657
        %v1659 = vpop.f32.mrb[0].mxu0
        %v1660 = vadd.f32 %v1403, %v1659
        %1661 = vmatprep.mubr.f32.mxu0 %v288
        %1662 = vmatmul.mubr.f32.gmra.mrb[0].mxu0 %v287
        %v1663 = vpop.f32.mrb[0].mxu0
        %v1664 = vadd.f32 %v1407, %v1663
        %v1665 = vpop.f32.mrb[0].mxu0
        %v1666 = vadd.f32 %v1409, %v1665
        %1667 = vmatprep.mubr.f32.mxu0 %v294
        %1668 = vmatmul.mubr.f32.gmra.mrb[0].mxu0 %v293
        %v1669 = vpop.f32.mrb[0].mxu0
        %v1670 = vadd.f32 %v1413, %v1669
        %v1671 = vpop.f32.mrb[0].mxu0
        %v1672 = vadd.f32 %v1415, %v1671
        %1673 = vmatprep.mubr.f32.mxu0 %v300
        %1674 = vmatmul.mubr.f32.gmra.mrb[0].mxu0 %v299
        %v1675 = vpop.f32.mrb[0].mxu0
        %v1676 = vadd.f32 %v1419, %v1675
        %v1677 = vpop.f32.mrb[0].mxu0
        %v1678 = vadd.f32 %v1421, %v1677
        %1679 = vmatprep.mubr.f32.mxu0 %v306
        %1680 = vmatmul.mubr.f32.gmra.mrb[0].mxu0 %v305
        %v1681 = vpop.f32.mrb[0].mxu0
        %v1682 = vadd.f32 %v1425, %v1681
        %v1683 = vpop.f32.mrb[0].mxu0
        %v1684 = vadd.f32 %v1427, %v1683
        %1685 = vmatprep.mubr.f32.mxu0 %v312
        %1686 = vmatmul.mubr.f32.gmra.mrb[0].mxu0 %v311
        %v1687 = vpop.f32.mrb[0].mxu0
        %v1688 = vadd.f32 %v1431, %v1687
        %v1689 = vpop.f32.mrb[0].mxu0
        %v1690 = vadd.f32 %v1433, %v1689
        %1691 = vmatprep.mubr.f32.mxu0 %v318
        %1692 = vmatmul.mubr.f32.gmra.mrb[0].mxu0 %v317
        %v1693 = vpop.f32.mrb[0].mxu0
        %v1694 = vadd.f32 %v1437, %v1693
        %v1695 = vpop.f32.mrb[0].mxu0
        %v1696 = vadd.f32 %v1439, %v1695
        %1697 = vmatprep.mubr.f32.mxu0 %v324
        %1698 = vmatmul.mubr.f32.gmra.mrb[0].mxu0 %v323
        %v1699 = vpop.f32.mrb[0].mxu0
        %v1700 = vadd.f32 %v1443, %v1699
        %v1701 = vpop.f32.mrb[0].mxu0
        %v1702 = vadd.f32 %v1445, %v1701
        %1703 = vmatprep.mubr.f32.mxu0 %v330
        %1704 = vmatmul.mubr.f32.gmra.mrb[0].mxu0 %v329
        %v1705 = vpop.f32.mrb[0].mxu0
        %v1706 = vadd.f32 %v1449, %v1705
        %v1707 = vpop.f32.mrb[0].mxu0
        %v1708 = vadd.f32 %v1451, %v1707
        %1709 = vmatprep.mubr.f32.mxu0 %v336
        %1710 = vmatmul.mubr.f32.gmra.mrb[0].mxu0 %v335
        %v1711 = vpop.f32.mrb[0].mxu0
        %v1712 = vadd.f32 %v1455, %v1711
        %v1713 = vpop.f32.mrb[0].mxu0
        %v1714 = vadd.f32 %v1457, %v1713
        %1715 = vmatprep.mubr.f32.mxu0 %v342
        %1716 = vmatmul.mubr.f32.gmra.mrb[0].mxu0 %v341
        %v1717 = vpop.f32.mrb[0].mxu0
        %v1718 = vadd.f32 %v1461, %v1717
        %v1719 = vpop.f32.mrb[0].mxu0
        %v1720 = vadd.f32 %v1463, %v1719
        %1721 = vmatprep.mubr.f32.mxu0 %v348
        %1722 = vmatmul.mubr.f32.gmra.mrb[0].mxu0 %v347
        %v1723 = vpop.f32.mrb[0].mxu0
        %v1724 = vadd.f32 %v1467, %v1723
        %v1725 = vpop.f32.mrb[0].mxu0
        %v1726 = vadd.f32 %v1469, %v1725
        %1727 = vmatprep.mubr.f32.mxu0 %v354
        %1728 = vmatmul.mubr.f32.gmra.mrb[0].mxu0 %v353
        %v1729 = vpop.f32.mrb[0].mxu0
        %v1730 = vadd.f32 %v1473, %v1729
        %v1731 = vpop.f32.mrb[0].mxu0
        %v1732 = vadd.f32 %v1475, %v1731
        %1733 = vmatprep.mubr.f32.mxu0 %v360
        %1734 = vmatmul.mubr.f32.gmra.mrb[0].mxu0 %v359
        %v1735 = vpop.f32.mrb[0].mxu0
        %v1736 = vadd.f32 %v1479, %v1735
        %v1737 = vpop.f32.mrb[0].mxu0
        %v1738 = vadd.f32 %v1481, %v1737
        %1739 = vmatprep.mubr.f32.mxu0 %v366
        %1740 = vmatmul.mubr.f32.gmra.mrb[0].mxu0 %v365
        %v1741 = vpop.f32.mrb[0].mxu0
        %v1742 = vadd.f32 %v1485, %v1741
        %v1743 = vpop.f32.mrb[0].mxu0
        %v1744 = vadd.f32 %v1487, %v1743
        %1745 = vmatprep.mubr.f32.mxu0 %v372
        %1746 = vmatmul.mubr.f32.gmra.mrb[0].mxu0 %v371
        %v1747 = vpop.f32.mrb[0].mxu0
        %v1748 = vadd.f32 %v1491, %v1747
        %v1749 = vpop.f32.mrb[0].mxu0
        %v1750 = vadd.f32 %v1493, %v1749
        %1751 = vmatprep.mubr.f32.mxu0 %v378
        %1752 = vmatmul.mubr.f32.gmra.mrb[0].mxu0 %v377
        %v1753 = vpop.f32.mrb[0].mxu0
        %v1754 = vadd.f32 %v1497, %v1753
        %v1755 = vpop.f32.mrb[0].mxu0
        %v1756 = vadd.f32 %v1499, %v1755
        %1757 = vmatprep.mubr.f32.mxu0 %v384
        %1758 = vmatmul.mubr.f32.gmra.mrb[0].mxu0 %v383
        %v1759 = vpop.f32.mrb[0].mxu0
        %v1760 = vadd.f32 %v1503, %v1759
        %v1761 = vpop.f32.mrb[0].mxu0
        %v1762 = vadd.f32 %v1505, %v1761
        %1763 = vmatprep.mubr.f32.mxu0 %v390
        %1764 = vmatmul.mubr.f32.gmra.mrb[0].mxu0 %v389
        %v1765 = vpop.f32.mrb[0].mxu0
        %v1766 = vadd.f32 %v1509, %v1765
        %v1767 = vpop.f32.mrb[0].mxu0
        %v1768 = vadd.f32 %v1511, %v1767
        %1769 = vmatprep.mubr.f32.mxu0 %v396
        %1770 = vmatmul.mubr.f32.gmra.mrb[0].mxu0 %v395
        %v1771 = vpop.f32.mrb[0].mxu0
        %v1772 = vadd.f32 %v1515, %v1771
        %v1773 = vpop.f32.mrb[0].mxu0
        %v1774 = vadd.f32 %v1517, %v1773
        %1775 = vmatprep.mubr.f32.mxu0 %v402
        %1776 = vmatmul.mubr.f32.gmra.mrb[0].mxu0 %v401
        %v1777 = vpop.f32.mrb[0].mxu0
        %v1778 = vadd.f32 %v1521, %v1777
        %v1779 = vpop.f32.mrb[0].mxu0
        %v1780 = vadd.f32 %v1523, %v1779
        %1781 = vmatprep.mubr.f32.mxu0 %v408
        %1782 = vmatmul.mubr.f32.gmra.mrb[0].mxu0 %v407
        %v1783 = vpop.f32.mrb[0].mxu0
        %v1784 = vadd.f32 %v1527, %v1783
        %v1785 = vpop.f32.mrb[0].mxu0
        %v1786 = vadd.f32 %v1529, %v1785
        %1787 = vmatprep.mubr.f32.mxu0 %v414
        %1788 = vmatmul.mubr.f32.gmra.mrb[0].mxu0 %v413
        %v1789 = vpop.f32.mrb[0].mxu0
        %v1790 = vadd.f32 %v1533, %v1789
        %v1791 = vpop.f32.mrb[0].mxu0
        %v1792 = vadd.f32 %v1535, %v1791
        %1793 = vmatprep.mubr.f32.mxu0 %v420
        %1794 = vmatmul.mubr.f32.gmra.mrb[0].mxu0 %v419
        %v1795 = vpop.f32.mrb[0].mxu0
        %v1796 = vadd.f32 %v1539, %v1795
        %v1797 = vpop.f32.mrb[0].mxu0
        %v1798 = vadd.f32 %v1541, %v1797
        %1799 = vmatprep.mubr.f32.mxu0 %v426
        %1800 = vmatmul.mubr.f32.gmra.mrb[0].mxu0 %v425
        %v1801 = vpop.f32.mrb[0].mxu0
        %v1802 = vadd.f32 %v1545, %v1801
        %v1803 = vpop.f32.mrb[0].mxu0
        %v1804 = vadd.f32 %v1547, %v1803
        %1805 = vmatprep.mubr.f32.mxu0 %v432
        %1806 = vmatmul.mubr.f32.gmra.mrb[0].mxu0 %v431
        %v1807 = vpop.f32.mrb[0].mxu0
        %v1808 = vadd.f32 %v1551, %v1807
        %v1809 = vpop.f32.mrb[0].mxu0
        %v1810 = vadd.f32 %v1553, %v1809
        %1811 = vmatprep.mubr.f32.mxu0 %v438
        %1812 = vmatmul.mubr.f32.gmra.mrb[0].mxu0 %v437
        %v1813 = vpop.f32.mrb[0].mxu0
        %v1814 = vadd.f32 %v1557, %v1813
        %v1815 = vpop.f32.mrb[0].mxu0
        %v1816 = vadd.f32 %v1559, %v1815
        %1817 = vmatprep.mubr.f32.mxu0 %v444
        %1818 = vmatmul.mubr.f32.gmra.mrb[0].mxu0 %v443
        %v1819 = vpop.f32.mrb[0].mxu0
        %v1820 = vadd.f32 %v1563, %v1819
        %v1821 = vpop.f32.mrb[0].mxu0
        %v1822 = vadd.f32 %v1565, %v1821
        %1823 = vmatprep.mubr.f32.mxu0 %v450
        %1824 = vmatmul.mubr.f32.gmra.mrb[0].mxu0 %v449
        %v1825 = vpop.f32.mrb[0].mxu0
        %v1826 = vadd.f32 %v1569, %v1825
        %v1827 = vpop.f32.mrb[0].mxu0
        %v1828 = vadd.f32 %v1571, %v1827
        %1829 = vdwg.mxu0
        %1830 = vmatprep.subr.mxu0 %v644
        %1831 = vmatpush1.xpose.msra.mxu0 %v643
        %1832 = vmatprep.subr.mxu0 %v650
        %1833 = vmatpush1.xpose.msra.mxu0 %v649
        %1834 = vmatprep.subr.mxu0 %v656
        %1835 = vmatpush1.xpose.msra.mxu0 %v655
        %1836 = vmatprep.subr.mxu0 %v662
        %1837 = vmatpush1.xpose.msra.mxu0 %v661
        %1838 = vmatprep.subr.mxu0 %v668
        %1839 = vmatpush1.xpose.msra.mxu0 %v667
        %1840 = vmatprep.subr.mxu0 %v674
        %1841 = vmatpush1.xpose.msra.mxu0 %v673
        %1842 = vmatprep.subr.mxu0 %v680
        %1843 = vmatpush1.xpose.msra.mxu0 %v679
        %1844 = vmatprep.subr.mxu0 %v686
        %1845 = vmatpush1.xpose.msra.mxu0 %v685
        %1846 = vmatprep.subr.mxu0 %v692
        %1847 = vmatpush1.xpose.msra.mxu0 %v691
        %1848 = vmatprep.subr.mxu0 %v698
        %1849 = vmatpush1.xpose.msra.mxu0 %v697
        %1850 = vmatprep.subr.mxu0 %v704
        %1851 = vmatpush1.xpose.msra.mxu0 %v703
        %1852 = vmatprep.subr.mxu0 %v710
        %1853 = vmatpush1.xpose.msra.mxu0 %v709
        %1854 = vmatprep.subr.mxu0 %v716
        %1855 = vmatpush1.xpose.msra.mxu0 %v715
        %1856 = vmatprep.subr.mxu0 %v722
        %1857 = vmatpush1.xpose.msra.mxu0 %v721
        %1858 = vmatprep.subr.mxu0 %v728
        %1859 = vmatpush1.xpose.msra.mxu0 %v727
        %1860 = vmatprep.subr.mxu0 %v734
        %1861 = vmatpush1.xpose.msra.mxu0 %v733
        %1862 = vmatprep.subr.mxu0 %v740
        %1863 = vmatpush1.xpose.msra.mxu0 %v739
        %1864 = vmatprep.subr.mxu0 %v746
        %1865 = vmatpush1.xpose.msra.mxu0 %v745
        %1866 = vmatprep.subr.mxu0 %v752
        %1867 = vmatpush1.xpose.msra.mxu0 %v751
        %1868 = vmatprep.subr.mxu0 %v758
        %1869 = vmatpush1.xpose.msra.mxu0 %v757
        %1870 = vmatprep.subr.mxu0 %v764
        %1871 = vmatpush1.xpose.msra.mxu0 %v763
        %1872 = vmatprep.subr.mxu0 %v770
        %1873 = vmatpush1.xpose.msra.mxu0 %v769
        %1874 = vmatprep.subr.mxu0 %v776
        %1875 = vmatpush1.xpose.msra.mxu0 %v775
        %1876 = vmatprep.subr.mxu0 %v782
        %1877 = vmatpush1.xpose.msra.mxu0 %v781
        %1878 = vmatprep.subr.mxu0 %v788
        %1879 = vmatpush1.xpose.msra.mxu0 %v787
        %1880 = vmatprep.subr.mxu0 %v794
        %1881 = vmatpush1.xpose.msra.mxu0 %v793
        %1882 = vmatprep.subr.mxu0 %v800
        %1883 = vmatpush1.xpose.msra.mxu0 %v799
        %1884 = vmatprep.subr.mxu0 %v806
        %1885 = vmatpush1.xpose.msra.mxu0 %v805
        %1886 = vmatprep.subr.mxu0 %v812
        %1887 = vmatpush1.xpose.msra.mxu0 %v811
        %1888 = vmatprep.subr.mxu0 %v818
        %1889 = vmatpush1.xpose.msra.mxu0 %v817
        %1890 = vmatprep.subr.mxu0 %v824
        %1891 = vmatpush1.xpose.msra.mxu0 %v823
        %1892 = vmatprep.subr.mxu0 %v830
        %1893 = vmatpush1.xpose.msra.mxu0 %v829
        %1894 = vmatprep.mubr.f32.mxu0 %v260
        %1895 = vmatmul.mubr.f32.gmra.mrb[0].mxu0 %v259
        %v1896 = vpop.f32.mrb[0].mxu0
        %v1897 = vadd.f32 %v1040, %v1896
        %v1898 = vpop.f32.mrb[0].mxu0
        %v1899 = vadd.f32 %v1044, %v1898
        %1900 = vmatprep.mubr.f32.mxu0 %v266
        %1901 = vmatmul.mubr.f32.gmra.mrb[0].mxu0 %v265
        %v1902 = vpop.f32.mrb[0].mxu0
        %v1903 = vadd.f32 %v1040, %v1902
        %v1904 = vpop.f32.mrb[0].mxu0
        %v1905 = vadd.f32 %v1044, %v1904
        %1906 = vmatprep.mubr.f32.mxu0 %v272
        %1907 = vmatmul.mubr.f32.gmra.mrb[0].mxu0 %v271
        %v1908 = vpop.f32.mrb[0].mxu0
        %v1909 = vadd.f32 %v1040, %v1908
        %v1910 = vpop.f32.mrb[0].mxu0
        %v1911 = vadd.f32 %v1044, %v1910
        %1912 = vmatprep.mubr.f32.mxu0 %v278
        %1913 = vmatmul.mubr.f32.gmra.mrb[0].mxu0 %v277
        %v1914 = vpop.f32.mrb[0].mxu0
        %v1915 = vadd.f32 %v1040, %v1914
        %v1916 = vpop.f32.mrb[0].mxu0
        %v1917 = vadd.f32 %v1044, %v1916
        %1918 = vmatprep.mubr.f32.mxu0 %v284
        %1919 = vmatmul.mubr.f32.gmra.mrb[0].mxu0 %v283
        %v1920 = vpop.f32.mrb[0].mxu0
        %v1921 = vadd.f32 %v1040, %v1920
        %v1922 = vpop.f32.mrb[0].mxu0
        %v1923 = vadd.f32 %v1044, %v1922
        %1924 = vmatprep.mubr.f32.mxu0 %v290
        %1925 = vmatmul.mubr.f32.gmra.mrb[0].mxu0 %v289
        %v1926 = vpop.f32.mrb[0].mxu0
        %v1927 = vadd.f32 %v1040, %v1926
        %v1928 = vpop.f32.mrb[0].mxu0
        %v1929 = vadd.f32 %v1044, %v1928
        %1930 = vmatprep.mubr.f32.mxu0 %v296
        %1931 = vmatmul.mubr.f32.gmra.mrb[0].mxu0 %v295
        %v1932 = vpop.f32.mrb[0].mxu0
        %v1933 = vadd.f32 %v1040, %v1932
        %v1934 = vpop.f32.mrb[0].mxu0
        %v1935 = vadd.f32 %v1044, %v1934
        %1936 = vmatprep.mubr.f32.mxu0 %v302
        %1937 = vmatmul.mubr.f32.gmra.mrb[0].mxu0 %v301
        %v1938 = vpop.f32.mrb[0].mxu0
        %v1939 = vadd.f32 %v1040, %v1938
        %v1940 = vpop.f32.mrb[0].mxu0
        %v1941 = vadd.f32 %v1044, %v1940
        %1942 = vmatprep.mubr.f32.mxu0 %v308
        %1943 = vmatmul.mubr.f32.gmra.mrb[0].mxu0 %v307
        %v1944 = vpop.f32.mrb[0].mxu0
        %v1945 = vadd.f32 %v1040, %v1944
        %v1946 = vpop.f32.mrb[0].mxu0
        %v1947 = vadd.f32 %v1044, %v1946
        %1948 = vmatprep.mubr.f32.mxu0 %v314
        %1949 = vmatmul.mubr.f32.gmra.mrb[0].mxu0 %v313
        %v1950 = vpop.f32.mrb[0].mxu0
        %v1951 = vadd.f32 %v1040, %v1950
        %v1952 = vpop.f32.mrb[0].mxu0
        %v1953 = vadd.f32 %v1044, %v1952
        %1954 = vmatprep.mubr.f32.mxu0 %v320
        %1955 = vmatmul.mubr.f32.gmra.mrb[0].mxu0 %v319
        %v1956 = vpop.f32.mrb[0].mxu0
        %v1957 = vadd.f32 %v1040, %v1956
        %v1958 = vpop.f32.mrb[0].mxu0
        %v1959 = vadd.f32 %v1044, %v1958
        %1960 = vmatprep.mubr.f32.mxu0 %v326
        %1961 = vmatmul.mubr.f32.gmra.mrb[0].mxu0 %v325
        %v1962 = vpop.f32.mrb[0].mxu0
        %v1963 = vadd.f32 %v1040, %v1962
        %v1964 = vpop.f32.mrb[0].mxu0
        %v1965 = vadd.f32 %v1044, %v1964
        %1966 = vmatprep.mubr.f32.mxu0 %v332
        %1967 = vmatmul.mubr.f32.gmra.mrb[0].mxu0 %v331
        %v1968 = vpop.f32.mrb[0].mxu0
        %v1969 = vadd.f32 %v1040, %v1968
        %v1970 = vpop.f32.mrb[0].mxu0
        %v1971 = vadd.f32 %v1044, %v1970
        %1972 = vmatprep.mubr.f32.mxu0 %v338
        %1973 = vmatmul.mubr.f32.gmra.mrb[0].mxu0 %v337
        %v1974 = vpop.f32.mrb[0].mxu0
        %v1975 = vadd.f32 %v1040, %v1974
        %v1976 = vpop.f32.mrb[0].mxu0
        %v1977 = vadd.f32 %v1044, %v1976
        %1978 = vmatprep.mubr.f32.mxu0 %v344
        %1979 = vmatmul.mubr.f32.gmra.mrb[0].mxu0 %v343
        %v1980 = vpop.f32.mrb[0].mxu0
        %v1981 = vadd.f32 %v1040, %v1980
        %v1982 = vpop.f32.mrb[0].mxu0
        %v1983 = vadd.f32 %v1044, %v1982
        %1984 = vmatprep.mubr.f32.mxu0 %v350
        %1985 = vmatmul.mubr.f32.gmra.mrb[0].mxu0 %v349
        %v1986 = vpop.f32.mrb[0].mxu0
        %v1987 = vadd.f32 %v1040, %v1986
        %v1988 = vpop.f32.mrb[0].mxu0
        %v1989 = vadd.f32 %v1044, %v1988
        %1990 = vmatprep.mubr.f32.mxu0 %v356
        %1991 = vmatmul.mubr.f32.gmra.mrb[0].mxu0 %v355
        %v1992 = vpop.f32.mrb[0].mxu0
        %v1993 = vadd.f32 %v1040, %v1992
        %v1994 = vpop.f32.mrb[0].mxu0
        %v1995 = vadd.f32 %v1044, %v1994
        %1996 = vmatprep.mubr.f32.mxu0 %v362
        %1997 = vmatmul.mubr.f32.gmra.mrb[0].mxu0 %v361
        %v1998 = vpop.f32.mrb[0].mxu0
        %v1999 = vadd.f32 %v1040, %v1998
        %v2000 = vpop.f32.mrb[0].mxu0
        %v2001 = vadd.f32 %v1044, %v2000
        %2002 = vmatprep.mubr.f32.mxu0 %v368
        %2003 = vmatmul.mubr.f32.gmra.mrb[0].mxu0 %v367
        %v2004 = vpop.f32.mrb[0].mxu0
        %v2005 = vadd.f32 %v1040, %v2004
        %v2006 = vpop.f32.mrb[0].mxu0
        %v2007 = vadd.f32 %v1044, %v2006
        %2008 = vmatprep.mubr.f32.mxu0 %v374
        %2009 = vmatmul.mubr.f32.gmra.mrb[0].mxu0 %v373
        %v2010 = vpop.f32.mrb[0].mxu0
        %v2011 = vadd.f32 %v1040, %v2010
        %v2012 = vpop.f32.mrb[0].mxu0
        %v2013 = vadd.f32 %v1044, %v2012
        %2014 = vmatprep.mubr.f32.mxu0 %v380
        %2015 = vmatmul.mubr.f32.gmra.mrb[0].mxu0 %v379
        %v2016 = vpop.f32.mrb[0].mxu0
        %v2017 = vadd.f32 %v1040, %v2016
        %v2018 = vpop.f32.mrb[0].mxu0
        %v2019 = vadd.f32 %v1044, %v2018
        %2020 = vmatprep.mubr.f32.mxu0 %v386
        %2021 = vmatmul.mubr.f32.gmra.mrb[0].mxu0 %v385
        %v2022 = vpop.f32.mrb[0].mxu0
        %v2023 = vadd.f32 %v1040, %v2022
        %v2024 = vpop.f32.mrb[0].mxu0
        %v2025 = vadd.f32 %v1044, %v2024
        %2026 = vmatprep.mubr.f32.mxu0 %v392
        %2027 = vmatmul.mubr.f32.gmra.mrb[0].mxu0 %v391
        %v2028 = vpop.f32.mrb[0].mxu0
        %v2029 = vadd.f32 %v1040, %v2028
        %v2030 = vpop.f32.mrb[0].mxu0
        %v2031 = vadd.f32 %v1044, %v2030
        %2032 = vmatprep.mubr.f32.mxu0 %v398
        %2033 = vmatmul.mubr.f32.gmra.mrb[0].mxu0 %v397
        %v2034 = vpop.f32.mrb[0].mxu0
        %v2035 = vadd.f32 %v1040, %v2034
        %v2036 = vpop.f32.mrb[0].mxu0
        %v2037 = vadd.f32 %v1044, %v2036
        %2038 = vmatprep.mubr.f32.mxu0 %v404
        %2039 = vmatmul.mubr.f32.gmra.mrb[0].mxu0 %v403
        %v2040 = vpop.f32.mrb[0].mxu0
        %v2041 = vadd.f32 %v1040, %v2040
        %v2042 = vpop.f32.mrb[0].mxu0
        %v2043 = vadd.f32 %v1044, %v2042
        %2044 = vmatprep.mubr.f32.mxu0 %v410
        %2045 = vmatmul.mubr.f32.gmra.mrb[0].mxu0 %v409
        %v2046 = vpop.f32.mrb[0].mxu0
        %v2047 = vadd.f32 %v1040, %v2046
        %v2048 = vpop.f32.mrb[0].mxu0
        %v2049 = vadd.f32 %v1044, %v2048
        %2050 = vmatprep.mubr.f32.mxu0 %v416
        %2051 = vmatmul.mubr.f32.gmra.mrb[0].mxu0 %v415
        %v2052 = vpop.f32.mrb[0].mxu0
        %v2053 = vadd.f32 %v1040, %v2052
        %v2054 = vpop.f32.mrb[0].mxu0
        %v2055 = vadd.f32 %v1044, %v2054
        %2056 = vmatprep.mubr.f32.mxu0 %v422
        %2057 = vmatmul.mubr.f32.gmra.mrb[0].mxu0 %v421
        %v2058 = vpop.f32.mrb[0].mxu0
        %v2059 = vadd.f32 %v1040, %v2058
        %v2060 = vpop.f32.mrb[0].mxu0
        %v2061 = vadd.f32 %v1044, %v2060
        %2062 = vmatprep.mubr.f32.mxu0 %v428
        %2063 = vmatmul.mubr.f32.gmra.mrb[0].mxu0 %v427
        %v2064 = vpop.f32.mrb[0].mxu0
        %v2065 = vadd.f32 %v1040, %v2064
        %v2066 = vpop.f32.mrb[0].mxu0
        %v2067 = vadd.f32 %v1044, %v2066
        %2068 = vmatprep.mubr.f32.mxu0 %v434
        %2069 = vmatmul.mubr.f32.gmra.mrb[0].mxu0 %v433
        %v2070 = vpop.f32.mrb[0].mxu0
        %v2071 = vadd.f32 %v1040, %v2070
        %v2072 = vpop.f32.mrb[0].mxu0
        %v2073 = vadd.f32 %v1044, %v2072
        %2074 = vmatprep.mubr.f32.mxu0 %v440
        %2075 = vmatmul.mubr.f32.gmra.mrb[0].mxu0 %v439
        %v2076 = vpop.f32.mrb[0].mxu0
        %v2077 = vadd.f32 %v1040, %v2076
        %v2078 = vpop.f32.mrb[0].mxu0
        %v2079 = vadd.f32 %v1044, %v2078
        %2080 = vmatprep.mubr.f32.mxu0 %v446
        %2081 = vmatmul.mubr.f32.gmra.mrb[0].mxu0 %v445
        %v2082 = vpop.f32.mrb[0].mxu0
        %v2083 = vadd.f32 %v1040, %v2082
        %v2084 = vpop.f32.mrb[0].mxu0
        %v2085 = vadd.f32 %v1044, %v2084
        %2086 = vdwg.mxu0
        %2087 = vmatprep.subr.mxu0 %v646
        %2088 = vmatpush1.xpose.msra.mxu0 %v645
        %2089 = vmatprep.subr.mxu0 %v652
        %2090 = vmatpush1.xpose.msra.mxu0 %v651
        %2091 = vmatprep.subr.mxu0 %v658
        %2092 = vmatpush1.xpose.msra.mxu0 %v657
        %2093 = vmatprep.subr.mxu0 %v664
        %2094 = vmatpush1.xpose.msra.mxu0 %v663
        %2095 = vmatprep.subr.mxu0 %v670
        %2096 = vmatpush1.xpose.msra.mxu0 %v669
        %2097 = vmatprep.subr.mxu0 %v676
        %2098 = vmatpush1.xpose.msra.mxu0 %v675
        %2099 = vmatprep.subr.mxu0 %v682
        %2100 = vmatpush1.xpose.msra.mxu0 %v681
        %2101 = vmatprep.subr.mxu0 %v688
        %2102 = vmatpush1.xpose.msra.mxu0 %v687
        %2103 = vmatprep.subr.mxu0 %v694
        %2104 = vmatpush1.xpose.msra.mxu0 %v693
        %2105 = vmatprep.subr.mxu0 %v700
        %2106 = vmatpush1.xpose.msra.mxu0 %v699
        %2107 = vmatprep.subr.mxu0 %v706
        %2108 = vmatpush1.xpose.msra.mxu0 %v705
        %2109 = vmatprep.subr.mxu0 %v712
        %2110 = vmatpush1.xpose.msra.mxu0 %v711
        %2111 = vmatprep.subr.mxu0 %v718
        %2112 = vmatpush1.xpose.msra.mxu0 %v717
        %2113 = vmatprep.subr.mxu0 %v724
        %2114 = vmatpush1.xpose.msra.mxu0 %v723
        %2115 = vmatprep.subr.mxu0 %v730
        %2116 = vmatpush1.xpose.msra.mxu0 %v729
        %2117 = vmatprep.subr.mxu0 %v736
        %2118 = vmatpush1.xpose.msra.mxu0 %v735
        %2119 = vmatprep.subr.mxu0 %v742
        %2120 = vmatpush1.xpose.msra.mxu0 %v741
        %2121 = vmatprep.subr.mxu0 %v748
        %2122 = vmatpush1.xpose.msra.mxu0 %v747
        %2123 = vmatprep.subr.mxu0 %v754
        %2124 = vmatpush1.xpose.msra.mxu0 %v753
        %2125 = vmatprep.subr.mxu0 %v760
        %2126 = vmatpush1.xpose.msra.mxu0 %v759
        %2127 = vmatprep.subr.mxu0 %v766
        %2128 = vmatpush1.xpose.msra.mxu0 %v765
        %2129 = vmatprep.subr.mxu0 %v772
        %2130 = vmatpush1.xpose.msra.mxu0 %v771
        %2131 = vmatprep.subr.mxu0 %v778
        %2132 = vmatpush1.xpose.msra.mxu0 %v777
        %2133 = vmatprep.subr.mxu0 %v784
        %2134 = vmatpush1.xpose.msra.mxu0 %v783
        %2135 = vmatprep.subr.mxu0 %v790
        %2136 = vmatpush1.xpose.msra.mxu0 %v789
        %2137 = vmatprep.subr.mxu0 %v796
        %2138 = vmatpush1.xpose.msra.mxu0 %v795
        %2139 = vmatprep.subr.mxu0 %v802
        %2140 = vmatpush1.xpose.msra.mxu0 %v801
        %2141 = vmatprep.subr.mxu0 %v808
        %2142 = vmatpush1.xpose.msra.mxu0 %v807
        %2143 = vmatprep.subr.mxu0 %v814
        %2144 = vmatpush1.xpose.msra.mxu0 %v813
        %2145 = vmatprep.subr.mxu0 %v820
        %2146 = vmatpush1.xpose.msra.mxu0 %v819
        %2147 = vmatprep.subr.mxu0 %v826
        %2148 = vmatpush1.xpose.msra.mxu0 %v825
        %2149 = vmatprep.subr.mxu0 %v832
        %2150 = vmatpush1.xpose.msra.mxu0 %v831
        %2151 = vmatprep.mubr.f32.mxu0 %v262
        %2152 = vmatmul.mubr.f32.gmra.mrb[0].mxu0 %v261
        %v2153 = vpop.f32.mrb[0].mxu0
        %v2154 = vadd.f32 %v1897, %v2153
        %v2155 = vpop.f32.mrb[0].mxu0
        %v2156 = vadd.f32 %v1899, %v2155
        %2157 = vmatprep.mubr.f32.mxu0 %v268
        %2158 = vmatmul.mubr.f32.gmra.mrb[0].mxu0 %v267
        %v2159 = vpop.f32.mrb[0].mxu0
        %v2160 = vadd.f32 %v1903, %v2159
        %v2161 = vpop.f32.mrb[0].mxu0
        %v2162 = vadd.f32 %v1905, %v2161
        %2163 = vmatprep.mubr.f32.mxu0 %v274
        %2164 = vmatmul.mubr.f32.gmra.mrb[0].mxu0 %v273
        %v2165 = vpop.f32.mrb[0].mxu0
        %v2166 = vadd.f32 %v1909, %v2165
        %v2167 = vpop.f32.mrb[0].mxu0
        %v2168 = vadd.f32 %v1911, %v2167
        %2169 = vmatprep.mubr.f32.mxu0 %v280
        %2170 = vmatmul.mubr.f32.gmra.mrb[0].mxu0 %v279
        %v2171 = vpop.f32.mrb[0].mxu0
        %v2172 = vadd.f32 %v1915, %v2171
        %v2173 = vpop.f32.mrb[0].mxu0
        %v2174 = vadd.f32 %v1917, %v2173
        %2175 = vmatprep.mubr.f32.mxu0 %v286
        %2176 = vmatmul.mubr.f32.gmra.mrb[0].mxu0 %v285
        %v2177 = vpop.f32.mrb[0].mxu0
        %v2178 = vadd.f32 %v1921, %v2177
        %v2179 = vpop.f32.mrb[0].mxu0
        %v2180 = vadd.f32 %v1923, %v2179
        %2181 = vmatprep.mubr.f32.mxu0 %v292
        %2182 = vmatmul.mubr.f32.gmra.mrb[0].mxu0 %v291
        %v2183 = vpop.f32.mrb[0].mxu0
        %v2184 = vadd.f32 %v1927, %v2183
        %v2185 = vpop.f32.mrb[0].mxu0
        %v2186 = vadd.f32 %v1929, %v2185
        %2187 = vmatprep.mubr.f32.mxu0 %v298
        %2188 = vmatmul.mubr.f32.gmra.mrb[0].mxu0 %v297
        %v2189 = vpop.f32.mrb[0].mxu0
        %v2190 = vadd.f32 %v1933, %v2189
        %v2191 = vpop.f32.mrb[0].mxu0
        %v2192 = vadd.f32 %v1935, %v2191
        %2193 = vmatprep.mubr.f32.mxu0 %v304
        %2194 = vmatmul.mubr.f32.gmra.mrb[0].mxu0 %v303
        %v2195 = vpop.f32.mrb[0].mxu0
        %v2196 = vadd.f32 %v1939, %v2195
        %v2197 = vpop.f32.mrb[0].mxu0
        %v2198 = vadd.f32 %v1941, %v2197
        %2199 = vmatprep.mubr.f32.mxu0 %v310
        %2200 = vmatmul.mubr.f32.gmra.mrb[0].mxu0 %v309
        %v2201 = vpop.f32.mrb[0].mxu0
        %v2202 = vadd.f32 %v1945, %v2201
        %v2203 = vpop.f32.mrb[0].mxu0
        %v2204 = vadd.f32 %v1947, %v2203
        %2205 = vmatprep.mubr.f32.mxu0 %v316
        %2206 = vmatmul.mubr.f32.gmra.mrb[0].mxu0 %v315
        %v2207 = vpop.f32.mrb[0].mxu0
        %v2208 = vadd.f32 %v1951, %v2207
        %v2209 = vpop.f32.mrb[0].mxu0
        %v2210 = vadd.f32 %v1953, %v2209
        %2211 = vmatprep.mubr.f32.mxu0 %v322
        %2212 = vmatmul.mubr.f32.gmra.mrb[0].mxu0 %v321
        %v2213 = vpop.f32.mrb[0].mxu0
        %v2214 = vadd.f32 %v1957, %v2213
        %v2215 = vpop.f32.mrb[0].mxu0
        %v2216 = vadd.f32 %v1959, %v2215
        %2217 = vmatprep.mubr.f32.mxu0 %v328
        %2218 = vmatmul.mubr.f32.gmra.mrb[0].mxu0 %v327
        %v2219 = vpop.f32.mrb[0].mxu0
        %v2220 = vadd.f32 %v1963, %v2219
        %v2221 = vpop.f32.mrb[0].mxu0
        %v2222 = vadd.f32 %v1965, %v2221
        %2223 = vmatprep.mubr.f32.mxu0 %v334
        %2224 = vmatmul.mubr.f32.gmra.mrb[0].mxu0 %v333
        %v2225 = vpop.f32.mrb[0].mxu0
        %v2226 = vadd.f32 %v1969, %v2225
        %v2227 = vpop.f32.mrb[0].mxu0
        %v2228 = vadd.f32 %v1971, %v2227
        %2229 = vmatprep.mubr.f32.mxu0 %v340
        %2230 = vmatmul.mubr.f32.gmra.mrb[0].mxu0 %v339
        %v2231 = vpop.f32.mrb[0].mxu0
        %v2232 = vadd.f32 %v1975, %v2231
        %v2233 = vpop.f32.mrb[0].mxu0
        %v2234 = vadd.f32 %v1977, %v2233
        %2235 = vmatprep.mubr.f32.mxu0 %v346
        %2236 = vmatmul.mubr.f32.gmra.mrb[0].mxu0 %v345
        %v2237 = vpop.f32.mrb[0].mxu0
        %v2238 = vadd.f32 %v1981, %v2237
        %v2239 = vpop.f32.mrb[0].mxu0
        %v2240 = vadd.f32 %v1983, %v2239
        %2241 = vmatprep.mubr.f32.mxu0 %v352
        %2242 = vmatmul.mubr.f32.gmra.mrb[0].mxu0 %v351
        %v2243 = vpop.f32.mrb[0].mxu0
        %v2244 = vadd.f32 %v1987, %v2243
        %v2245 = vpop.f32.mrb[0].mxu0
        %v2246 = vadd.f32 %v1989, %v2245
        %2247 = vmatprep.mubr.f32.mxu0 %v358
        %2248 = vmatmul.mubr.f32.gmra.mrb[0].mxu0 %v357
        %v2249 = vpop.f32.mrb[0].mxu0
        %v2250 = vadd.f32 %v1993, %v2249
        %v2251 = vpop.f32.mrb[0].mxu0
        %v2252 = vadd.f32 %v1995, %v2251
        %2253 = vmatprep.mubr.f32.mxu0 %v364
        %2254 = vmatmul.mubr.f32.gmra.mrb[0].mxu0 %v363
        %v2255 = vpop.f32.mrb[0].mxu0
        %v2256 = vadd.f32 %v1999, %v2255
        %v2257 = vpop.f32.mrb[0].mxu0
        %v2258 = vadd.f32 %v2001, %v2257
        %2259 = vmatprep.mubr.f32.mxu0 %v370
        %2260 = vmatmul.mubr.f32.gmra.mrb[0].mxu0 %v369
        %v2261 = vpop.f32.mrb[0].mxu0
        %v2262 = vadd.f32 %v2005, %v2261
        %v2263 = vpop.f32.mrb[0].mxu0
        %v2264 = vadd.f32 %v2007, %v2263
        %2265 = vmatprep.mubr.f32.mxu0 %v376
        %2266 = vmatmul.mubr.f32.gmra.mrb[0].mxu0 %v375
        %v2267 = vpop.f32.mrb[0].mxu0
        %v2268 = vadd.f32 %v2011, %v2267
        %v2269 = vpop.f32.mrb[0].mxu0
        %v2270 = vadd.f32 %v2013, %v2269
        %2271 = vmatprep.mubr.f32.mxu0 %v382
        %2272 = vmatmul.mubr.f32.gmra.mrb[0].mxu0 %v381
        %v2273 = vpop.f32.mrb[0].mxu0
        %v2274 = vadd.f32 %v2017, %v2273
        %v2275 = vpop.f32.mrb[0].mxu0
        %v2276 = vadd.f32 %v2019, %v2275
        %2277 = vmatprep.mubr.f32.mxu0 %v388
        %2278 = vmatmul.mubr.f32.gmra.mrb[0].mxu0 %v387
        %v2279 = vpop.f32.mrb[0].mxu0
        %v2280 = vadd.f32 %v2023, %v2279
        %v2281 = vpop.f32.mrb[0].mxu0
        %v2282 = vadd.f32 %v2025, %v2281
        %2283 = vmatprep.mubr.f32.mxu0 %v394
        %2284 = vmatmul.mubr.f32.gmra.mrb[0].mxu0 %v393
        %v2285 = vpop.f32.mrb[0].mxu0
        %v2286 = vadd.f32 %v2029, %v2285
        %v2287 = vpop.f32.mrb[0].mxu0
        %v2288 = vadd.f32 %v2031, %v2287
        %2289 = vmatprep.mubr.f32.mxu0 %v400
        %2290 = vmatmul.mubr.f32.gmra.mrb[0].mxu0 %v399
        %v2291 = vpop.f32.mrb[0].mxu0
        %v2292 = vadd.f32 %v2035, %v2291
        %v2293 = vpop.f32.mrb[0].mxu0
        %v2294 = vadd.f32 %v2037, %v2293
        %2295 = vmatprep.mubr.f32.mxu0 %v406
        %2296 = vmatmul.mubr.f32.gmra.mrb[0].mxu0 %v405
        %v2297 = vpop.f32.mrb[0].mxu0
        %v2298 = vadd.f32 %v2041, %v2297
        %v2299 = vpop.f32.mrb[0].mxu0
        %v2300 = vadd.f32 %v2043, %v2299
        %2301 = vmatprep.mubr.f32.mxu0 %v412
        %2302 = vmatmul.mubr.f32.gmra.mrb[0].mxu0 %v411
        %v2303 = vpop.f32.mrb[0].mxu0
        %v2304 = vadd.f32 %v2047, %v2303
        %v2305 = vpop.f32.mrb[0].mxu0
        %v2306 = vadd.f32 %v2049, %v2305
        %2307 = vmatprep.mubr.f32.mxu0 %v418
        %2308 = vmatmul.mubr.f32.gmra.mrb[0].mxu0 %v417
        %v2309 = vpop.f32.mrb[0].mxu0
        %v2310 = vadd.f32 %v2053, %v2309
        %v2311 = vpop.f32.mrb[0].mxu0
        %v2312 = vadd.f32 %v2055, %v2311
        %2313 = vmatprep.mubr.f32.mxu0 %v424
        %2314 = vmatmul.mubr.f32.gmra.mrb[0].mxu0 %v423
        %v2315 = vpop.f32.mrb[0].mxu0
        %v2316 = vadd.f32 %v2059, %v2315
        %v2317 = vpop.f32.mrb[0].mxu0
        %v2318 = vadd.f32 %v2061, %v2317
        %2319 = vmatprep.mubr.f32.mxu0 %v430
        %2320 = vmatmul.mubr.f32.gmra.mrb[0].mxu0 %v429
        %v2321 = vpop.f32.mrb[0].mxu0
        %v2322 = vadd.f32 %v2065, %v2321
        %v2323 = vpop.f32.mrb[0].mxu0
        %v2324 = vadd.f32 %v2067, %v2323
        %2325 = vmatprep.mubr.f32.mxu0 %v436
        %2326 = vmatmul.mubr.f32.gmra.mrb[0].mxu0 %v435
        %v2327 = vpop.f32.mrb[0].mxu0
        %v2328 = vadd.f32 %v2071, %v2327
        %v2329 = vpop.f32.mrb[0].mxu0
        %v2330 = vadd.f32 %v2073, %v2329
        %2331 = vmatprep.mubr.f32.mxu0 %v442
        %2332 = vmatmul.mubr.f32.gmra.mrb[0].mxu0 %v441
        %v2333 = vpop.f32.mrb[0].mxu0
        %v2334 = vadd.f32 %v2077, %v2333
        %v2335 = vpop.f32.mrb[0].mxu0
        %v2336 = vadd.f32 %v2079, %v2335
        %2337 = vmatprep.mubr.f32.mxu0 %v448
        %2338 = vmatmul.mubr.f32.gmra.mrb[0].mxu0 %v447
        %v2339 = vpop.f32.mrb[0].mxu0
        %v2340 = vadd.f32 %v2083, %v2339
        %v2341 = vpop.f32.mrb[0].mxu0
        %v2342 = vadd.f32 %v2085, %v2341
        %2343 = vdwg.mxu0
        %2344 = vmatprep.subr.mxu0 %v648
        %2345 = vmatpush1.xpose.msra.mxu0 %v647
        %2346 = vmatprep.subr.mxu0 %v654
        %2347 = vmatpush1.xpose.msra.mxu0 %v653
        %2348 = vmatprep.subr.mxu0 %v660
        %2349 = vmatpush1.xpose.msra.mxu0 %v659
        %2350 = vmatprep.subr.mxu0 %v666
        %2351 = vmatpush1.xpose.msra.mxu0 %v665
        %2352 = vmatprep.subr.mxu0 %v672
        %2353 = vmatpush1.xpose.msra.mxu0 %v671
        %2354 = vmatprep.subr.mxu0 %v678
        %2355 = vmatpush1.xpose.msra.mxu0 %v677
        %2356 = vmatprep.subr.mxu0 %v684
        %2357 = vmatpush1.xpose.msra.mxu0 %v683
        %2358 = vmatprep.subr.mxu0 %v690
        %2359 = vmatpush1.xpose.msra.mxu0 %v689
        %2360 = vmatprep.subr.mxu0 %v696
        %2361 = vmatpush1.xpose.msra.mxu0 %v695
        %2362 = vmatprep.subr.mxu0 %v702
        %2363 = vmatpush1.xpose.msra.mxu0 %v701
        %2364 = vmatprep.subr.mxu0 %v708
        %2365 = vmatpush1.xpose.msra.mxu0 %v707
        %2366 = vmatprep.subr.mxu0 %v714
        %2367 = vmatpush1.xpose.msra.mxu0 %v713
        %2368 = vmatprep.subr.mxu0 %v720
        %2369 = vmatpush1.xpose.msra.mxu0 %v719
        %2370 = vmatprep.subr.mxu0 %v726
        %2371 = vmatpush1.xpose.msra.mxu0 %v725
        %2372 = vmatprep.subr.mxu0 %v732
        %2373 = vmatpush1.xpose.msra.mxu0 %v731
        %2374 = vmatprep.subr.mxu0 %v738
        %2375 = vmatpush1.xpose.msra.mxu0 %v737
        %2376 = vmatprep.subr.mxu0 %v744
        %2377 = vmatpush1.xpose.msra.mxu0 %v743
        %2378 = vmatprep.subr.mxu0 %v750
        %2379 = vmatpush1.xpose.msra.mxu0 %v749
        %2380 = vmatprep.subr.mxu0 %v756
        %2381 = vmatpush1.xpose.msra.mxu0 %v755
        %2382 = vmatprep.subr.mxu0 %v762
        %2383 = vmatpush1.xpose.msra.mxu0 %v761
        %2384 = vmatprep.subr.mxu0 %v768
        %2385 = vmatpush1.xpose.msra.mxu0 %v767
        %2386 = vmatprep.subr.mxu0 %v774
        %2387 = vmatpush1.xpose.msra.mxu0 %v773
        %2388 = vmatprep.subr.mxu0 %v780
        %2389 = vmatpush1.xpose.msra.mxu0 %v779
        %2390 = vmatprep.subr.mxu0 %v786
        %2391 = vmatpush1.xpose.msra.mxu0 %v785
        %2392 = vmatprep.subr.mxu0 %v792
        %2393 = vmatpush1.xpose.msra.mxu0 %v791
        %2394 = vmatprep.subr.mxu0 %v798
        %2395 = vmatpush1.xpose.msra.mxu0 %v797
        %2396 = vmatprep.subr.mxu0 %v804
        %2397 = vmatpush1.xpose.msra.mxu0 %v803
        %2398 = vmatprep.subr.mxu0 %v810
        %2399 = vmatpush1.xpose.msra.mxu0 %v809
        %2400 = vmatprep.subr.mxu0 %v816
        %2401 = vmatpush1.xpose.msra.mxu0 %v815
        %2402 = vmatprep.subr.mxu0 %v822
        %2403 = vmatpush1.xpose.msra.mxu0 %v821
        %2404 = vmatprep.subr.mxu0 %v828
        %2405 = vmatpush1.xpose.msra.mxu0 %v827
        %2406 = vmatprep.subr.mxu0 %v834
        %2407 = vmatpush1.xpose.msra.mxu0 %v833
        %2408 = vmatprep.mubr.f32.mxu0 %v264
        %2409 = vmatmul.mubr.f32.gmra.mrb[0].mxu0 %v263
        %v2410 = vpop.f32.mrb[0].mxu0
        %v2411 = vadd.f32 %v2154, %v2410
        %v2412 = vpop.f32.mrb[0].mxu0
        %v2413 = vadd.f32 %v2156, %v2412
        %2414 = vmatprep.mubr.f32.mxu0 %v270
        %2415 = vmatmul.mubr.f32.gmra.mrb[0].mxu0 %v269
        %v2416 = vpop.f32.mrb[0].mxu0
        %v2417 = vadd.f32 %v2160, %v2416
        %v2418 = vpop.f32.mrb[0].mxu0
        %v2419 = vadd.f32 %v2162, %v2418
        %2420 = vmatprep.mubr.f32.mxu0 %v276
        %2421 = vmatmul.mubr.f32.gmra.mrb[0].mxu0 %v275
        %v2422 = vpop.f32.mrb[0].mxu0
        %v2423 = vadd.f32 %v2166, %v2422
        %v2424 = vpop.f32.mrb[0].mxu0
        %v2425 = vadd.f32 %v2168, %v2424
        %2426 = vmatprep.mubr.f32.mxu0 %v282
        %2427 = vmatmul.mubr.f32.gmra.mrb[0].mxu0 %v281
        %v2428 = vpop.f32.mrb[0].mxu0
        %v2429 = vadd.f32 %v2172, %v2428
        %v2430 = vpop.f32.mrb[0].mxu0
        %v2431 = vadd.f32 %v2174, %v2430
        %2432 = vmatprep.mubr.f32.mxu0 %v288
        %2433 = vmatmul.mubr.f32.gmra.mrb[0].mxu0 %v287
        %v2434 = vpop.f32.mrb[0].mxu0
        %v2435 = vadd.f32 %v2178, %v2434
        %v2436 = vpop.f32.mrb[0].mxu0
        %v2437 = vadd.f32 %v2180, %v2436
        %2438 = vmatprep.mubr.f32.mxu0 %v294
        %2439 = vmatmul.mubr.f32.gmra.mrb[0].mxu0 %v293
        %v2440 = vpop.f32.mrb[0].mxu0
        %v2441 = vadd.f32 %v2184, %v2440
        %v2442 = vpop.f32.mrb[0].mxu0
        %v2443 = vadd.f32 %v2186, %v2442
        %2444 = vmatprep.mubr.f32.mxu0 %v300
        %2445 = vmatmul.mubr.f32.gmra.mrb[0].mxu0 %v299
        %v2446 = vpop.f32.mrb[0].mxu0
        %v2447 = vadd.f32 %v2190, %v2446
        %v2448 = vpop.f32.mrb[0].mxu0
        %v2449 = vadd.f32 %v2192, %v2448
        %2450 = vmatprep.mubr.f32.mxu0 %v306
        %2451 = vmatmul.mubr.f32.gmra.mrb[0].mxu0 %v305
        %v2452 = vpop.f32.mrb[0].mxu0
        %v2453 = vadd.f32 %v2196, %v2452
        %v2454 = vpop.f32.mrb[0].mxu0
        %v2455 = vadd.f32 %v2198, %v2454
        %2456 = vmatprep.mubr.f32.mxu0 %v312
        %2457 = vmatmul.mubr.f32.gmra.mrb[0].mxu0 %v311
        %v2458 = vpop.f32.mrb[0].mxu0
        %v2459 = vadd.f32 %v2202, %v2458
        %v2460 = vpop.f32.mrb[0].mxu0
        %v2461 = vadd.f32 %v2204, %v2460
        %2462 = vmatprep.mubr.f32.mxu0 %v318
        %2463 = vmatmul.mubr.f32.gmra.mrb[0].mxu0 %v317
        %v2464 = vpop.f32.mrb[0].mxu0
        %v2465 = vadd.f32 %v2208, %v2464
        %v2466 = vpop.f32.mrb[0].mxu0
        %v2467 = vadd.f32 %v2210, %v2466
        %2468 = vmatprep.mubr.f32.mxu0 %v324
        %2469 = vmatmul.mubr.f32.gmra.mrb[0].mxu0 %v323
        %v2470 = vpop.f32.mrb[0].mxu0
        %v2471 = vadd.f32 %v2214, %v2470
        %v2472 = vpop.f32.mrb[0].mxu0
        %v2473 = vadd.f32 %v2216, %v2472
        %2474 = vmatprep.mubr.f32.mxu0 %v330
        %2475 = vmatmul.mubr.f32.gmra.mrb[0].mxu0 %v329
        %v2476 = vpop.f32.mrb[0].mxu0
        %v2477 = vadd.f32 %v2220, %v2476
        %v2478 = vpop.f32.mrb[0].mxu0
        %v2479 = vadd.f32 %v2222, %v2478
        %2480 = vmatprep.mubr.f32.mxu0 %v336
        %2481 = vmatmul.mubr.f32.gmra.mrb[0].mxu0 %v335
        %v2482 = vpop.f32.mrb[0].mxu0
        %v2483 = vadd.f32 %v2226, %v2482
        %v2484 = vpop.f32.mrb[0].mxu0
        %v2485 = vadd.f32 %v2228, %v2484
        %2486 = vmatprep.mubr.f32.mxu0 %v342
        %2487 = vmatmul.mubr.f32.gmra.mrb[0].mxu0 %v341
        %v2488 = vpop.f32.mrb[0].mxu0
        %v2489 = vadd.f32 %v2232, %v2488
        %v2490 = vpop.f32.mrb[0].mxu0
        %v2491 = vadd.f32 %v2234, %v2490
        %2492 = vmatprep.mubr.f32.mxu0 %v348
        %2493 = vmatmul.mubr.f32.gmra.mrb[0].mxu0 %v347
        %v2494 = vpop.f32.mrb[0].mxu0
        %v2495 = vadd.f32 %v2238, %v2494
        %v2496 = vpop.f32.mrb[0].mxu0
        %v2497 = vadd.f32 %v2240, %v2496
        %2498 = vmatprep.mubr.f32.mxu0 %v354
        %2499 = vmatmul.mubr.f32.gmra.mrb[0].mxu0 %v353
        %v2500 = vpop.f32.mrb[0].mxu0
        %v2501 = vadd.f32 %v2244, %v2500
        %v2502 = vpop.f32.mrb[0].mxu0
        %v2503 = vadd.f32 %v2246, %v2502
        %2504 = vmatprep.mubr.f32.mxu0 %v360
        %2505 = vmatmul.mubr.f32.gmra.mrb[0].mxu0 %v359
        %v2506 = vpop.f32.mrb[0].mxu0
        %v2507 = vadd.f32 %v2250, %v2506
        %v2508 = vpop.f32.mrb[0].mxu0
        %v2509 = vadd.f32 %v2252, %v2508
        %2510 = vmatprep.mubr.f32.mxu0 %v366
        %2511 = vmatmul.mubr.f32.gmra.mrb[0].mxu0 %v365
        %v2512 = vpop.f32.mrb[0].mxu0
        %v2513 = vadd.f32 %v2256, %v2512
        %v2514 = vpop.f32.mrb[0].mxu0
        %v2515 = vadd.f32 %v2258, %v2514
        %2516 = vmatprep.mubr.f32.mxu0 %v372
        %2517 = vmatmul.mubr.f32.gmra.mrb[0].mxu0 %v371
        %v2518 = vpop.f32.mrb[0].mxu0
        %v2519 = vadd.f32 %v2262, %v2518
        %v2520 = vpop.f32.mrb[0].mxu0
        %v2521 = vadd.f32 %v2264, %v2520
        %2522 = vmatprep.mubr.f32.mxu0 %v378
        %2523 = vmatmul.mubr.f32.gmra.mrb[0].mxu0 %v377
        %v2524 = vpop.f32.mrb[0].mxu0
        %v2525 = vadd.f32 %v2268, %v2524
        %v2526 = vpop.f32.mrb[0].mxu0
        %v2527 = vadd.f32 %v2270, %v2526
        %2528 = vmatprep.mubr.f32.mxu0 %v384
        %2529 = vmatmul.mubr.f32.gmra.mrb[0].mxu0 %v383
        %v2530 = vpop.f32.mrb[0].mxu0
        %v2531 = vadd.f32 %v2274, %v2530
        %v2532 = vpop.f32.mrb[0].mxu0
        %v2533 = vadd.f32 %v2276, %v2532
        %2534 = vmatprep.mubr.f32.mxu0 %v390
        %2535 = vmatmul.mubr.f32.gmra.mrb[0].mxu0 %v389
        %v2536 = vpop.f32.mrb[0].mxu0
        %v2537 = vadd.f32 %v2280, %v2536
        %v2538 = vpop.f32.mrb[0].mxu0
        %v2539 = vadd.f32 %v2282, %v2538
        %2540 = vmatprep.mubr.f32.mxu0 %v396
        %2541 = vmatmul.mubr.f32.gmra.mrb[0].mxu0 %v395
        %v2542 = vpop.f32.mrb[0].mxu0
        %v2543 = vadd.f32 %v2286, %v2542
        %v2544 = vpop.f32.mrb[0].mxu0
        %v2545 = vadd.f32 %v2288, %v2544
        %2546 = vmatprep.mubr.f32.mxu0 %v402
        %2547 = vmatmul.mubr.f32.gmra.mrb[0].mxu0 %v401
        %v2548 = vpop.f32.mrb[0].mxu0
        %v2549 = vadd.f32 %v2292, %v2548
        %v2550 = vpop.f32.mrb[0].mxu0
        %v2551 = vadd.f32 %v2294, %v2550
        %2552 = vmatprep.mubr.f32.mxu0 %v408
        %2553 = vmatmul.mubr.f32.gmra.mrb[0].mxu0 %v407
        %v2554 = vpop.f32.mrb[0].mxu0
        %v2555 = vadd.f32 %v2298, %v2554
        %v2556 = vpop.f32.mrb[0].mxu0
        %v2557 = vadd.f32 %v2300, %v2556
        %2558 = vmatprep.mubr.f32.mxu0 %v414
        %2559 = vmatmul.mubr.f32.gmra.mrb[0].mxu0 %v413
        %v2560 = vpop.f32.mrb[0].mxu0
        %v2561 = vadd.f32 %v2304, %v2560
        %v2562 = vpop.f32.mrb[0].mxu0
        %v2563 = vadd.f32 %v2306, %v2562
        %2564 = vmatprep.mubr.f32.mxu0 %v420
        %2565 = vmatmul.mubr.f32.gmra.mrb[0].mxu0 %v419
        %v2566 = vpop.f32.mrb[0].mxu0
        %v2567 = vadd.f32 %v2310, %v2566
        %v2568 = vpop.f32.mrb[0].mxu0
        %v2569 = vadd.f32 %v2312, %v2568
        %2570 = vmatprep.mubr.f32.mxu0 %v426
        %2571 = vmatmul.mubr.f32.gmra.mrb[0].mxu0 %v425
        %v2572 = vpop.f32.mrb[0].mxu0
        %v2573 = vadd.f32 %v2316, %v2572
        %v2574 = vpop.f32.mrb[0].mxu0
        %v2575 = vadd.f32 %v2318, %v2574
        %2576 = vmatprep.mubr.f32.mxu0 %v432
        %2577 = vmatmul.mubr.f32.gmra.mrb[0].mxu0 %v431
        %v2578 = vpop.f32.mrb[0].mxu0
        %v2579 = vadd.f32 %v2322, %v2578
        %v2580 = vpop.f32.mrb[0].mxu0
        %v2581 = vadd.f32 %v2324, %v2580
        %2582 = vmatprep.mubr.f32.mxu0 %v438
        %2583 = vmatmul.mubr.f32.gmra.mrb[0].mxu0 %v437
        %v2584 = vpop.f32.mrb[0].mxu0
        %v2585 = vadd.f32 %v2328, %v2584
        %v2586 = vpop.f32.mrb[0].mxu0
        %v2587 = vadd.f32 %v2330, %v2586
        %2588 = vmatprep.mubr.f32.mxu0 %v444
        %2589 = vmatmul.mubr.f32.gmra.mrb[0].mxu0 %v443
        %v2590 = vpop.f32.mrb[0].mxu0
        %v2591 = vadd.f32 %v2334, %v2590
        %v2592 = vpop.f32.mrb[0].mxu0
        %v2593 = vadd.f32 %v2336, %v2592
        %2594 = vmatprep.mubr.f32.mxu0 %v450
        %2595 = vmatmul.mubr.f32.gmra.mrb[0].mxu0 %v449
        %v2596 = vpop.f32.mrb[0].mxu0
        %v2597 = vadd.f32 %v2340, %v2596
        %v2598 = vpop.f32.mrb[0].mxu0
        %v2599 = vadd.f32 %v2342, %v2598
        %2600 = vdwg.mxu0
        %2601 = vmatprep.subr.mxu0 %v836
        %2602 = vmatpush1.xpose.msra.mxu0 %v835
        %2603 = vmatprep.subr.mxu0 %v842
        %2604 = vmatpush1.xpose.msra.mxu0 %v841
        %2605 = vmatprep.subr.mxu0 %v848
        %2606 = vmatpush1.xpose.msra.mxu0 %v847
        %2607 = vmatprep.subr.mxu0 %v854
        %2608 = vmatpush1.xpose.msra.mxu0 %v853
        %2609 = vmatprep.subr.mxu0 %v860
        %2610 = vmatpush1.xpose.msra.mxu0 %v859
        %2611 = vmatprep.subr.mxu0 %v866
        %2612 = vmatpush1.xpose.msra.mxu0 %v865
        %2613 = vmatprep.subr.mxu0 %v872
        %2614 = vmatpush1.xpose.msra.mxu0 %v871
        %2615 = vmatprep.subr.mxu0 %v878
        %2616 = vmatpush1.xpose.msra.mxu0 %v877
        %2617 = vmatprep.subr.mxu0 %v884
        %2618 = vmatpush1.xpose.msra.mxu0 %v883
        %2619 = vmatprep.subr.mxu0 %v890
        %2620 = vmatpush1.xpose.msra.mxu0 %v889
        %2621 = vmatprep.subr.mxu0 %v896
        %2622 = vmatpush1.xpose.msra.mxu0 %v895
        %2623 = vmatprep.subr.mxu0 %v902
        %2624 = vmatpush1.xpose.msra.mxu0 %v901
        %2625 = vmatprep.subr.mxu0 %v908
        %2626 = vmatpush1.xpose.msra.mxu0 %v907
        %2627 = vmatprep.subr.mxu0 %v914
        %2628 = vmatpush1.xpose.msra.mxu0 %v913
        %2629 = vmatprep.subr.mxu0 %v920
        %2630 = vmatpush1.xpose.msra.mxu0 %v919
        %2631 = vmatprep.subr.mxu0 %v926
        %2632 = vmatpush1.xpose.msra.mxu0 %v925
        %2633 = vmatprep.subr.mxu0 %v932
        %2634 = vmatpush1.xpose.msra.mxu0 %v931
        %2635 = vmatprep.subr.mxu0 %v938
        %2636 = vmatpush1.xpose.msra.mxu0 %v937
        %2637 = vmatprep.subr.mxu0 %v944
        %2638 = vmatpush1.xpose.msra.mxu0 %v943
        %2639 = vmatprep.subr.mxu0 %v950
        %2640 = vmatpush1.xpose.msra.mxu0 %v949
        %2641 = vmatprep.subr.mxu0 %v956
        %2642 = vmatpush1.xpose.msra.mxu0 %v955
        %2643 = vmatprep.subr.mxu0 %v962
        %2644 = vmatpush1.xpose.msra.mxu0 %v961
        %2645 = vmatprep.subr.mxu0 %v968
        %2646 = vmatpush1.xpose.msra.mxu0 %v967
        %2647 = vmatprep.subr.mxu0 %v974
        %2648 = vmatpush1.xpose.msra.mxu0 %v973
        %2649 = vmatprep.subr.mxu0 %v980
        %2650 = vmatpush1.xpose.msra.mxu0 %v979
        %2651 = vmatprep.subr.mxu0 %v986
        %2652 = vmatpush1.xpose.msra.mxu0 %v985
        %2653 = vmatprep.subr.mxu0 %v992
        %2654 = vmatpush1.xpose.msra.mxu0 %v991
        %2655 = vmatprep.subr.mxu0 %v998
        %2656 = vmatpush1.xpose.msra.mxu0 %v997
        %2657 = vmatprep.subr.mxu0 %v1004
        %2658 = vmatpush1.xpose.msra.mxu0 %v1003
        %2659 = vmatprep.subr.mxu0 %v1010
        %2660 = vmatpush1.xpose.msra.mxu0 %v1009
        %2661 = vmatprep.subr.mxu0 %v1016
        %2662 = vmatpush1.xpose.msra.mxu0 %v1015
        %2663 = vmatprep.subr.mxu0 %v1022
        %2664 = vmatpush1.xpose.msra.mxu0 %v1021
        %2665 = vmatprep.mubr.f32.mxu0 %v260
        %2666 = vmatmul.mubr.f32.gmra.mrb[0].mxu0 %v259
        %v2667 = vpop.f32.mrb[0].mxu0
        %v2668 = vadd.f32 %v1048, %v2667
        %v2669 = vpop.f32.mrb[0].mxu0
        %v2670 = vadd.f32 %v1052, %v2669
        %2671 = vmatprep.mubr.f32.mxu0 %v266
        %2672 = vmatmul.mubr.f32.gmra.mrb[0].mxu0 %v265
        %v2673 = vpop.f32.mrb[0].mxu0
        %v2674 = vadd.f32 %v1048, %v2673
        %v2675 = vpop.f32.mrb[0].mxu0
        %v2676 = vadd.f32 %v1052, %v2675
        %2677 = vmatprep.mubr.f32.mxu0 %v272
        %2678 = vmatmul.mubr.f32.gmra.mrb[0].mxu0 %v271
        %v2679 = vpop.f32.mrb[0].mxu0
        %v2680 = vadd.f32 %v1048, %v2679
        %v2681 = vpop.f32.mrb[0].mxu0
        %v2682 = vadd.f32 %v1052, %v2681
        %2683 = vmatprep.mubr.f32.mxu0 %v278
        %2684 = vmatmul.mubr.f32.gmra.mrb[0].mxu0 %v277
        %v2685 = vpop.f32.mrb[0].mxu0
        %v2686 = vadd.f32 %v1048, %v2685
        %v2687 = vpop.f32.mrb[0].mxu0
        %v2688 = vadd.f32 %v1052, %v2687
        %2689 = vmatprep.mubr.f32.mxu0 %v284
        %2690 = vmatmul.mubr.f32.gmra.mrb[0].mxu0 %v283
        %v2691 = vpop.f32.mrb[0].mxu0
        %v2692 = vadd.f32 %v1048, %v2691
        %v2693 = vpop.f32.mrb[0].mxu0
        %v2694 = vadd.f32 %v1052, %v2693
        %2695 = vmatprep.mubr.f32.mxu0 %v290
        %2696 = vmatmul.mubr.f32.gmra.mrb[0].mxu0 %v289
        %v2697 = vpop.f32.mrb[0].mxu0
        %v2698 = vadd.f32 %v1048, %v2697
        %v2699 = vpop.f32.mrb[0].mxu0
        %v2700 = vadd.f32 %v1052, %v2699
        %2701 = vmatprep.mubr.f32.mxu0 %v296
        %2702 = vmatmul.mubr.f32.gmra.mrb[0].mxu0 %v295
        %v2703 = vpop.f32.mrb[0].mxu0
        %v2704 = vadd.f32 %v1048, %v2703
        %v2705 = vpop.f32.mrb[0].mxu0
        %v2706 = vadd.f32 %v1052, %v2705
        %2707 = vmatprep.mubr.f32.mxu0 %v302
        %2708 = vmatmul.mubr.f32.gmra.mrb[0].mxu0 %v301
        %v2709 = vpop.f32.mrb[0].mxu0
        %v2710 = vadd.f32 %v1048, %v2709
        %v2711 = vpop.f32.mrb[0].mxu0
        %v2712 = vadd.f32 %v1052, %v2711
        %2713 = vmatprep.mubr.f32.mxu0 %v308
        %2714 = vmatmul.mubr.f32.gmra.mrb[0].mxu0 %v307
        %v2715 = vpop.f32.mrb[0].mxu0
        %v2716 = vadd.f32 %v1048, %v2715
        %v2717 = vpop.f32.mrb[0].mxu0
        %v2718 = vadd.f32 %v1052, %v2717
        %2719 = vmatprep.mubr.f32.mxu0 %v314
        %2720 = vmatmul.mubr.f32.gmra.mrb[0].mxu0 %v313
        %v2721 = vpop.f32.mrb[0].mxu0
        %v2722 = vadd.f32 %v1048, %v2721
        %v2723 = vpop.f32.mrb[0].mxu0
        %v2724 = vadd.f32 %v1052, %v2723
        %2725 = vmatprep.mubr.f32.mxu0 %v320
        %2726 = vmatmul.mubr.f32.gmra.mrb[0].mxu0 %v319
        %v2727 = vpop.f32.mrb[0].mxu0
        %v2728 = vadd.f32 %v1048, %v2727
        %v2729 = vpop.f32.mrb[0].mxu0
        %v2730 = vadd.f32 %v1052, %v2729
        %2731 = vmatprep.mubr.f32.mxu0 %v326
        %2732 = vmatmul.mubr.f32.gmra.mrb[0].mxu0 %v325
        %v2733 = vpop.f32.mrb[0].mxu0
        %v2734 = vadd.f32 %v1048, %v2733
        %v2735 = vpop.f32.mrb[0].mxu0
        %v2736 = vadd.f32 %v1052, %v2735
        %2737 = vmatprep.mubr.f32.mxu0 %v332
        %2738 = vmatmul.mubr.f32.gmra.mrb[0].mxu0 %v331
        %v2739 = vpop.f32.mrb[0].mxu0
        %v2740 = vadd.f32 %v1048, %v2739
        %v2741 = vpop.f32.mrb[0].mxu0
        %v2742 = vadd.f32 %v1052, %v2741
        %2743 = vmatprep.mubr.f32.mxu0 %v338
        %2744 = vmatmul.mubr.f32.gmra.mrb[0].mxu0 %v337
        %v2745 = vpop.f32.mrb[0].mxu0
        %v2746 = vadd.f32 %v1048, %v2745
        %v2747 = vpop.f32.mrb[0].mxu0
        %v2748 = vadd.f32 %v1052, %v2747
        %2749 = vmatprep.mubr.f32.mxu0 %v344
        %2750 = vmatmul.mubr.f32.gmra.mrb[0].mxu0 %v343
        %v2751 = vpop.f32.mrb[0].mxu0
        %v2752 = vadd.f32 %v1048, %v2751
        %v2753 = vpop.f32.mrb[0].mxu0
        %v2754 = vadd.f32 %v1052, %v2753
        %2755 = vmatprep.mubr.f32.mxu0 %v350
        %2756 = vmatmul.mubr.f32.gmra.mrb[0].mxu0 %v349
        %v2757 = vpop.f32.mrb[0].mxu0
        %v2758 = vadd.f32 %v1048, %v2757
        %v2759 = vpop.f32.mrb[0].mxu0
        %v2760 = vadd.f32 %v1052, %v2759
        %2761 = vmatprep.mubr.f32.mxu0 %v356
        %2762 = vmatmul.mubr.f32.gmra.mrb[0].mxu0 %v355
        %v2763 = vpop.f32.mrb[0].mxu0
        %v2764 = vadd.f32 %v1048, %v2763
        %v2765 = vpop.f32.mrb[0].mxu0
        %v2766 = vadd.f32 %v1052, %v2765
        %2767 = vmatprep.mubr.f32.mxu0 %v362
        %2768 = vmatmul.mubr.f32.gmra.mrb[0].mxu0 %v361
        %v2769 = vpop.f32.mrb[0].mxu0
        %v2770 = vadd.f32 %v1048, %v2769
        %v2771 = vpop.f32.mrb[0].mxu0
        %v2772 = vadd.f32 %v1052, %v2771
        %2773 = vmatprep.mubr.f32.mxu0 %v368
        %2774 = vmatmul.mubr.f32.gmra.mrb[0].mxu0 %v367
        %v2775 = vpop.f32.mrb[0].mxu0
        %v2776 = vadd.f32 %v1048, %v2775
        %v2777 = vpop.f32.mrb[0].mxu0
        %v2778 = vadd.f32 %v1052, %v2777
        %2779 = vmatprep.mubr.f32.mxu0 %v374
        %2780 = vmatmul.mubr.f32.gmra.mrb[0].mxu0 %v373
        %v2781 = vpop.f32.mrb[0].mxu0
        %v2782 = vadd.f32 %v1048, %v2781
        %v2783 = vpop.f32.mrb[0].mxu0
        %v2784 = vadd.f32 %v1052, %v2783
        %2785 = vmatprep.mubr.f32.mxu0 %v380
        %2786 = vmatmul.mubr.f32.gmra.mrb[0].mxu0 %v379
        %v2787 = vpop.f32.mrb[0].mxu0
        %v2788 = vadd.f32 %v1048, %v2787
        %v2789 = vpop.f32.mrb[0].mxu0
        %v2790 = vadd.f32 %v1052, %v2789
        %2791 = vmatprep.mubr.f32.mxu0 %v386
        %2792 = vmatmul.mubr.f32.gmra.mrb[0].mxu0 %v385
        %v2793 = vpop.f32.mrb[0].mxu0
        %v2794 = vadd.f32 %v1048, %v2793
        %v2795 = vpop.f32.mrb[0].mxu0
        %v2796 = vadd.f32 %v1052, %v2795
        %2797 = vmatprep.mubr.f32.mxu0 %v392
        %2798 = vmatmul.mubr.f32.gmra.mrb[0].mxu0 %v391
        %v2799 = vpop.f32.mrb[0].mxu0
        %v2800 = vadd.f32 %v1048, %v2799
        %v2801 = vpop.f32.mrb[0].mxu0
        %v2802 = vadd.f32 %v1052, %v2801
        %2803 = vmatprep.mubr.f32.mxu0 %v398
        %2804 = vmatmul.mubr.f32.gmra.mrb[0].mxu0 %v397
        %v2805 = vpop.f32.mrb[0].mxu0
        %v2806 = vadd.f32 %v1048, %v2805
        %v2807 = vpop.f32.mrb[0].mxu0
        %v2808 = vadd.f32 %v1052, %v2807
        %2809 = vmatprep.mubr.f32.mxu0 %v404
        %2810 = vmatmul.mubr.f32.gmra.mrb[0].mxu0 %v403
        %v2811 = vpop.f32.mrb[0].mxu0
        %v2812 = vadd.f32 %v1048, %v2811
        %v2813 = vpop.f32.mrb[0].mxu0
        %v2814 = vadd.f32 %v1052, %v2813
        %2815 = vmatprep.mubr.f32.mxu0 %v410
        %2816 = vmatmul.mubr.f32.gmra.mrb[0].mxu0 %v409
        %v2817 = vpop.f32.mrb[0].mxu0
        %v2818 = vadd.f32 %v1048, %v2817
        %v2819 = vpop.f32.mrb[0].mxu0
        %v2820 = vadd.f32 %v1052, %v2819
        %2821 = vmatprep.mubr.f32.mxu0 %v416
        %2822 = vmatmul.mubr.f32.gmra.mrb[0].mxu0 %v415
        %v2823 = vpop.f32.mrb[0].mxu0
        %v2824 = vadd.f32 %v1048, %v2823
        %v2825 = vpop.f32.mrb[0].mxu0
        %v2826 = vadd.f32 %v1052, %v2825
        %2827 = vmatprep.mubr.f32.mxu0 %v422
        %2828 = vmatmul.mubr.f32.gmra.mrb[0].mxu0 %v421
        %v2829 = vpop.f32.mrb[0].mxu0
        %v2830 = vadd.f32 %v1048, %v2829
        %v2831 = vpop.f32.mrb[0].mxu0
        %v2832 = vadd.f32 %v1052, %v2831
        %2833 = vmatprep.mubr.f32.mxu0 %v428
        %2834 = vmatmul.mubr.f32.gmra.mrb[0].mxu0 %v427
        %v2835 = vpop.f32.mrb[0].mxu0
        %v2836 = vadd.f32 %v1048, %v2835
        %v2837 = vpop.f32.mrb[0].mxu0
        %v2838 = vadd.f32 %v1052, %v2837
        %2839 = vmatprep.mubr.f32.mxu0 %v434
        %2840 = vmatmul.mubr.f32.gmra.mrb[0].mxu0 %v433
        %v2841 = vpop.f32.mrb[0].mxu0
        %v2842 = vadd.f32 %v1048, %v2841
        %v2843 = vpop.f32.mrb[0].mxu0
        %v2844 = vadd.f32 %v1052, %v2843
        %2845 = vmatprep.mubr.f32.mxu0 %v440
        %2846 = vmatmul.mubr.f32.gmra.mrb[0].mxu0 %v439
        %v2847 = vpop.f32.mrb[0].mxu0
        %v2848 = vadd.f32 %v1048, %v2847
        %v2849 = vpop.f32.mrb[0].mxu0
        %v2850 = vadd.f32 %v1052, %v2849
        %2851 = vmatprep.mubr.f32.mxu0 %v446
        %2852 = vmatmul.mubr.f32.gmra.mrb[0].mxu0 %v445
        %v2853 = vpop.f32.mrb[0].mxu0
        %v2854 = vadd.f32 %v1048, %v2853
        %v2855 = vpop.f32.mrb[0].mxu0
        %v2856 = vadd.f32 %v1052, %v2855
        %2857 = vdwg.mxu0
        %2858 = vmatprep.subr.mxu0 %v838
        %2859 = vmatpush1.xpose.msra.mxu0 %v837
        %2860 = vmatprep.subr.mxu0 %v844
        %2861 = vmatpush1.xpose.msra.mxu0 %v843
        %2862 = vmatprep.subr.mxu0 %v850
        %2863 = vmatpush1.xpose.msra.mxu0 %v849
        %2864 = vmatprep.subr.mxu0 %v856
        %2865 = vmatpush1.xpose.msra.mxu0 %v855
        %2866 = vmatprep.subr.mxu0 %v862
        %2867 = vmatpush1.xpose.msra.mxu0 %v861
        %2868 = vmatprep.subr.mxu0 %v868
        %2869 = vmatpush1.xpose.msra.mxu0 %v867
        %2870 = vmatprep.subr.mxu0 %v874
        %2871 = vmatpush1.xpose.msra.mxu0 %v873
        %2872 = vmatprep.subr.mxu0 %v880
        %2873 = vmatpush1.xpose.msra.mxu0 %v879
        %2874 = vmatprep.subr.mxu0 %v886
        %2875 = vmatpush1.xpose.msra.mxu0 %v885
        %2876 = vmatprep.subr.mxu0 %v892
        %2877 = vmatpush1.xpose.msra.mxu0 %v891
        %2878 = vmatprep.subr.mxu0 %v898
        %2879 = vmatpush1.xpose.msra.mxu0 %v897
        %2880 = vmatprep.subr.mxu0 %v904
        %2881 = vmatpush1.xpose.msra.mxu0 %v903
        %2882 = vmatprep.subr.mxu0 %v910
        %2883 = vmatpush1.xpose.msra.mxu0 %v909
        %2884 = vmatprep.subr.mxu0 %v916
        %2885 = vmatpush1.xpose.msra.mxu0 %v915
        %2886 = vmatprep.subr.mxu0 %v922
        %2887 = vmatpush1.xpose.msra.mxu0 %v921
        %2888 = vmatprep.subr.mxu0 %v928
        %2889 = vmatpush1.xpose.msra.mxu0 %v927
        %2890 = vmatprep.subr.mxu0 %v934
        %2891 = vmatpush1.xpose.msra.mxu0 %v933
        %2892 = vmatprep.subr.mxu0 %v940
        %2893 = vmatpush1.xpose.msra.mxu0 %v939
        %2894 = vmatprep.subr.mxu0 %v946
        %2895 = vmatpush1.xpose.msra.mxu0 %v945
        %2896 = vmatprep.subr.mxu0 %v952
        %2897 = vmatpush1.xpose.msra.mxu0 %v951
        %2898 = vmatprep.subr.mxu0 %v958
        %2899 = vmatpush1.xpose.msra.mxu0 %v957
        %2900 = vmatprep.subr.mxu0 %v964
        %2901 = vmatpush1.xpose.msra.mxu0 %v963
        %2902 = vmatprep.subr.mxu0 %v970
        %2903 = vmatpush1.xpose.msra.mxu0 %v969
        %2904 = vmatprep.subr.mxu0 %v976
        %2905 = vmatpush1.xpose.msra.mxu0 %v975
        %2906 = vmatprep.subr.mxu0 %v982
        %2907 = vmatpush1.xpose.msra.mxu0 %v981
        %2908 = vmatprep.subr.mxu0 %v988
        %2909 = vmatpush1.xpose.msra.mxu0 %v987
        %2910 = vmatprep.subr.mxu0 %v994
        %2911 = vmatpush1.xpose.msra.mxu0 %v993
        %2912 = vmatprep.subr.mxu0 %v1000
        %2913 = vmatpush1.xpose.msra.mxu0 %v999
        %2914 = vmatprep.subr.mxu0 %v1006
        %2915 = vmatpush1.xpose.msra.mxu0 %v1005
        %2916 = vmatprep.subr.mxu0 %v1012
        %2917 = vmatpush1.xpose.msra.mxu0 %v1011
        %2918 = vmatprep.subr.mxu0 %v1018
        %2919 = vmatpush1.xpose.msra.mxu0 %v1017
        %2920 = vmatprep.subr.mxu0 %v1024
        %2921 = vmatpush1.xpose.msra.mxu0 %v1023
        %2922 = vmatprep.mubr.f32.mxu0 %v262
        %2923 = vmatmul.mubr.f32.gmra.mrb[0].mxu0 %v261
        %v2924 = vpop.f32.mrb[0].mxu0
        %v2925 = vadd.f32 %v2668, %v2924
        %v2926 = vpop.f32.mrb[0].mxu0
        %v2927 = vadd.f32 %v2670, %v2926
        %2928 = vmatprep.mubr.f32.mxu0 %v268
        %2929 = vmatmul.mubr.f32.gmra.mrb[0].mxu0 %v267
        %v2930 = vpop.f32.mrb[0].mxu0
        %v2931 = vadd.f32 %v2674, %v2930
        %v2932 = vpop.f32.mrb[0].mxu0
        %v2933 = vadd.f32 %v2676, %v2932
        %2934 = vmatprep.mubr.f32.mxu0 %v274
        %2935 = vmatmul.mubr.f32.gmra.mrb[0].mxu0 %v273
        %v2936 = vpop.f32.mrb[0].mxu0
        %v2937 = vadd.f32 %v2680, %v2936
        %v2938 = vpop.f32.mrb[0].mxu0
        %v2939 = vadd.f32 %v2682, %v2938
        %2940 = vmatprep.mubr.f32.mxu0 %v280
        %2941 = vmatmul.mubr.f32.gmra.mrb[0].mxu0 %v279
        %v2942 = vpop.f32.mrb[0].mxu0
        %v2943 = vadd.f32 %v2686, %v2942
        %v2944 = vpop.f32.mrb[0].mxu0
        %v2945 = vadd.f32 %v2688, %v2944
        %2946 = vmatprep.mubr.f32.mxu0 %v286
        %2947 = vmatmul.mubr.f32.gmra.mrb[0].mxu0 %v285
        %v2948 = vpop.f32.mrb[0].mxu0
        %v2949 = vadd.f32 %v2692, %v2948
        %v2950 = vpop.f32.mrb[0].mxu0
        %v2951 = vadd.f32 %v2694, %v2950
        %2952 = vmatprep.mubr.f32.mxu0 %v292
        %2953 = vmatmul.mubr.f32.gmra.mrb[0].mxu0 %v291
        %v2954 = vpop.f32.mrb[0].mxu0
        %v2955 = vadd.f32 %v2698, %v2954
        %v2956 = vpop.f32.mrb[0].mxu0
        %v2957 = vadd.f32 %v2700, %v2956
        %2958 = vmatprep.mubr.f32.mxu0 %v298
        %2959 = vmatmul.mubr.f32.gmra.mrb[0].mxu0 %v297
        %v2960 = vpop.f32.mrb[0].mxu0
        %v2961 = vadd.f32 %v2704, %v2960
        %v2962 = vpop.f32.mrb[0].mxu0
        %v2963 = vadd.f32 %v2706, %v2962
        %2964 = vmatprep.mubr.f32.mxu0 %v304
        %2965 = vmatmul.mubr.f32.gmra.mrb[0].mxu0 %v303
        %v2966 = vpop.f32.mrb[0].mxu0
        %v2967 = vadd.f32 %v2710, %v2966
        %v2968 = vpop.f32.mrb[0].mxu0
        %v2969 = vadd.f32 %v2712, %v2968
        %2970 = vmatprep.mubr.f32.mxu0 %v310
        %2971 = vmatmul.mubr.f32.gmra.mrb[0].mxu0 %v309
        %v2972 = vpop.f32.mrb[0].mxu0
        %v2973 = vadd.f32 %v2716, %v2972
        %v2974 = vpop.f32.mrb[0].mxu0
        %v2975 = vadd.f32 %v2718, %v2974
        %2976 = vmatprep.mubr.f32.mxu0 %v316
        %2977 = vmatmul.mubr.f32.gmra.mrb[0].mxu0 %v315
        %v2978 = vpop.f32.mrb[0].mxu0
        %v2979 = vadd.f32 %v2722, %v2978
        %v2980 = vpop.f32.mrb[0].mxu0
        %v2981 = vadd.f32 %v2724, %v2980
        %2982 = vmatprep.mubr.f32.mxu0 %v322
        %2983 = vmatmul.mubr.f32.gmra.mrb[0].mxu0 %v321
        %v2984 = vpop.f32.mrb[0].mxu0
        %v2985 = vadd.f32 %v2728, %v2984
        %v2986 = vpop.f32.mrb[0].mxu0
        %v2987 = vadd.f32 %v2730, %v2986
        %2988 = vmatprep.mubr.f32.mxu0 %v328
        %2989 = vmatmul.mubr.f32.gmra.mrb[0].mxu0 %v327
        %v2990 = vpop.f32.mrb[0].mxu0
        %v2991 = vadd.f32 %v2734, %v2990
        %v2992 = vpop.f32.mrb[0].mxu0
        %v2993 = vadd.f32 %v2736, %v2992
        %2994 = vmatprep.mubr.f32.mxu0 %v334
        %2995 = vmatmul.mubr.f32.gmra.mrb[0].mxu0 %v333
        %v2996 = vpop.f32.mrb[0].mxu0
        %v2997 = vadd.f32 %v2740, %v2996
        %v2998 = vpop.f32.mrb[0].mxu0
        %v2999 = vadd.f32 %v2742, %v2998
        %3000 = vmatprep.mubr.f32.mxu0 %v340
        %3001 = vmatmul.mubr.f32.gmra.mrb[0].mxu0 %v339
        %v3002 = vpop.f32.mrb[0].mxu0
        %v3003 = vadd.f32 %v2746, %v3002
        %v3004 = vpop.f32.mrb[0].mxu0
        %v3005 = vadd.f32 %v2748, %v3004
        %3006 = vmatprep.mubr.f32.mxu0 %v346
        %3007 = vmatmul.mubr.f32.gmra.mrb[0].mxu0 %v345
        %v3008 = vpop.f32.mrb[0].mxu0
        %v3009 = vadd.f32 %v2752, %v3008
        %v3010 = vpop.f32.mrb[0].mxu0
        %v3011 = vadd.f32 %v2754, %v3010
        %3012 = vmatprep.mubr.f32.mxu0 %v352
        %3013 = vmatmul.mubr.f32.gmra.mrb[0].mxu0 %v351
        %v3014 = vpop.f32.mrb[0].mxu0
        %v3015 = vadd.f32 %v2758, %v3014
        %v3016 = vpop.f32.mrb[0].mxu0
        %v3017 = vadd.f32 %v2760, %v3016
        %3018 = vmatprep.mubr.f32.mxu0 %v358
        %3019 = vmatmul.mubr.f32.gmra.mrb[0].mxu0 %v357
        %v3020 = vpop.f32.mrb[0].mxu0
        %v3021 = vadd.f32 %v2764, %v3020
        %v3022 = vpop.f32.mrb[0].mxu0
        %v3023 = vadd.f32 %v2766, %v3022
        %3024 = vmatprep.mubr.f32.mxu0 %v364
        %3025 = vmatmul.mubr.f32.gmra.mrb[0].mxu0 %v363
        %v3026 = vpop.f32.mrb[0].mxu0
        %v3027 = vadd.f32 %v2770, %v3026
        %v3028 = vpop.f32.mrb[0].mxu0
        %v3029 = vadd.f32 %v2772, %v3028
        %3030 = vmatprep.mubr.f32.mxu0 %v370
        %3031 = vmatmul.mubr.f32.gmra.mrb[0].mxu0 %v369
        %v3032 = vpop.f32.mrb[0].mxu0
        %v3033 = vadd.f32 %v2776, %v3032
        %v3034 = vpop.f32.mrb[0].mxu0
        %v3035 = vadd.f32 %v2778, %v3034
        %3036 = vmatprep.mubr.f32.mxu0 %v376
        %3037 = vmatmul.mubr.f32.gmra.mrb[0].mxu0 %v375
        %v3038 = vpop.f32.mrb[0].mxu0
        %v3039 = vadd.f32 %v2782, %v3038
        %v3040 = vpop.f32.mrb[0].mxu0
        %v3041 = vadd.f32 %v2784, %v3040
        %3042 = vmatprep.mubr.f32.mxu0 %v382
        %3043 = vmatmul.mubr.f32.gmra.mrb[0].mxu0 %v381
        %v3044 = vpop.f32.mrb[0].mxu0
        %v3045 = vadd.f32 %v2788, %v3044
        %v3046 = vpop.f32.mrb[0].mxu0
        %v3047 = vadd.f32 %v2790, %v3046
        %3048 = vmatprep.mubr.f32.mxu0 %v388
        %3049 = vmatmul.mubr.f32.gmra.mrb[0].mxu0 %v387
        %v3050 = vpop.f32.mrb[0].mxu0
        %v3051 = vadd.f32 %v2794, %v3050
        %v3052 = vpop.f32.mrb[0].mxu0
        %v3053 = vadd.f32 %v2796, %v3052
        %3054 = vmatprep.mubr.f32.mxu0 %v394
        %3055 = vmatmul.mubr.f32.gmra.mrb[0].mxu0 %v393
        %v3056 = vpop.f32.mrb[0].mxu0
        %v3057 = vadd.f32 %v2800, %v3056
        %v3058 = vpop.f32.mrb[0].mxu0
        %v3059 = vadd.f32 %v2802, %v3058
        %3060 = vmatprep.mubr.f32.mxu0 %v400
        %3061 = vmatmul.mubr.f32.gmra.mrb[0].mxu0 %v399
        %v3062 = vpop.f32.mrb[0].mxu0
        %v3063 = vadd.f32 %v2806, %v3062
        %v3064 = vpop.f32.mrb[0].mxu0
        %v3065 = vadd.f32 %v2808, %v3064
        %3066 = vmatprep.mubr.f32.mxu0 %v406
        %3067 = vmatmul.mubr.f32.gmra.mrb[0].mxu0 %v405
        %v3068 = vpop.f32.mrb[0].mxu0
        %v3069 = vadd.f32 %v2812, %v3068
        %v3070 = vpop.f32.mrb[0].mxu0
        %v3071 = vadd.f32 %v2814, %v3070
        %3072 = vmatprep.mubr.f32.mxu0 %v412
        %3073 = vmatmul.mubr.f32.gmra.mrb[0].mxu0 %v411
        %v3074 = vpop.f32.mrb[0].mxu0
        %v3075 = vadd.f32 %v2818, %v3074
        %v3076 = vpop.f32.mrb[0].mxu0
        %v3077 = vadd.f32 %v2820, %v3076
        %3078 = vmatprep.mubr.f32.mxu0 %v418
        %3079 = vmatmul.mubr.f32.gmra.mrb[0].mxu0 %v417
        %v3080 = vpop.f32.mrb[0].mxu0
        %v3081 = vadd.f32 %v2824, %v3080
        %v3082 = vpop.f32.mrb[0].mxu0
        %v3083 = vadd.f32 %v2826, %v3082
        %3084 = vmatprep.mubr.f32.mxu0 %v424
        %3085 = vmatmul.mubr.f32.gmra.mrb[0].mxu0 %v423
        %v3086 = vpop.f32.mrb[0].mxu0
        %v3087 = vadd.f32 %v2830, %v3086
        %v3088 = vpop.f32.mrb[0].mxu0
        %v3089 = vadd.f32 %v2832, %v3088
        %3090 = vmatprep.mubr.f32.mxu0 %v430
        %3091 = vmatmul.mubr.f32.gmra.mrb[0].mxu0 %v429
        %v3092 = vpop.f32.mrb[0].mxu0
        %v3093 = vadd.f32 %v2836, %v3092
        %v3094 = vpop.f32.mrb[0].mxu0
        %v3095 = vadd.f32 %v2838, %v3094
        %3096 = vmatprep.mubr.f32.mxu0 %v436
        %3097 = vmatmul.mubr.f32.gmra.mrb[0].mxu0 %v435
        %v3098 = vpop.f32.mrb[0].mxu0
        %v3099 = vadd.f32 %v2842, %v3098
        %v3100 = vpop.f32.mrb[0].mxu0
        %v3101 = vadd.f32 %v2844, %v3100
        %3102 = vmatprep.mubr.f32.mxu0 %v442
        %3103 = vmatmul.mubr.f32.gmra.mrb[0].mxu0 %v441
        %v3104 = vpop.f32.mrb[0].mxu0
        %v3105 = vadd.f32 %v2848, %v3104
        %v3106 = vpop.f32.mrb[0].mxu0
        %v3107 = vadd.f32 %v2850, %v3106
        %3108 = vmatprep.mubr.f32.mxu0 %v448
        %3109 = vmatmul.mubr.f32.gmra.mrb[0].mxu0 %v447
        %v3110 = vpop.f32.mrb[0].mxu0
        %v3111 = vadd.f32 %v2854, %v3110
        %v3112 = vpop.f32.mrb[0].mxu0
        %v3113 = vadd.f32 %v2856, %v3112
        %3114 = vdwg.mxu0
        %3115 = vmatprep.subr.mxu0 %v840
        %3116 = vmatpush1.xpose.msra.mxu0 %v839
        %3117 = vmatprep.subr.mxu0 %v846
        %3118 = vmatpush1.xpose.msra.mxu0 %v845
        %3119 = vmatprep.subr.mxu0 %v852
        %3120 = vmatpush1.xpose.msra.mxu0 %v851
        %3121 = vmatprep.subr.mxu0 %v858
        %3122 = vmatpush1.xpose.msra.mxu0 %v857
        %3123 = vmatprep.subr.mxu0 %v864
        %3124 = vmatpush1.xpose.msra.mxu0 %v863
        %3125 = vmatprep.subr.mxu0 %v870
        %3126 = vmatpush1.xpose.msra.mxu0 %v869
        %3127 = vmatprep.subr.mxu0 %v876
        %3128 = vmatpush1.xpose.msra.mxu0 %v875
        %3129 = vmatprep.subr.mxu0 %v882
        %3130 = vmatpush1.xpose.msra.mxu0 %v881
        %3131 = vmatprep.subr.mxu0 %v888
        %3132 = vmatpush1.xpose.msra.mxu0 %v887
        %3133 = vmatprep.subr.mxu0 %v894
        %3134 = vmatpush1.xpose.msra.mxu0 %v893
        %3135 = vmatprep.subr.mxu0 %v900
        %3136 = vmatpush1.xpose.msra.mxu0 %v899
        %3137 = vmatprep.subr.mxu0 %v906
        %3138 = vmatpush1.xpose.msra.mxu0 %v905
        %3139 = vmatprep.subr.mxu0 %v912
        %3140 = vmatpush1.xpose.msra.mxu0 %v911
        %3141 = vmatprep.subr.mxu0 %v918
        %3142 = vmatpush1.xpose.msra.mxu0 %v917
        %3143 = vmatprep.subr.mxu0 %v924
        %3144 = vmatpush1.xpose.msra.mxu0 %v923
        %3145 = vmatprep.subr.mxu0 %v930
        %3146 = vmatpush1.xpose.msra.mxu0 %v929
        %3147 = vmatprep.subr.mxu0 %v936
        %3148 = vmatpush1.xpose.msra.mxu0 %v935
        %3149 = vmatprep.subr.mxu0 %v942
        %3150 = vmatpush1.xpose.msra.mxu0 %v941
        %3151 = vmatprep.subr.mxu0 %v948
        %3152 = vmatpush1.xpose.msra.mxu0 %v947
        %3153 = vmatprep.subr.mxu0 %v954
        %3154 = vmatpush1.xpose.msra.mxu0 %v953
        %3155 = vmatprep.subr.mxu0 %v960
        %3156 = vmatpush1.xpose.msra.mxu0 %v959
        %3157 = vmatprep.subr.mxu0 %v966
        %3158 = vmatpush1.xpose.msra.mxu0 %v965
        %3159 = vmatprep.subr.mxu0 %v972
        %3160 = vmatpush1.xpose.msra.mxu0 %v971
        %3161 = vmatprep.subr.mxu0 %v978
        %3162 = vmatpush1.xpose.msra.mxu0 %v977
        %3163 = vmatprep.subr.mxu0 %v984
        %3164 = vmatpush1.xpose.msra.mxu0 %v983
        %3165 = vmatprep.subr.mxu0 %v990
        %3166 = vmatpush1.xpose.msra.mxu0 %v989
        %3167 = vmatprep.subr.mxu0 %v996
        %3168 = vmatpush1.xpose.msra.mxu0 %v995
        %3169 = vmatprep.subr.mxu0 %v1002
        %3170 = vmatpush1.xpose.msra.mxu0 %v1001
        %3171 = vmatprep.subr.mxu0 %v1008
        %3172 = vmatpush1.xpose.msra.mxu0 %v1007
        %3173 = vmatprep.subr.mxu0 %v1014
        %3174 = vmatpush1.xpose.msra.mxu0 %v1013
        %3175 = vmatprep.subr.mxu0 %v1020
        %3176 = vmatpush1.xpose.msra.mxu0 %v1019
        %3177 = vmatprep.subr.mxu0 %v1026
        %3178 = vmatpush1.xpose.msra.mxu0 %v1025
        %3179 = vmatprep.mubr.f32.mxu0 %v264
        %3180 = vmatmul.mubr.f32.gmra.mrb[0].mxu0 %v263
        %v3181 = vpop.f32.mrb[0].mxu0
        %v3182 = vadd.f32 %v2925, %v3181
        %v3183 = vpop.f32.mrb[0].mxu0
        %v3184 = vadd.f32 %v2927, %v3183
        %3185 = vmatprep.mubr.f32.mxu0 %v270
        %3186 = vmatmul.mubr.f32.gmra.mrb[0].mxu0 %v269
        %v3187 = vpop.f32.mrb[0].mxu0
        %v3188 = vadd.f32 %v2931, %v3187
        %v3189 = vpop.f32.mrb[0].mxu0
        %v3190 = vadd.f32 %v2933, %v3189
        %3191 = vmatprep.mubr.f32.mxu0 %v276
        %3192 = vmatmul.mubr.f32.gmra.mrb[0].mxu0 %v275
        %v3193 = vpop.f32.mrb[0].mxu0
        %v3194 = vadd.f32 %v2937, %v3193
        %v3195 = vpop.f32.mrb[0].mxu0
        %v3196 = vadd.f32 %v2939, %v3195
        %3197 = vmatprep.mubr.f32.mxu0 %v282
        %3198 = vmatmul.mubr.f32.gmra.mrb[0].mxu0 %v281
        %v3199 = vpop.f32.mrb[0].mxu0
        %v3200 = vadd.f32 %v2943, %v3199
        %v3201 = vpop.f32.mrb[0].mxu0
        %v3202 = vadd.f32 %v2945, %v3201
        %3203 = vmatprep.mubr.f32.mxu0 %v288
        %3204 = vmatmul.mubr.f32.gmra.mrb[0].mxu0 %v287
        %v3205 = vpop.f32.mrb[0].mxu0
        %v3206 = vadd.f32 %v2949, %v3205
        %v3207 = vpop.f32.mrb[0].mxu0
        %v3208 = vadd.f32 %v2951, %v3207
        %3209 = vmatprep.mubr.f32.mxu0 %v294
        %3210 = vmatmul.mubr.f32.gmra.mrb[0].mxu0 %v293
        %v3211 = vpop.f32.mrb[0].mxu0
        %v3212 = vadd.f32 %v2955, %v3211
        %v3213 = vpop.f32.mrb[0].mxu0
        %v3214 = vadd.f32 %v2957, %v3213
        %3215 = vmatprep.mubr.f32.mxu0 %v300
        %3216 = vmatmul.mubr.f32.gmra.mrb[0].mxu0 %v299
        %v3217 = vpop.f32.mrb[0].mxu0
        %v3218 = vadd.f32 %v2961, %v3217
        %v3219 = vpop.f32.mrb[0].mxu0
        %v3220 = vadd.f32 %v2963, %v3219
        %3221 = vmatprep.mubr.f32.mxu0 %v306
        %3222 = vmatmul.mubr.f32.gmra.mrb[0].mxu0 %v305
        %v3223 = vpop.f32.mrb[0].mxu0
        %v3224 = vadd.f32 %v2967, %v3223
        %v3225 = vpop.f32.mrb[0].mxu0
        %v3226 = vadd.f32 %v2969, %v3225
        %3227 = vmatprep.mubr.f32.mxu0 %v312
        %3228 = vmatmul.mubr.f32.gmra.mrb[0].mxu0 %v311
        %v3229 = vpop.f32.mrb[0].mxu0
        %v3230 = vadd.f32 %v2973, %v3229
        %v3231 = vpop.f32.mrb[0].mxu0
        %v3232 = vadd.f32 %v2975, %v3231
        %3233 = vmatprep.mubr.f32.mxu0 %v318
        %3234 = vmatmul.mubr.f32.gmra.mrb[0].mxu0 %v317
        %v3235 = vpop.f32.mrb[0].mxu0
        %v3236 = vadd.f32 %v2979, %v3235
        %v3237 = vpop.f32.mrb[0].mxu0
        %v3238 = vadd.f32 %v2981, %v3237
        %3239 = vmatprep.mubr.f32.mxu0 %v324
        %3240 = vmatmul.mubr.f32.gmra.mrb[0].mxu0 %v323
        %v3241 = vpop.f32.mrb[0].mxu0
        %v3242 = vadd.f32 %v2985, %v3241
        %v3243 = vpop.f32.mrb[0].mxu0
        %v3244 = vadd.f32 %v2987, %v3243
        %3245 = vmatprep.mubr.f32.mxu0 %v330
        %3246 = vmatmul.mubr.f32.gmra.mrb[0].mxu0 %v329
        %v3247 = vpop.f32.mrb[0].mxu0
        %v3248 = vadd.f32 %v2991, %v3247
        %v3249 = vpop.f32.mrb[0].mxu0
        %v3250 = vadd.f32 %v2993, %v3249
        %3251 = vmatprep.mubr.f32.mxu0 %v336
        %3252 = vmatmul.mubr.f32.gmra.mrb[0].mxu0 %v335
        %v3253 = vpop.f32.mrb[0].mxu0
        %v3254 = vadd.f32 %v2997, %v3253
        %v3255 = vpop.f32.mrb[0].mxu0
        %v3256 = vadd.f32 %v2999, %v3255
        %3257 = vmatprep.mubr.f32.mxu0 %v342
        %3258 = vmatmul.mubr.f32.gmra.mrb[0].mxu0 %v341
        %v3259 = vpop.f32.mrb[0].mxu0
        %v3260 = vadd.f32 %v3003, %v3259
        %v3261 = vpop.f32.mrb[0].mxu0
        %v3262 = vadd.f32 %v3005, %v3261
        %3263 = vmatprep.mubr.f32.mxu0 %v348
        %3264 = vmatmul.mubr.f32.gmra.mrb[0].mxu0 %v347
        %v3265 = vpop.f32.mrb[0].mxu0
        %v3266 = vadd.f32 %v3009, %v3265
        %v3267 = vpop.f32.mrb[0].mxu0
        %v3268 = vadd.f32 %v3011, %v3267
        %3269 = vmatprep.mubr.f32.mxu0 %v354
        %3270 = vmatmul.mubr.f32.gmra.mrb[0].mxu0 %v353
        %v3271 = vpop.f32.mrb[0].mxu0
        %v3272 = vadd.f32 %v3015, %v3271
        %v3273 = vpop.f32.mrb[0].mxu0
        %v3274 = vadd.f32 %v3017, %v3273
        %3275 = vmatprep.mubr.f32.mxu0 %v360
        %3276 = vmatmul.mubr.f32.gmra.mrb[0].mxu0 %v359
        %v3277 = vpop.f32.mrb[0].mxu0
        %v3278 = vadd.f32 %v3021, %v3277
        %v3279 = vpop.f32.mrb[0].mxu0
        %v3280 = vadd.f32 %v3023, %v3279
        %3281 = vmatprep.mubr.f32.mxu0 %v366
        %3282 = vmatmul.mubr.f32.gmra.mrb[0].mxu0 %v365
        %v3283 = vpop.f32.mrb[0].mxu0
        %v3284 = vadd.f32 %v3027, %v3283
        %v3285 = vpop.f32.mrb[0].mxu0
        %v3286 = vadd.f32 %v3029, %v3285
        %3287 = vmatprep.mubr.f32.mxu0 %v372
        %3288 = vmatmul.mubr.f32.gmra.mrb[0].mxu0 %v371
        %v3289 = vpop.f32.mrb[0].mxu0
        %v3290 = vadd.f32 %v3033, %v3289
        %v3291 = vpop.f32.mrb[0].mxu0
        %v3292 = vadd.f32 %v3035, %v3291
        %3293 = vmatprep.mubr.f32.mxu0 %v378
        %3294 = vmatmul.mubr.f32.gmra.mrb[0].mxu0 %v377
        %v3295 = vpop.f32.mrb[0].mxu0
        %v3296 = vadd.f32 %v3039, %v3295
        %v3297 = vpop.f32.mrb[0].mxu0
        %v3298 = vadd.f32 %v3041, %v3297
        %3299 = vmatprep.mubr.f32.mxu0 %v384
        %3300 = vmatmul.mubr.f32.gmra.mrb[0].mxu0 %v383
        %v3301 = vpop.f32.mrb[0].mxu0
        %v3302 = vadd.f32 %v3045, %v3301
        %v3303 = vpop.f32.mrb[0].mxu0
        %v3304 = vadd.f32 %v3047, %v3303
        %3305 = vmatprep.mubr.f32.mxu0 %v390
        %3306 = vmatmul.mubr.f32.gmra.mrb[0].mxu0 %v389
        %v3307 = vpop.f32.mrb[0].mxu0
        %v3308 = vadd.f32 %v3051, %v3307
        %v3309 = vpop.f32.mrb[0].mxu0
        %v3310 = vadd.f32 %v3053, %v3309
        %3311 = vmatprep.mubr.f32.mxu0 %v396
        %3312 = vmatmul.mubr.f32.gmra.mrb[0].mxu0 %v395
        %v3313 = vpop.f32.mrb[0].mxu0
        %v3314 = vadd.f32 %v3057, %v3313
        %v3315 = vpop.f32.mrb[0].mxu0
        %v3316 = vadd.f32 %v3059, %v3315
        %3317 = vmatprep.mubr.f32.mxu0 %v402
        %3318 = vmatmul.mubr.f32.gmra.mrb[0].mxu0 %v401
        %v3319 = vpop.f32.mrb[0].mxu0
        %v3320 = vadd.f32 %v3063, %v3319
        %v3321 = vpop.f32.mrb[0].mxu0
        %v3322 = vadd.f32 %v3065, %v3321
        %3323 = vmatprep.mubr.f32.mxu0 %v408
        %3324 = vmatmul.mubr.f32.gmra.mrb[0].mxu0 %v407
        %v3325 = vpop.f32.mrb[0].mxu0
        %v3326 = vadd.f32 %v3069, %v3325
        %v3327 = vpop.f32.mrb[0].mxu0
        %v3328 = vadd.f32 %v3071, %v3327
        %3329 = vmatprep.mubr.f32.mxu0 %v414
        %3330 = vmatmul.mubr.f32.gmra.mrb[0].mxu0 %v413
        %v3331 = vpop.f32.mrb[0].mxu0
        %v3332 = vadd.f32 %v3075, %v3331
        %v3333 = vpop.f32.mrb[0].mxu0
        %v3334 = vadd.f32 %v3077, %v3333
        %3335 = vmatprep.mubr.f32.mxu0 %v420
        %3336 = vmatmul.mubr.f32.gmra.mrb[0].mxu0 %v419
        %v3337 = vpop.f32.mrb[0].mxu0
        %v3338 = vadd.f32 %v3081, %v3337
        %v3339 = vpop.f32.mrb[0].mxu0
        %v3340 = vadd.f32 %v3083, %v3339
        %3341 = vmatprep.mubr.f32.mxu0 %v426
        %3342 = vmatmul.mubr.f32.gmra.mrb[0].mxu0 %v425
        %v3343 = vpop.f32.mrb[0].mxu0
        %v3344 = vadd.f32 %v3087, %v3343
        %v3345 = vpop.f32.mrb[0].mxu0
        %v3346 = vadd.f32 %v3089, %v3345
        %3347 = vmatprep.mubr.f32.mxu0 %v432
        %3348 = vmatmul.mubr.f32.gmra.mrb[0].mxu0 %v431
        %v3349 = vpop.f32.mrb[0].mxu0
        %v3350 = vadd.f32 %v3093, %v3349
        %v3351 = vpop.f32.mrb[0].mxu0
        %v3352 = vadd.f32 %v3095, %v3351
        %3353 = vmatprep.mubr.f32.mxu0 %v438
        %3354 = vmatmul.mubr.f32.gmra.mrb[0].mxu0 %v437
        %v3355 = vpop.f32.mrb[0].mxu0
        %v3356 = vadd.f32 %v3099, %v3355
        %v3357 = vpop.f32.mrb[0].mxu0
        %v3358 = vadd.f32 %v3101, %v3357
        %3359 = vmatprep.mubr.f32.mxu0 %v444
        %3360 = vmatmul.mubr.f32.gmra.mrb[0].mxu0 %v443
        %v3361 = vpop.f32.mrb[0].mxu0
        %v3362 = vadd.f32 %v3105, %v3361
        %v3363 = vpop.f32.mrb[0].mxu0
        %v3364 = vadd.f32 %v3107, %v3363
        %3365 = vmatprep.mubr.f32.mxu0 %v450
        %3366 = vmatmul.mubr.f32.gmra.mrb[0].mxu0 %v449
        %v3367 = vpop.f32.mrb[0].mxu0
        %v3368 = vadd.f32 %v3111, %v3367
        %v3369 = vpop.f32.mrb[0].mxu0
        %v3370 = vadd.f32 %v3113, %v3369
        %3371 = vdwg.mxu0
        %v3372 = vxor.u32 %v1640, 2147483648
        %v3373 = vxor.u32 %v1642, 2147483648
        %v3374 = vxor.u32 %v2411, 2147483648
        %v3375 = vxor.u32 %v2413, 2147483648
        %v3376 = vxor.u32 %v3182, 2147483648
        %v3377 = vxor.u32 %v3184, 2147483648
        %v3378 = vxor.u32 %v1646, 2147483648
        %v3379 = vxor.u32 %v1648, 2147483648
        %v3380 = vxor.u32 %v2417, 2147483648
        %v3381 = vxor.u32 %v2419, 2147483648
        %v3382 = vxor.u32 %v3188, 2147483648
        %v3383 = vxor.u32 %v3190, 2147483648
        %v3384 = vxor.u32 %v1652, 2147483648
        %v3385 = vxor.u32 %v1654, 2147483648
        %v3386 = vxor.u32 %v2423, 2147483648
        %v3387 = vxor.u32 %v2425, 2147483648
        %v3388 = vxor.u32 %v3194, 2147483648
        %v3389 = vxor.u32 %v3196, 2147483648
        %v3390 = vxor.u32 %v1658, 2147483648
        %v3391 = vxor.u32 %v1660, 2147483648
        %v3392 = vxor.u32 %v2429, 2147483648
        %v3393 = vxor.u32 %v2431, 2147483648
        %v3394 = vxor.u32 %v3200, 2147483648
        %v3395 = vxor.u32 %v3202, 2147483648
        %v3396 = vxor.u32 %v1664, 2147483648
        %v3397 = vxor.u32 %v1666, 2147483648
        %v3398 = vxor.u32 %v2435, 2147483648
        %v3399 = vxor.u32 %v2437, 2147483648
        %v3400 = vxor.u32 %v3206, 2147483648
        %v3401 = vxor.u32 %v3208, 2147483648
        %v3402 = vxor.u32 %v1670, 2147483648
        %v3403 = vxor.u32 %v1672, 2147483648
        %v3404 = vxor.u32 %v2441, 2147483648
        %v3405 = vxor.u32 %v2443, 2147483648
        %v3406 = vxor.u32 %v3212, 2147483648
        %v3407 = vxor.u32 %v3214, 2147483648
        %v3408 = vxor.u32 %v1676, 2147483648
        %v3409 = vxor.u32 %v1678, 2147483648
        %v3410 = vxor.u32 %v2447, 2147483648
        %v3411 = vxor.u32 %v2449, 2147483648
        %v3412 = vxor.u32 %v3218, 2147483648
        %v3413 = vxor.u32 %v3220, 2147483648
        %v3414 = vxor.u32 %v1682, 2147483648
        %v3415 = vxor.u32 %v1684, 2147483648
        %v3416 = vxor.u32 %v2453, 2147483648
        %v3417 = vxor.u32 %v2455, 2147483648
        %v3418 = vxor.u32 %v3224, 2147483648
        %v3419 = vxor.u32 %v3226, 2147483648
        %v3420 = vxor.u32 %v1688, 2147483648
        %v3421 = vxor.u32 %v1690, 2147483648
        %v3422 = vxor.u32 %v2459, 2147483648
        %v3423 = vxor.u32 %v2461, 2147483648
        %v3424 = vxor.u32 %v3230, 2147483648
        %v3425 = vxor.u32 %v3232, 2147483648
        %v3426 = vxor.u32 %v1694, 2147483648
        %v3427 = vxor.u32 %v1696, 2147483648
        %v3428 = vxor.u32 %v2465, 2147483648
        %v3429 = vxor.u32 %v2467, 2147483648
        %v3430 = vxor.u32 %v3236, 2147483648
        %v3431 = vxor.u32 %v3238, 2147483648
        %v3432 = vxor.u32 %v1700, 2147483648
        %v3433 = vxor.u32 %v1702, 2147483648
        %v3434 = vxor.u32 %v2471, 2147483648
        %v3435 = vxor.u32 %v2473, 2147483648
        %v3436 = vxor.u32 %v3242, 2147483648
        %v3437 = vxor.u32 %v3244, 2147483648
        %v3438 = vxor.u32 %v1706, 2147483648
        %v3439 = vxor.u32 %v1708, 2147483648
        %v3440 = vxor.u32 %v2477, 2147483648
        %v3441 = vxor.u32 %v2479, 2147483648
        %v3442 = vxor.u32 %v3248, 2147483648
        %v3443 = vxor.u32 %v3250, 2147483648
        %v3444 = vxor.u32 %v1712, 2147483648
        %v3445 = vxor.u32 %v1714, 2147483648
        %v3446 = vxor.u32 %v2483, 2147483648
        %v3447 = vxor.u32 %v2485, 2147483648
        %v3448 = vxor.u32 %v3254, 2147483648
        %v3449 = vxor.u32 %v3256, 2147483648
        %v3450 = vxor.u32 %v1718, 2147483648
        %v3451 = vxor.u32 %v1720, 2147483648
        %v3452 = vxor.u32 %v2489, 2147483648
        %v3453 = vxor.u32 %v2491, 2147483648
        %v3454 = vxor.u32 %v3260, 2147483648
        %v3455 = vxor.u32 %v3262, 2147483648
        %v3456 = vxor.u32 %v1724, 2147483648
        %v3457 = vxor.u32 %v1726, 2147483648
        %v3458 = vxor.u32 %v2495, 2147483648
        %v3459 = vxor.u32 %v2497, 2147483648
        %v3460 = vxor.u32 %v3266, 2147483648
        %v3461 = vxor.u32 %v3268, 2147483648
        %v3462 = vxor.u32 %v1730, 2147483648
        %v3463 = vxor.u32 %v1732, 2147483648
        %v3464 = vxor.u32 %v2501, 2147483648
        %v3465 = vxor.u32 %v2503, 2147483648
        %v3466 = vxor.u32 %v3272, 2147483648
        %v3467 = vxor.u32 %v3274, 2147483648
        %v3468 = vxor.u32 %v1736, 2147483648
        %v3469 = vxor.u32 %v1738, 2147483648
        %v3470 = vxor.u32 %v2507, 2147483648
        %v3471 = vxor.u32 %v2509, 2147483648
        %v3472 = vxor.u32 %v3278, 2147483648
        %v3473 = vxor.u32 %v3280, 2147483648
        %v3474 = vxor.u32 %v1742, 2147483648
        %v3475 = vxor.u32 %v1744, 2147483648
        %v3476 = vxor.u32 %v2513, 2147483648
        %v3477 = vxor.u32 %v2515, 2147483648
        %v3478 = vxor.u32 %v3284, 2147483648
        %v3479 = vxor.u32 %v3286, 2147483648
        %v3480 = vxor.u32 %v1748, 2147483648
        %v3481 = vxor.u32 %v1750, 2147483648
        %v3482 = vxor.u32 %v2519, 2147483648
        %v3483 = vxor.u32 %v2521, 2147483648
        %v3484 = vxor.u32 %v3290, 2147483648
        %v3485 = vxor.u32 %v3292, 2147483648
        %v3486 = vxor.u32 %v1754, 2147483648
        %v3487 = vxor.u32 %v1756, 2147483648
        %v3488 = vxor.u32 %v2525, 2147483648
        %v3489 = vxor.u32 %v2527, 2147483648
        %v3490 = vxor.u32 %v3296, 2147483648
        %v3491 = vxor.u32 %v3298, 2147483648
        %v3492 = vxor.u32 %v1760, 2147483648
        %v3493 = vxor.u32 %v1762, 2147483648
        %v3494 = vxor.u32 %v2531, 2147483648
        %v3495 = vxor.u32 %v2533, 2147483648
        %v3496 = vxor.u32 %v3302, 2147483648
        %v3497 = vxor.u32 %v3304, 2147483648
        %v3498 = vxor.u32 %v1766, 2147483648
        %v3499 = vxor.u32 %v1768, 2147483648
        %v3500 = vxor.u32 %v2537, 2147483648
        %v3501 = vxor.u32 %v2539, 2147483648
        %v3502 = vxor.u32 %v3308, 2147483648
        %v3503 = vxor.u32 %v3310, 2147483648
        %v3504 = vxor.u32 %v1772, 2147483648
        %v3505 = vxor.u32 %v1774, 2147483648
        %v3506 = vxor.u32 %v2543, 2147483648
        %v3507 = vxor.u32 %v2545, 2147483648
        %v3508 = vxor.u32 %v3314, 2147483648
        %v3509 = vxor.u32 %v3316, 2147483648
        %v3510 = vxor.u32 %v1778, 2147483648
        %v3511 = vxor.u32 %v1780, 2147483648
        %v3512 = vxor.u32 %v2549, 2147483648
        %v3513 = vxor.u32 %v2551, 2147483648
        %v3514 = vxor.u32 %v3320, 2147483648
        %v3515 = vxor.u32 %v3322, 2147483648
        %v3516 = vxor.u32 %v1784, 2147483648
        %v3517 = vxor.u32 %v1786, 2147483648
        %v3518 = vxor.u32 %v2555, 2147483648
        %v3519 = vxor.u32 %v2557, 2147483648
        %v3520 = vxor.u32 %v3326, 2147483648
        %v3521 = vxor.u32 %v3328, 2147483648
        %v3522 = vxor.u32 %v1790, 2147483648
        %v3523 = vxor.u32 %v1792, 2147483648
        %v3524 = vxor.u32 %v2561, 2147483648
        %v3525 = vxor.u32 %v2563, 2147483648
        %v3526 = vxor.u32 %v3332, 2147483648
        %v3527 = vxor.u32 %v3334, 2147483648
        %v3528 = vxor.u32 %v1796, 2147483648
        %v3529 = vxor.u32 %v1798, 2147483648
        %v3530 = vxor.u32 %v2567, 2147483648
        %v3531 = vxor.u32 %v2569, 2147483648
        %v3532 = vxor.u32 %v3338, 2147483648
        %v3533 = vxor.u32 %v3340, 2147483648
        %v3534 = vxor.u32 %v1802, 2147483648
        %v3535 = vxor.u32 %v1804, 2147483648
        %v3536 = vxor.u32 %v2573, 2147483648
        %v3537 = vxor.u32 %v2575, 2147483648
        %v3538 = vxor.u32 %v3344, 2147483648
        %v3539 = vxor.u32 %v3346, 2147483648
        %v3540 = vxor.u32 %v1808, 2147483648
        %v3541 = vxor.u32 %v1810, 2147483648
        %v3542 = vxor.u32 %v2579, 2147483648
        %v3543 = vxor.u32 %v2581, 2147483648
        %v3544 = vxor.u32 %v3350, 2147483648
        %v3545 = vxor.u32 %v3352, 2147483648
        %v3546 = vxor.u32 %v1814, 2147483648
        %v3547 = vxor.u32 %v1816, 2147483648
        %v3548 = vxor.u32 %v2585, 2147483648
        %v3549 = vxor.u32 %v2587, 2147483648
        %v3550 = vxor.u32 %v3356, 2147483648
        %v3551 = vxor.u32 %v3358, 2147483648
        %v3552 = vxor.u32 %v1820, 2147483648
        %v3553 = vxor.u32 %v1822, 2147483648
        %v3554 = vxor.u32 %v2591, 2147483648
        %v3555 = vxor.u32 %v2593, 2147483648
        %v3556 = vxor.u32 %v3362, 2147483648
        %v3557 = vxor.u32 %v3364, 2147483648
        %v3558 = vxor.u32 %v1826, 2147483648
        %v3559 = vxor.u32 %v1828, 2147483648
        %v3560 = vxor.u32 %v2597, 2147483648
        %v3561 = vxor.u32 %v2599, 2147483648
        %v3562 = vxor.u32 %v3368, 2147483648
        %v3563 = vxor.u32 %v3370, 2147483648
        %v3564 = vmul.f32 %v3372, 1.442695
        %v3565 = vpow.pop %v3564
        %v3566 = vmul.f32 %v3373, 1.442695
        %v3567 = vpow.pop %v3566
        %v3568 = vmul.f32 %v3374, 1.442695
        %v3569 = vpow.pop %v3568
        %v3570 = vmul.f32 %v3375, 1.442695
        %v3571 = vpow.pop %v3570
        %v3572 = vmul.f32 %v3376, 1.442695
        %v3573 = vpow.pop %v3572
        %v3574 = vmul.f32 %v3377, 1.442695
        %v3575 = vpow.pop %v3574
        %v3576 = vmul.f32 %v3378, 1.442695
        %v3577 = vpow.pop %v3576
        %v3578 = vmul.f32 %v3379, 1.442695
        %v3579 = vpow.pop %v3578
        %v3580 = vmul.f32 %v3380, 1.442695
        %v3581 = vpow.pop %v3580
        %v3582 = vmul.f32 %v3381, 1.442695
        %v3583 = vpow.pop %v3582
        %v3584 = vmul.f32 %v3382, 1.442695
        %v3585 = vpow.pop %v3584
        %v3586 = vmul.f32 %v3383, 1.442695
        %v3587 = vpow.pop %v3586
        %v3588 = vmul.f32 %v3384, 1.442695
        %v3589 = vpow.pop %v3588
        %v3590 = vmul.f32 %v3385, 1.442695
        %v3591 = vpow.pop %v3590
        %v3592 = vmul.f32 %v3386, 1.442695
        %v3593 = vpow.pop %v3592
        %v3594 = vmul.f32 %v3387, 1.442695
        %v3595 = vpow.pop %v3594
        %v3596 = vmul.f32 %v3388, 1.442695
        %v3597 = vpow.pop %v3596
        %v3598 = vmul.f32 %v3389, 1.442695
        %v3599 = vpow.pop %v3598
        %v3600 = vmul.f32 %v3390, 1.442695
        %v3601 = vpow.pop %v3600
        %v3602 = vmul.f32 %v3391, 1.442695
        %v3603 = vpow.pop %v3602
        %v3604 = vmul.f32 %v3392, 1.442695
        %v3605 = vpow.pop %v3604
        %v3606 = vmul.f32 %v3393, 1.442695
        %v3607 = vpow.pop %v3606
        %v3608 = vmul.f32 %v3394, 1.442695
        %v3609 = vpow.pop %v3608
        %v3610 = vmul.f32 %v3395, 1.442695
        %v3611 = vpow.pop %v3610
        %v3612 = vmul.f32 %v3396, 1.442695
        %v3613 = vpow.pop %v3612
        %v3614 = vmul.f32 %v3397, 1.442695
        %v3615 = vpow.pop %v3614
        %v3616 = vmul.f32 %v3398, 1.442695
        %v3617 = vpow.pop %v3616
        %v3618 = vmul.f32 %v3399, 1.442695
        %v3619 = vpow.pop %v3618
        %v3620 = vmul.f32 %v3400, 1.442695
        %v3621 = vpow.pop %v3620
        %v3622 = vmul.f32 %v3401, 1.442695
        %v3623 = vpow.pop %v3622
        %v3624 = vmul.f32 %v3402, 1.442695
        %v3625 = vpow.pop %v3624
        %v3626 = vmul.f32 %v3403, 1.442695
        %v3627 = vpow.pop %v3626
        %v3628 = vmul.f32 %v3404, 1.442695
        %v3629 = vpow.pop %v3628
        %v3630 = vmul.f32 %v3405, 1.442695
        %v3631 = vpow.pop %v3630
        %v3632 = vmul.f32 %v3406, 1.442695
        %v3633 = vpow.pop %v3632
        %v3634 = vmul.f32 %v3407, 1.442695
        %v3635 = vpow.pop %v3634
        %v3636 = vmul.f32 %v3408, 1.442695
        %v3637 = vpow.pop %v3636
        %v3638 = vmul.f32 %v3409, 1.442695
        %v3639 = vpow.pop %v3638
        %v3640 = vmul.f32 %v3410, 1.442695
        %v3641 = vpow.pop %v3640
        %v3642 = vmul.f32 %v3411, 1.442695
        %v3643 = vpow.pop %v3642
        %v3644 = vmul.f32 %v3412, 1.442695
        %v3645 = vpow.pop %v3644
        %v3646 = vmul.f32 %v3413, 1.442695
        %v3647 = vpow.pop %v3646
        %v3648 = vmul.f32 %v3414, 1.442695
        %v3649 = vpow.pop %v3648
        %v3650 = vmul.f32 %v3415, 1.442695
        %v3651 = vpow.pop %v3650
        %v3652 = vmul.f32 %v3416, 1.442695
        %v3653 = vpow.pop %v3652
        %v3654 = vmul.f32 %v3417, 1.442695
        %v3655 = vpow.pop %v3654
        %v3656 = vmul.f32 %v3418, 1.442695
        %v3657 = vpow.pop %v3656
        %v3658 = vmul.f32 %v3419, 1.442695
        %v3659 = vpow.pop %v3658
        %v3660 = vmul.f32 %v3420, 1.442695
        %v3661 = vpow.pop %v3660
        %v3662 = vmul.f32 %v3421, 1.442695
        %v3663 = vpow.pop %v3662
        %v3664 = vmul.f32 %v3422, 1.442695
        %v3665 = vpow.pop %v3664
        %v3666 = vmul.f32 %v3423, 1.442695
        %v3667 = vpow.pop %v3666
        %v3668 = vmul.f32 %v3424, 1.442695
        %v3669 = vpow.pop %v3668
        %v3670 = vmul.f32 %v3425, 1.442695
        %v3671 = vpow.pop %v3670
        %v3672 = vmul.f32 %v3426, 1.442695
        %v3673 = vpow.pop %v3672
        %v3674 = vmul.f32 %v3427, 1.442695
        %v3675 = vpow.pop %v3674
        %v3676 = vmul.f32 %v3428, 1.442695
        %v3677 = vpow.pop %v3676
        %v3678 = vmul.f32 %v3429, 1.442695
        %v3679 = vpow.pop %v3678
        %v3680 = vmul.f32 %v3430, 1.442695
        %v3681 = vpow.pop %v3680
        %v3682 = vmul.f32 %v3431, 1.442695
        %v3683 = vpow.pop %v3682
        %v3684 = vmul.f32 %v3432, 1.442695
        %v3685 = vpow.pop %v3684
        %v3686 = vmul.f32 %v3433, 1.442695
        %v3687 = vpow.pop %v3686
        %v3688 = vmul.f32 %v3434, 1.442695
        %v3689 = vpow.pop %v3688
        %v3690 = vmul.f32 %v3435, 1.442695
        %v3691 = vpow.pop %v3690
        %v3692 = vmul.f32 %v3436, 1.442695
        %v3693 = vpow.pop %v3692
        %v3694 = vmul.f32 %v3437, 1.442695
        %v3695 = vpow.pop %v3694
        %v3696 = vmul.f32 %v3438, 1.442695
        %v3697 = vpow.pop %v3696
        %v3698 = vmul.f32 %v3439, 1.442695
        %v3699 = vpow.pop %v3698
        %v3700 = vmul.f32 %v3440, 1.442695
        %v3701 = vpow.pop %v3700
        %v3702 = vmul.f32 %v3441, 1.442695
        %v3703 = vpow.pop %v3702
        %v3704 = vmul.f32 %v3442, 1.442695
        %v3705 = vpow.pop %v3704
        %v3706 = vmul.f32 %v3443, 1.442695
        %v3707 = vpow.pop %v3706
        %v3708 = vmul.f32 %v3444, 1.442695
        %v3709 = vpow.pop %v3708
        %v3710 = vmul.f32 %v3445, 1.442695
        %v3711 = vpow.pop %v3710
        %v3712 = vmul.f32 %v3446, 1.442695
        %v3713 = vpow.pop %v3712
        %v3714 = vmul.f32 %v3447, 1.442695
        %v3715 = vpow.pop %v3714
        %v3716 = vmul.f32 %v3448, 1.442695
        %v3717 = vpow.pop %v3716
        %v3718 = vmul.f32 %v3449, 1.442695
        %v3719 = vpow.pop %v3718
        %v3720 = vmul.f32 %v3450, 1.442695
        %v3721 = vpow.pop %v3720
        %v3722 = vmul.f32 %v3451, 1.442695
        %v3723 = vpow.pop %v3722
        %v3724 = vmul.f32 %v3452, 1.442695
        %v3725 = vpow.pop %v3724
        %v3726 = vmul.f32 %v3453, 1.442695
        %v3727 = vpow.pop %v3726
        %v3728 = vmul.f32 %v3454, 1.442695
        %v3729 = vpow.pop %v3728
        %v3730 = vmul.f32 %v3455, 1.442695
        %v3731 = vpow.pop %v3730
        %v3732 = vmul.f32 %v3456, 1.442695
        %v3733 = vpow.pop %v3732
        %v3734 = vmul.f32 %v3457, 1.442695
        %v3735 = vpow.pop %v3734
        %v3736 = vmul.f32 %v3458, 1.442695
        %v3737 = vpow.pop %v3736
        %v3738 = vmul.f32 %v3459, 1.442695
        %v3739 = vpow.pop %v3738
        %v3740 = vmul.f32 %v3460, 1.442695
        %v3741 = vpow.pop %v3740
        %v3742 = vmul.f32 %v3461, 1.442695
        %v3743 = vpow.pop %v3742
        %v3744 = vmul.f32 %v3462, 1.442695
        %v3745 = vpow.pop %v3744
        %v3746 = vmul.f32 %v3463, 1.442695
        %v3747 = vpow.pop %v3746
        %v3748 = vmul.f32 %v3464, 1.442695
        %v3749 = vpow.pop %v3748
        %v3750 = vmul.f32 %v3465, 1.442695
        %v3751 = vpow.pop %v3750
        %v3752 = vmul.f32 %v3466, 1.442695
        %v3753 = vpow.pop %v3752
        %v3754 = vmul.f32 %v3467, 1.442695
        %v3755 = vpow.pop %v3754
        %v3756 = vmul.f32 %v3468, 1.442695
        %v3757 = vpow.pop %v3756
        %v3758 = vmul.f32 %v3469, 1.442695
        %v3759 = vpow.pop %v3758
        %v3760 = vmul.f32 %v3470, 1.442695
        %v3761 = vpow.pop %v3760
        %v3762 = vmul.f32 %v3471, 1.442695
        %v3763 = vpow.pop %v3762
        %v3764 = vmul.f32 %v3472, 1.442695
        %v3765 = vpow.pop %v3764
        %v3766 = vmul.f32 %v3473, 1.442695
        %v3767 = vpow.pop %v3766
        %v3768 = vmul.f32 %v3474, 1.442695
        %v3769 = vpow.pop %v3768
        %v3770 = vmul.f32 %v3475, 1.442695
        %v3771 = vpow.pop %v3770
        %v3772 = vmul.f32 %v3476, 1.442695
        %v3773 = vpow.pop %v3772
        %v3774 = vmul.f32 %v3477, 1.442695
        %v3775 = vpow.pop %v3774
        %v3776 = vmul.f32 %v3478, 1.442695
        %v3777 = vpow.pop %v3776
        %v3778 = vmul.f32 %v3479, 1.442695
        %v3779 = vpow.pop %v3778
        %v3780 = vmul.f32 %v3480, 1.442695
        %v3781 = vpow.pop %v3780
        %v3782 = vmul.f32 %v3481, 1.442695
        %v3783 = vpow.pop %v3782
        %v3784 = vmul.f32 %v3482, 1.442695
        %v3785 = vpow.pop %v3784
        %v3786 = vmul.f32 %v3483, 1.442695
        %v3787 = vpow.pop %v3786
        %v3788 = vmul.f32 %v3484, 1.442695
        %v3789 = vpow.pop %v3788
        %v3790 = vmul.f32 %v3485, 1.442695
        %v3791 = vpow.pop %v3790
        %v3792 = vmul.f32 %v3486, 1.442695
        %v3793 = vpow.pop %v3792
        %v3794 = vmul.f32 %v3487, 1.442695
        %v3795 = vpow.pop %v3794
        %v3796 = vmul.f32 %v3488, 1.442695
        %v3797 = vpow.pop %v3796
        %v3798 = vmul.f32 %v3489, 1.442695
        %v3799 = vpow.pop %v3798
        %v3800 = vmul.f32 %v3490, 1.442695
        %v3801 = vpow.pop %v3800
        %v3802 = vmul.f32 %v3491, 1.442695
        %v3803 = vpow.pop %v3802
        %v3804 = vmul.f32 %v3492, 1.442695
        %v3805 = vpow.pop %v3804
        %v3806 = vmul.f32 %v3493, 1.442695
        %v3807 = vpow.pop %v3806
        %v3808 = vmul.f32 %v3494, 1.442695
        %v3809 = vpow.pop %v3808
        %v3810 = vmul.f32 %v3495, 1.442695
        %v3811 = vpow.pop %v3810
        %v3812 = vmul.f32 %v3496, 1.442695
        %v3813 = vpow.pop %v3812
        %v3814 = vmul.f32 %v3497, 1.442695
        %v3815 = vpow.pop %v3814
        %v3816 = vmul.f32 %v3498, 1.442695
        %v3817 = vpow.pop %v3816
        %v3818 = vmul.f32 %v3499, 1.442695
        %v3819 = vpow.pop %v3818
        %v3820 = vmul.f32 %v3500, 1.442695
        %v3821 = vpow.pop %v3820
        %v3822 = vmul.f32 %v3501, 1.442695
        %v3823 = vpow.pop %v3822
        %v3824 = vmul.f32 %v3502, 1.442695
        %v3825 = vpow.pop %v3824
        %v3826 = vmul.f32 %v3503, 1.442695
        %v3827 = vpow.pop %v3826
        %v3828 = vmul.f32 %v3504, 1.442695
        %v3829 = vpow.pop %v3828
        %v3830 = vmul.f32 %v3505, 1.442695
        %v3831 = vpow.pop %v3830
        %v3832 = vmul.f32 %v3506, 1.442695
        %v3833 = vpow.pop %v3832
        %v3834 = vmul.f32 %v3507, 1.442695
        %v3835 = vpow.pop %v3834
        %v3836 = vmul.f32 %v3508, 1.442695
        %v3837 = vpow.pop %v3836
        %v3838 = vmul.f32 %v3509, 1.442695
        %v3839 = vpow.pop %v3838
        %v3840 = vmul.f32 %v3510, 1.442695
        %v3841 = vpow.pop %v3840
        %v3842 = vmul.f32 %v3511, 1.442695
        %v3843 = vpow.pop %v3842
        %v3844 = vmul.f32 %v3512, 1.442695
        %v3845 = vpow.pop %v3844
        %v3846 = vmul.f32 %v3513, 1.442695
        %v3847 = vpow.pop %v3846
        %v3848 = vmul.f32 %v3514, 1.442695
        %v3849 = vpow.pop %v3848
        %v3850 = vmul.f32 %v3515, 1.442695
        %v3851 = vpow.pop %v3850
        %v3852 = vmul.f32 %v3516, 1.442695
        %v3853 = vpow.pop %v3852
        %v3854 = vmul.f32 %v3517, 1.442695
        %v3855 = vpow.pop %v3854
        %v3856 = vmul.f32 %v3518, 1.442695
        %v3857 = vpow.pop %v3856
        %v3858 = vmul.f32 %v3519, 1.442695
        %v3859 = vpow.pop %v3858
        %v3860 = vmul.f32 %v3520, 1.442695
        %v3861 = vpow.pop %v3860
        %v3862 = vmul.f32 %v3521, 1.442695
        %v3863 = vpow.pop %v3862
        %v3864 = vmul.f32 %v3522, 1.442695
        %v3865 = vpow.pop %v3864
        %v3866 = vmul.f32 %v3523, 1.442695
        %v3867 = vpow.pop %v3866
        %v3868 = vmul.f32 %v3524, 1.442695
        %v3869 = vpow.pop %v3868
        %v3870 = vmul.f32 %v3525, 1.442695
        %v3871 = vpow.pop %v3870
        %v3872 = vmul.f32 %v3526, 1.442695
        %v3873 = vpow.pop %v3872
        %v3874 = vmul.f32 %v3527, 1.442695
        %v3875 = vpow.pop %v3874
        %v3876 = vmul.f32 %v3528, 1.442695
        %v3877 = vpow.pop %v3876
        %v3878 = vmul.f32 %v3529, 1.442695
        %v3879 = vpow.pop %v3878
        %v3880 = vmul.f32 %v3530, 1.442695
        %v3881 = vpow.pop %v3880
        %v3882 = vmul.f32 %v3531, 1.442695
        %v3883 = vpow.pop %v3882
        %v3884 = vmul.f32 %v3532, 1.442695
        %v3885 = vpow.pop %v3884
        %v3886 = vmul.f32 %v3533, 1.442695
        %v3887 = vpow.pop %v3886
        %v3888 = vmul.f32 %v3534, 1.442695
        %v3889 = vpow.pop %v3888
        %v3890 = vmul.f32 %v3535, 1.442695
        %v3891 = vpow.pop %v3890
        %v3892 = vmul.f32 %v3536, 1.442695
        %v3893 = vpow.pop %v3892
        %v3894 = vmul.f32 %v3537, 1.442695
        %v3895 = vpow.pop %v3894
        %v3896 = vmul.f32 %v3538, 1.442695
        %v3897 = vpow.pop %v3896
        %v3898 = vmul.f32 %v3539, 1.442695
        %v3899 = vpow.pop %v3898
        %v3900 = vmul.f32 %v3540, 1.442695
        %v3901 = vpow.pop %v3900
        %v3902 = vmul.f32 %v3541, 1.442695
        %v3903 = vpow.pop %v3902
        %v3904 = vmul.f32 %v3542, 1.442695
        %v3905 = vpow.pop %v3904
        %v3906 = vmul.f32 %v3543, 1.442695
        %v3907 = vpow.pop %v3906
        %v3908 = vmul.f32 %v3544, 1.442695
        %v3909 = vpow.pop %v3908
        %v3910 = vmul.f32 %v3545, 1.442695
        %v3911 = vpow.pop %v3910
        %v3912 = vmul.f32 %v3546, 1.442695
        %v3913 = vpow.pop %v3912
        %v3914 = vmul.f32 %v3547, 1.442695
        %v3915 = vpow.pop %v3914
        %v3916 = vmul.f32 %v3548, 1.442695
        %v3917 = vpow.pop %v3916
        %v3918 = vmul.f32 %v3549, 1.442695
        %v3919 = vpow.pop %v3918
        %v3920 = vmul.f32 %v3550, 1.442695
        %v3921 = vpow.pop %v3920
        %v3922 = vmul.f32 %v3551, 1.442695
        %v3923 = vpow.pop %v3922
        %v3924 = vmul.f32 %v3552, 1.442695
        %v3925 = vpow.pop %v3924
        %v3926 = vmul.f32 %v3553, 1.442695
        %v3927 = vpow.pop %v3926
        %v3928 = vmul.f32 %v3554, 1.442695
        %v3929 = vpow.pop %v3928
        %v3930 = vmul.f32 %v3555, 1.442695
        %v3931 = vpow.pop %v3930
        %v3932 = vmul.f32 %v3556, 1.442695
        %v3933 = vpow.pop %v3932
        %v3934 = vmul.f32 %v3557, 1.442695
        %v3935 = vpow.pop %v3934
        %v3936 = vmul.f32 %v3558, 1.442695
        %v3937 = vpow.pop %v3936
        %v3938 = vmul.f32 %v3559, 1.442695
        %v3939 = vpow.pop %v3938
        %v3940 = vmul.f32 %v3560, 1.442695
        %v3941 = vpow.pop %v3940
        %v3942 = vmul.f32 %v3561, 1.442695
        %v3943 = vpow.pop %v3942
        %v3944 = vmul.f32 %v3562, 1.442695
        %v3945 = vpow.pop %v3944
        %v3946 = vmul.f32 %v3563, 1.442695
        %v3947 = vpow.pop %v3946
        %v3948 = vadd.f32 %v3565, 1.0
        %v3949 = vadd.f32 %v3567, 1.0
        %v3950 = vadd.f32 %v3569, 1.0
        %v3951 = vadd.f32 %v3571, 1.0
        %v3952 = vadd.f32 %v3573, 1.0
        %v3953 = vadd.f32 %v3575, 1.0
        %v3954 = vadd.f32 %v3577, 1.0
        %v3955 = vadd.f32 %v3579, 1.0
        %v3956 = vadd.f32 %v3581, 1.0
        %v3957 = vadd.f32 %v3583, 1.0
        %v3958 = vadd.f32 %v3585, 1.0
        %v3959 = vadd.f32 %v3587, 1.0
        %v3960 = vadd.f32 %v3589, 1.0
        %v3961 = vadd.f32 %v3591, 1.0
        %v3962 = vadd.f32 %v3593, 1.0
        %v3963 = vadd.f32 %v3595, 1.0
        %v3964 = vadd.f32 %v3597, 1.0
        %v3965 = vadd.f32 %v3599, 1.0
        %v3966 = vadd.f32 %v3601, 1.0
        %v3967 = vadd.f32 %v3603, 1.0
        %v3968 = vadd.f32 %v3605, 1.0
        %v3969 = vadd.f32 %v3607, 1.0
        %v3970 = vadd.f32 %v3609, 1.0
        %v3971 = vadd.f32 %v3611, 1.0
        %v3972 = vadd.f32 %v3613, 1.0
        %v3973 = vadd.f32 %v3615, 1.0
        %v3974 = vadd.f32 %v3617, 1.0
        %v3975 = vadd.f32 %v3619, 1.0
        %v3976 = vadd.f32 %v3621, 1.0
        %v3977 = vadd.f32 %v3623, 1.0
        %v3978 = vadd.f32 %v3625, 1.0
        %v3979 = vadd.f32 %v3627, 1.0
        %v3980 = vadd.f32 %v3629, 1.0
        %v3981 = vadd.f32 %v3631, 1.0
        %v3982 = vadd.f32 %v3633, 1.0
        %v3983 = vadd.f32 %v3635, 1.0
        %v3984 = vadd.f32 %v3637, 1.0
        %v3985 = vadd.f32 %v3639, 1.0
        %v3986 = vadd.f32 %v3641, 1.0
        %v3987 = vadd.f32 %v3643, 1.0
        %v3988 = vadd.f32 %v3645, 1.0
        %v3989 = vadd.f32 %v3647, 1.0
        %v3990 = vadd.f32 %v3649, 1.0
        %v3991 = vadd.f32 %v3651, 1.0
        %v3992 = vadd.f32 %v3653, 1.0
        %v3993 = vadd.f32 %v3655, 1.0
        %v3994 = vadd.f32 %v3657, 1.0
        %v3995 = vadd.f32 %v3659, 1.0
        %v3996 = vadd.f32 %v3661, 1.0
        %v3997 = vadd.f32 %v3663, 1.0
        %v3998 = vadd.f32 %v3665, 1.0
        %v3999 = vadd.f32 %v3667, 1.0
        %v4000 = vadd.f32 %v3669, 1.0
        %v4001 = vadd.f32 %v3671, 1.0
        %v4002 = vadd.f32 %v3673, 1.0
        %v4003 = vadd.f32 %v3675, 1.0
        %v4004 = vadd.f32 %v3677, 1.0
        %v4005 = vadd.f32 %v3679, 1.0
        %v4006 = vadd.f32 %v3681, 1.0
        %v4007 = vadd.f32 %v3683, 1.0
        %v4008 = vadd.f32 %v3685, 1.0
        %v4009 = vadd.f32 %v3687, 1.0
        %v4010 = vadd.f32 %v3689, 1.0
        %v4011 = vadd.f32 %v3691, 1.0
        %v4012 = vadd.f32 %v3693, 1.0
        %v4013 = vadd.f32 %v3695, 1.0
        %v4014 = vadd.f32 %v3697, 1.0
        %v4015 = vadd.f32 %v3699, 1.0
        %v4016 = vadd.f32 %v3701, 1.0
        %v4017 = vadd.f32 %v3703, 1.0
        %v4018 = vadd.f32 %v3705, 1.0
        %v4019 = vadd.f32 %v3707, 1.0
        %v4020 = vadd.f32 %v3709, 1.0
        %v4021 = vadd.f32 %v3711, 1.0
        %v4022 = vadd.f32 %v3713, 1.0
        %v4023 = vadd.f32 %v3715, 1.0
        %v4024 = vadd.f32 %v3717, 1.0
        %v4025 = vadd.f32 %v3719, 1.0
        %v4026 = vadd.f32 %v3721, 1.0
        %v4027 = vadd.f32 %v3723, 1.0
        %v4028 = vadd.f32 %v3725, 1.0
        %v4029 = vadd.f32 %v3727, 1.0
        %v4030 = vadd.f32 %v3729, 1.0
        %v4031 = vadd.f32 %v3731, 1.0
        %v4032 = vadd.f32 %v3733, 1.0
        %v4033 = vadd.f32 %v3735, 1.0
        %v4034 = vadd.f32 %v3737, 1.0
        %v4035 = vadd.f32 %v3739, 1.0
        %v4036 = vadd.f32 %v3741, 1.0
        %v4037 = vadd.f32 %v3743, 1.0
        %v4038 = vadd.f32 %v3745, 1.0
        %v4039 = vadd.f32 %v3747, 1.0
        %v4040 = vadd.f32 %v3749, 1.0
        %v4041 = vadd.f32 %v3751, 1.0
        %v4042 = vadd.f32 %v3753, 1.0
        %v4043 = vadd.f32 %v3755, 1.0
        %v4044 = vadd.f32 %v3757, 1.0
        %v4045 = vadd.f32 %v3759, 1.0
        %v4046 = vadd.f32 %v3761, 1.0
        %v4047 = vadd.f32 %v3763, 1.0
        %v4048 = vadd.f32 %v3765, 1.0
        %v4049 = vadd.f32 %v3767, 1.0
        %v4050 = vadd.f32 %v3769, 1.0
        %v4051 = vadd.f32 %v3771, 1.0
        %v4052 = vadd.f32 %v3773, 1.0
        %v4053 = vadd.f32 %v3775, 1.0
        %v4054 = vadd.f32 %v3777, 1.0
        %v4055 = vadd.f32 %v3779, 1.0
        %v4056 = vadd.f32 %v3781, 1.0
        %v4057 = vadd.f32 %v3783, 1.0
        %v4058 = vadd.f32 %v3785, 1.0
        %v4059 = vadd.f32 %v3787, 1.0
        %v4060 = vadd.f32 %v3789, 1.0
        %v4061 = vadd.f32 %v3791, 1.0
        %v4062 = vadd.f32 %v3793, 1.0
        %v4063 = vadd.f32 %v3795, 1.0
        %v4064 = vadd.f32 %v3797, 1.0
        %v4065 = vadd.f32 %v3799, 1.0
        %v4066 = vadd.f32 %v3801, 1.0
        %v4067 = vadd.f32 %v3803, 1.0
        %v4068 = vadd.f32 %v3805, 1.0
        %v4069 = vadd.f32 %v3807, 1.0
        %v4070 = vadd.f32 %v3809, 1.0
        %v4071 = vadd.f32 %v3811, 1.0
        %v4072 = vadd.f32 %v3813, 1.0
        %v4073 = vadd.f32 %v3815, 1.0
        %v4074 = vadd.f32 %v3817, 1.0
        %v4075 = vadd.f32 %v3819, 1.0
        %v4076 = vadd.f32 %v3821, 1.0
        %v4077 = vadd.f32 %v3823, 1.0
        %v4078 = vadd.f32 %v3825, 1.0
        %v4079 = vadd.f32 %v3827, 1.0
        %v4080 = vadd.f32 %v3829, 1.0
        %v4081 = vadd.f32 %v3831, 1.0
        %v4082 = vadd.f32 %v3833, 1.0
        %v4083 = vadd.f32 %v3835, 1.0
        %v4084 = vadd.f32 %v3837, 1.0
        %v4085 = vadd.f32 %v3839, 1.0
        %v4086 = vadd.f32 %v3841, 1.0
        %v4087 = vadd.f32 %v3843, 1.0
        %v4088 = vadd.f32 %v3845, 1.0
        %v4089 = vadd.f32 %v3847, 1.0
        %v4090 = vadd.f32 %v3849, 1.0
        %v4091 = vadd.f32 %v3851, 1.0
        %v4092 = vadd.f32 %v3853, 1.0
        %v4093 = vadd.f32 %v3855, 1.0
        %v4094 = vadd.f32 %v3857, 1.0
        %v4095 = vadd.f32 %v3859, 1.0
        %v4096 = vadd.f32 %v3861, 1.0
        %v4097 = vadd.f32 %v3863, 1.0
        %v4098 = vadd.f32 %v3865, 1.0
        %v4099 = vadd.f32 %v3867, 1.0
        %v4100 = vadd.f32 %v3869, 1.0
        %v4101 = vadd.f32 %v3871, 1.0
        %v4102 = vadd.f32 %v3873, 1.0
        %v4103 = vadd.f32 %v3875, 1.0
        %v4104 = vadd.f32 %v3877, 1.0
        %v4105 = vadd.f32 %v3879, 1.0
        %v4106 = vadd.f32 %v3881, 1.0
        %v4107 = vadd.f32 %v3883, 1.0
        %v4108 = vadd.f32 %v3885, 1.0
        %v4109 = vadd.f32 %v3887, 1.0
        %v4110 = vadd.f32 %v3889, 1.0
        %v4111 = vadd.f32 %v3891, 1.0
        %v4112 = vadd.f32 %v3893, 1.0
        %v4113 = vadd.f32 %v3895, 1.0
        %v4114 = vadd.f32 %v3897, 1.0
        %v4115 = vadd.f32 %v3899, 1.0
        %v4116 = vadd.f32 %v3901, 1.0
        %v4117 = vadd.f32 %v3903, 1.0
        %v4118 = vadd.f32 %v3905, 1.0
        %v4119 = vadd.f32 %v3907, 1.0
        %v4120 = vadd.f32 %v3909, 1.0
        %v4121 = vadd.f32 %v3911, 1.0
        %v4122 = vadd.f32 %v3913, 1.0
        %v4123 = vadd.f32 %v3915, 1.0
        %v4124 = vadd.f32 %v3917, 1.0
        %v4125 = vadd.f32 %v3919, 1.0
        %v4126 = vadd.f32 %v3921, 1.0
        %v4127 = vadd.f32 %v3923, 1.0
        %v4128 = vadd.f32 %v3925, 1.0
        %v4129 = vadd.f32 %v3927, 1.0
        %v4130 = vadd.f32 %v3929, 1.0
        %v4131 = vadd.f32 %v3931, 1.0
        %v4132 = vadd.f32 %v3933, 1.0
        %v4133 = vadd.f32 %v3935, 1.0
        %v4134 = vadd.f32 %v3937, 1.0
        %v4135 = vadd.f32 %v3939, 1.0
        %v4136 = vadd.f32 %v3941, 1.0
        %v4137 = vadd.f32 %v3943, 1.0
        %v4138 = vadd.f32 %v3945, 1.0
        %v4139 = vadd.f32 %v3947, 1.0
        %v4140 = vrcp.pop %v3948
        %v4141 = vmul.f32 1.0, %v4140
        %v4142 = vrcp.pop %v3949
        %v4143 = vmul.f32 1.0, %v4142
        %v4144 = vrcp.pop %v3950
        %v4145 = vmul.f32 1.0, %v4144
        %v4146 = vrcp.pop %v3951
        %v4147 = vmul.f32 1.0, %v4146
        %v4148 = vrcp.pop %v3952
        %v4149 = vmul.f32 1.0, %v4148
        %v4150 = vrcp.pop %v3953
        %v4151 = vmul.f32 1.0, %v4150
        %v4152 = vrcp.pop %v3954
        %v4153 = vmul.f32 1.0, %v4152
        %v4154 = vrcp.pop %v3955
        %v4155 = vmul.f32 1.0, %v4154
        %v4156 = vrcp.pop %v3956
        %v4157 = vmul.f32 1.0, %v4156
        %v4158 = vrcp.pop %v3957
        %v4159 = vmul.f32 1.0, %v4158
        %v4160 = vrcp.pop %v3958
        %v4161 = vmul.f32 1.0, %v4160
        %v4162 = vrcp.pop %v3959
        %v4163 = vmul.f32 1.0, %v4162
        %v4164 = vrcp.pop %v3960
        %v4165 = vmul.f32 1.0, %v4164
        %v4166 = vrcp.pop %v3961
        %v4167 = vmul.f32 1.0, %v4166
        %v4168 = vrcp.pop %v3962
        %v4169 = vmul.f32 1.0, %v4168
        %v4170 = vrcp.pop %v3963
        %v4171 = vmul.f32 1.0, %v4170
        %v4172 = vrcp.pop %v3964
        %v4173 = vmul.f32 1.0, %v4172
        %v4174 = vrcp.pop %v3965
        %v4175 = vmul.f32 1.0, %v4174
        %v4176 = vrcp.pop %v3966
        %v4177 = vmul.f32 1.0, %v4176
        %v4178 = vrcp.pop %v3967
        %v4179 = vmul.f32 1.0, %v4178
        %v4180 = vrcp.pop %v3968
        %v4181 = vmul.f32 1.0, %v4180
        %v4182 = vrcp.pop %v3969
        %v4183 = vmul.f32 1.0, %v4182
        %v4184 = vrcp.pop %v3970
        %v4185 = vmul.f32 1.0, %v4184
        %v4186 = vrcp.pop %v3971
        %v4187 = vmul.f32 1.0, %v4186
        %v4188 = vrcp.pop %v3972
        %v4189 = vmul.f32 1.0, %v4188
        %v4190 = vrcp.pop %v3973
        %v4191 = vmul.f32 1.0, %v4190
        %v4192 = vrcp.pop %v3974
        %v4193 = vmul.f32 1.0, %v4192
        %v4194 = vrcp.pop %v3975
        %v4195 = vmul.f32 1.0, %v4194
        %v4196 = vrcp.pop %v3976
        %v4197 = vmul.f32 1.0, %v4196
        %v4198 = vrcp.pop %v3977
        %v4199 = vmul.f32 1.0, %v4198
        %v4200 = vrcp.pop %v3978
        %v4201 = vmul.f32 1.0, %v4200
        %v4202 = vrcp.pop %v3979
        %v4203 = vmul.f32 1.0, %v4202
        %v4204 = vrcp.pop %v3980
        %v4205 = vmul.f32 1.0, %v4204
        %v4206 = vrcp.pop %v3981
        %v4207 = vmul.f32 1.0, %v4206
        %v4208 = vrcp.pop %v3982
        %v4209 = vmul.f32 1.0, %v4208
        %v4210 = vrcp.pop %v3983
        %v4211 = vmul.f32 1.0, %v4210
        %v4212 = vrcp.pop %v3984
        %v4213 = vmul.f32 1.0, %v4212
        %v4214 = vrcp.pop %v3985
        %v4215 = vmul.f32 1.0, %v4214
        %v4216 = vrcp.pop %v3986
        %v4217 = vmul.f32 1.0, %v4216
        %v4218 = vrcp.pop %v3987
        %v4219 = vmul.f32 1.0, %v4218
        %v4220 = vrcp.pop %v3988
        %v4221 = vmul.f32 1.0, %v4220
        %v4222 = vrcp.pop %v3989
        %v4223 = vmul.f32 1.0, %v4222
        %v4224 = vrcp.pop %v3990
        %v4225 = vmul.f32 1.0, %v4224
        %v4226 = vrcp.pop %v3991
        %v4227 = vmul.f32 1.0, %v4226
        %v4228 = vrcp.pop %v3992
        %v4229 = vmul.f32 1.0, %v4228
        %v4230 = vrcp.pop %v3993
        %v4231 = vmul.f32 1.0, %v4230
        %v4232 = vrcp.pop %v3994
        %v4233 = vmul.f32 1.0, %v4232
        %v4234 = vrcp.pop %v3995
        %v4235 = vmul.f32 1.0, %v4234
        %v4236 = vrcp.pop %v3996
        %v4237 = vmul.f32 1.0, %v4236
        %v4238 = vrcp.pop %v3997
        %v4239 = vmul.f32 1.0, %v4238
        %v4240 = vrcp.pop %v3998
        %v4241 = vmul.f32 1.0, %v4240
        %v4242 = vrcp.pop %v3999
        %v4243 = vmul.f32 1.0, %v4242
        %v4244 = vrcp.pop %v4000
        %v4245 = vmul.f32 1.0, %v4244
        %v4246 = vrcp.pop %v4001
        %v4247 = vmul.f32 1.0, %v4246
        %v4248 = vrcp.pop %v4002
        %v4249 = vmul.f32 1.0, %v4248
        %v4250 = vrcp.pop %v4003
        %v4251 = vmul.f32 1.0, %v4250
        %v4252 = vrcp.pop %v4004
        %v4253 = vmul.f32 1.0, %v4252
        %v4254 = vrcp.pop %v4005
        %v4255 = vmul.f32 1.0, %v4254
        %v4256 = vrcp.pop %v4006
        %v4257 = vmul.f32 1.0, %v4256
        %v4258 = vrcp.pop %v4007
        %v4259 = vmul.f32 1.0, %v4258
        %v4260 = vrcp.pop %v4008
        %v4261 = vmul.f32 1.0, %v4260
        %v4262 = vrcp.pop %v4009
        %v4263 = vmul.f32 1.0, %v4262
        %v4264 = vrcp.pop %v4010
        %v4265 = vmul.f32 1.0, %v4264
        %v4266 = vrcp.pop %v4011
        %v4267 = vmul.f32 1.0, %v4266
        %v4268 = vrcp.pop %v4012
        %v4269 = vmul.f32 1.0, %v4268
        %v4270 = vrcp.pop %v4013
        %v4271 = vmul.f32 1.0, %v4270
        %v4272 = vrcp.pop %v4014
        %v4273 = vmul.f32 1.0, %v4272
        %v4274 = vrcp.pop %v4015
        %v4275 = vmul.f32 1.0, %v4274
        %v4276 = vrcp.pop %v4016
        %v4277 = vmul.f32 1.0, %v4276
        %v4278 = vrcp.pop %v4017
        %v4279 = vmul.f32 1.0, %v4278
        %v4280 = vrcp.pop %v4018
        %v4281 = vmul.f32 1.0, %v4280
        %v4282 = vrcp.pop %v4019
        %v4283 = vmul.f32 1.0, %v4282
        %v4284 = vrcp.pop %v4020
        %v4285 = vmul.f32 1.0, %v4284
        %v4286 = vrcp.pop %v4021
        %v4287 = vmul.f32 1.0, %v4286
        %v4288 = vrcp.pop %v4022
        %v4289 = vmul.f32 1.0, %v4288
        %v4290 = vrcp.pop %v4023
        %v4291 = vmul.f32 1.0, %v4290
        %v4292 = vrcp.pop %v4024
        %v4293 = vmul.f32 1.0, %v4292
        %v4294 = vrcp.pop %v4025
        %v4295 = vmul.f32 1.0, %v4294
        %v4296 = vrcp.pop %v4026
        %v4297 = vmul.f32 1.0, %v4296
        %v4298 = vrcp.pop %v4027
        %v4299 = vmul.f32 1.0, %v4298
        %v4300 = vrcp.pop %v4028
        %v4301 = vmul.f32 1.0, %v4300
        %v4302 = vrcp.pop %v4029
        %v4303 = vmul.f32 1.0, %v4302
        %v4304 = vrcp.pop %v4030
        %v4305 = vmul.f32 1.0, %v4304
        %v4306 = vrcp.pop %v4031
        %v4307 = vmul.f32 1.0, %v4306
        %v4308 = vrcp.pop %v4032
        %v4309 = vmul.f32 1.0, %v4308
        %v4310 = vrcp.pop %v4033
        %v4311 = vmul.f32 1.0, %v4310
        %v4312 = vrcp.pop %v4034
        %v4313 = vmul.f32 1.0, %v4312
        %v4314 = vrcp.pop %v4035
        %v4315 = vmul.f32 1.0, %v4314
        %v4316 = vrcp.pop %v4036
        %v4317 = vmul.f32 1.0, %v4316
        %v4318 = vrcp.pop %v4037
        %v4319 = vmul.f32 1.0, %v4318
        %v4320 = vrcp.pop %v4038
        %v4321 = vmul.f32 1.0, %v4320
        %v4322 = vrcp.pop %v4039
        %v4323 = vmul.f32 1.0, %v4322
        %v4324 = vrcp.pop %v4040
        %v4325 = vmul.f32 1.0, %v4324
        %v4326 = vrcp.pop %v4041
        %v4327 = vmul.f32 1.0, %v4326
        %v4328 = vrcp.pop %v4042
        %v4329 = vmul.f32 1.0, %v4328
        %v4330 = vrcp.pop %v4043
        %v4331 = vmul.f32 1.0, %v4330
        %v4332 = vrcp.pop %v4044
        %v4333 = vmul.f32 1.0, %v4332
        %v4334 = vrcp.pop %v4045
        %v4335 = vmul.f32 1.0, %v4334
        %v4336 = vrcp.pop %v4046
        %v4337 = vmul.f32 1.0, %v4336
        %v4338 = vrcp.pop %v4047
        %v4339 = vmul.f32 1.0, %v4338
        %v4340 = vrcp.pop %v4048
        %v4341 = vmul.f32 1.0, %v4340
        %v4342 = vrcp.pop %v4049
        %v4343 = vmul.f32 1.0, %v4342
        %v4344 = vrcp.pop %v4050
        %v4345 = vmul.f32 1.0, %v4344
        %v4346 = vrcp.pop %v4051
        %v4347 = vmul.f32 1.0, %v4346
        %v4348 = vrcp.pop %v4052
        %v4349 = vmul.f32 1.0, %v4348
        %v4350 = vrcp.pop %v4053
        %v4351 = vmul.f32 1.0, %v4350
        %v4352 = vrcp.pop %v4054
        %v4353 = vmul.f32 1.0, %v4352
        %v4354 = vrcp.pop %v4055
        %v4355 = vmul.f32 1.0, %v4354
        %v4356 = vrcp.pop %v4056
        %v4357 = vmul.f32 1.0, %v4356
        %v4358 = vrcp.pop %v4057
        %v4359 = vmul.f32 1.0, %v4358
        %v4360 = vrcp.pop %v4058
        %v4361 = vmul.f32 1.0, %v4360
        %v4362 = vrcp.pop %v4059
        %v4363 = vmul.f32 1.0, %v4362
        %v4364 = vrcp.pop %v4060
        %v4365 = vmul.f32 1.0, %v4364
        %v4366 = vrcp.pop %v4061
        %v4367 = vmul.f32 1.0, %v4366
        %v4368 = vrcp.pop %v4062
        %v4369 = vmul.f32 1.0, %v4368
        %v4370 = vrcp.pop %v4063
        %v4371 = vmul.f32 1.0, %v4370
        %v4372 = vrcp.pop %v4064
        %v4373 = vmul.f32 1.0, %v4372
        %v4374 = vrcp.pop %v4065
        %v4375 = vmul.f32 1.0, %v4374
        %v4376 = vrcp.pop %v4066
        %v4377 = vmul.f32 1.0, %v4376
        %v4378 = vrcp.pop %v4067
        %v4379 = vmul.f32 1.0, %v4378
        %v4380 = vrcp.pop %v4068
        %v4381 = vmul.f32 1.0, %v4380
        %v4382 = vrcp.pop %v4069
        %v4383 = vmul.f32 1.0, %v4382
        %v4384 = vrcp.pop %v4070
        %v4385 = vmul.f32 1.0, %v4384
        %v4386 = vrcp.pop %v4071
        %v4387 = vmul.f32 1.0, %v4386
        %v4388 = vrcp.pop %v4072
        %v4389 = vmul.f32 1.0, %v4388
        %v4390 = vrcp.pop %v4073
        %v4391 = vmul.f32 1.0, %v4390
        %v4392 = vrcp.pop %v4074
        %v4393 = vmul.f32 1.0, %v4392
        %v4394 = vrcp.pop %v4075
        %v4395 = vmul.f32 1.0, %v4394
        %v4396 = vrcp.pop %v4076
        %v4397 = vmul.f32 1.0, %v4396
        %v4398 = vrcp.pop %v4077
        %v4399 = vmul.f32 1.0, %v4398
        %v4400 = vrcp.pop %v4078
        %v4401 = vmul.f32 1.0, %v4400
        %v4402 = vrcp.pop %v4079
        %v4403 = vmul.f32 1.0, %v4402
        %v4404 = vrcp.pop %v4080
        %v4405 = vmul.f32 1.0, %v4404
        %v4406 = vrcp.pop %v4081
        %v4407 = vmul.f32 1.0, %v4406
        %v4408 = vrcp.pop %v4082
        %v4409 = vmul.f32 1.0, %v4408
        %v4410 = vrcp.pop %v4083
        %v4411 = vmul.f32 1.0, %v4410
        %v4412 = vrcp.pop %v4084
        %v4413 = vmul.f32 1.0, %v4412
        %v4414 = vrcp.pop %v4085
        %v4415 = vmul.f32 1.0, %v4414
        %v4416 = vrcp.pop %v4086
        %v4417 = vmul.f32 1.0, %v4416
        %v4418 = vrcp.pop %v4087
        %v4419 = vmul.f32 1.0, %v4418
        %v4420 = vrcp.pop %v4088
        %v4421 = vmul.f32 1.0, %v4420
        %v4422 = vrcp.pop %v4089
        %v4423 = vmul.f32 1.0, %v4422
        %v4424 = vrcp.pop %v4090
        %v4425 = vmul.f32 1.0, %v4424
        %v4426 = vrcp.pop %v4091
        %v4427 = vmul.f32 1.0, %v4426
        %v4428 = vrcp.pop %v4092
        %v4429 = vmul.f32 1.0, %v4428
        %v4430 = vrcp.pop %v4093
        %v4431 = vmul.f32 1.0, %v4430
        %v4432 = vrcp.pop %v4094
        %v4433 = vmul.f32 1.0, %v4432
        %v4434 = vrcp.pop %v4095
        %v4435 = vmul.f32 1.0, %v4434
        %v4436 = vrcp.pop %v4096
        %v4437 = vmul.f32 1.0, %v4436
        %v4438 = vrcp.pop %v4097
        %v4439 = vmul.f32 1.0, %v4438
        %v4440 = vrcp.pop %v4098
        %v4441 = vmul.f32 1.0, %v4440
        %v4442 = vrcp.pop %v4099
        %v4443 = vmul.f32 1.0, %v4442
        %v4444 = vrcp.pop %v4100
        %v4445 = vmul.f32 1.0, %v4444
        %v4446 = vrcp.pop %v4101
        %v4447 = vmul.f32 1.0, %v4446
        %v4448 = vrcp.pop %v4102
        %v4449 = vmul.f32 1.0, %v4448
        %v4450 = vrcp.pop %v4103
        %v4451 = vmul.f32 1.0, %v4450
        %v4452 = vrcp.pop %v4104
        %v4453 = vmul.f32 1.0, %v4452
        %v4454 = vrcp.pop %v4105
        %v4455 = vmul.f32 1.0, %v4454
        %v4456 = vrcp.pop %v4106
        %v4457 = vmul.f32 1.0, %v4456
        %v4458 = vrcp.pop %v4107
        %v4459 = vmul.f32 1.0, %v4458
        %v4460 = vrcp.pop %v4108
        %v4461 = vmul.f32 1.0, %v4460
        %v4462 = vrcp.pop %v4109
        %v4463 = vmul.f32 1.0, %v4462
        %v4464 = vrcp.pop %v4110
        %v4465 = vmul.f32 1.0, %v4464
        %v4466 = vrcp.pop %v4111
        %v4467 = vmul.f32 1.0, %v4466
        %v4468 = vrcp.pop %v4112
        %v4469 = vmul.f32 1.0, %v4468
        %v4470 = vrcp.pop %v4113
        %v4471 = vmul.f32 1.0, %v4470
        %v4472 = vrcp.pop %v4114
        %v4473 = vmul.f32 1.0, %v4472
        %v4474 = vrcp.pop %v4115
        %v4475 = vmul.f32 1.0, %v4474
        %v4476 = vrcp.pop %v4116
        %v4477 = vmul.f32 1.0, %v4476
        %v4478 = vrcp.pop %v4117
        %v4479 = vmul.f32 1.0, %v4478
        %v4480 = vrcp.pop %v4118
        %v4481 = vmul.f32 1.0, %v4480
        %v4482 = vrcp.pop %v4119
        %v4483 = vmul.f32 1.0, %v4482
        %v4484 = vrcp.pop %v4120
        %v4485 = vmul.f32 1.0, %v4484
        %v4486 = vrcp.pop %v4121
        %v4487 = vmul.f32 1.0, %v4486
        %v4488 = vrcp.pop %v4122
        %v4489 = vmul.f32 1.0, %v4488
        %v4490 = vrcp.pop %v4123
        %v4491 = vmul.f32 1.0, %v4490
        %v4492 = vrcp.pop %v4124
        %v4493 = vmul.f32 1.0, %v4492
        %v4494 = vrcp.pop %v4125
        %v4495 = vmul.f32 1.0, %v4494
        %v4496 = vrcp.pop %v4126
        %v4497 = vmul.f32 1.0, %v4496
        %v4498 = vrcp.pop %v4127
        %v4499 = vmul.f32 1.0, %v4498
        %v4500 = vrcp.pop %v4128
        %v4501 = vmul.f32 1.0, %v4500
        %v4502 = vrcp.pop %v4129
        %v4503 = vmul.f32 1.0, %v4502
        %v4504 = vrcp.pop %v4130
        %v4505 = vmul.f32 1.0, %v4504
        %v4506 = vrcp.pop %v4131
        %v4507 = vmul.f32 1.0, %v4506
        %v4508 = vrcp.pop %v4132
        %v4509 = vmul.f32 1.0, %v4508
        %v4510 = vrcp.pop %v4133
        %v4511 = vmul.f32 1.0, %v4510
        %v4512 = vrcp.pop %v4134
        %v4513 = vmul.f32 1.0, %v4512
        %v4514 = vrcp.pop %v4135
        %v4515 = vmul.f32 1.0, %v4514
        %v4516 = vrcp.pop %v4136
        %v4517 = vmul.f32 1.0, %v4516
        %v4518 = vrcp.pop %v4137
        %v4519 = vmul.f32 1.0, %v4518
        %v4520 = vrcp.pop %v4138
        %v4521 = vmul.f32 1.0, %v4520
        %v4522 = vrcp.pop %v4139
        %v4523 = vmul.f32 1.0, %v4522
        %v4524 = vld [vmem:[#allocation8] sm:$0x3f]
        %v4525 = vmul.f32 %v4141, %v259
        %v4526 = vmul.f32 %v4143, %v260
        %v4527 = vmul.f32 %v4145, %v261
        %v4528 = vmul.f32 %v4147, %v262
        %v4529 = vmul.f32 %v4149, %v263
        %v4530 = vmul.f32 %v4151, %v264
        %v4531 = vmul.f32 %v4153, %v265
        %v4532 = vmul.f32 %v4155, %v266
        %v4533 = vmul.f32 %v4157, %v267
        %v4534 = vmul.f32 %v4159, %v268
        %v4535 = vmul.f32 %v4161, %v269
        %v4536 = vmul.f32 %v4163, %v270
        %v4537 = vmul.f32 %v4165, %v271
        %v4538 = vmul.f32 %v4167, %v272
        %v4539 = vmul.f32 %v4169, %v273
        %v4540 = vmul.f32 %v4171, %v274
        %v4541 = vmul.f32 %v4173, %v275
        %v4542 = vmul.f32 %v4175, %v276
        %v4543 = vmul.f32 %v4177, %v277
        %v4544 = vmul.f32 %v4179, %v278
        %v4545 = vmul.f32 %v4181, %v279
        %v4546 = vmul.f32 %v4183, %v280
        %v4547 = vmul.f32 %v4185, %v281
        %v4548 = vmul.f32 %v4187, %v282
        %v4549 = vmul.f32 %v4189, %v283
        %v4550 = vmul.f32 %v4191, %v284
        %v4551 = vmul.f32 %v4193, %v285
        %v4552 = vmul.f32 %v4195, %v286
        %v4553 = vmul.f32 %v4197, %v287
        %v4554 = vmul.f32 %v4199, %v288
        %v4555 = vmul.f32 %v4201, %v289
        %v4556 = vmul.f32 %v4203, %v290
        %v4557 = vmul.f32 %v4205, %v291
        %v4558 = vmul.f32 %v4207, %v292
        %v4559 = vmul.f32 %v4209, %v293
        %v4560 = vmul.f32 %v4211, %v294
        %v4561 = vmul.f32 %v4213, %v295
        %v4562 = vmul.f32 %v4215, %v296
        %v4563 = vmul.f32 %v4217, %v297
        %v4564 = vmul.f32 %v4219, %v298
        %v4565 = vmul.f32 %v4221, %v299
        %v4566 = vmul.f32 %v4223, %v300
        %v4567 = vmul.f32 %v4225, %v301
        %v4568 = vmul.f32 %v4227, %v302
        %v4569 = vmul.f32 %v4229, %v303
        %v4570 = vmul.f32 %v4231, %v304
        %v4571 = vmul.f32 %v4233, %v305
        %v4572 = vmul.f32 %v4235, %v306
        %v4573 = vmul.f32 %v4237, %v307
        %v4574 = vmul.f32 %v4239, %v308
        %v4575 = vmul.f32 %v4241, %v309
        %v4576 = vmul.f32 %v4243, %v310
        %v4577 = vmul.f32 %v4245, %v311
        %v4578 = vmul.f32 %v4247, %v312
        %v4579 = vmul.f32 %v4249, %v313
        %v4580 = vmul.f32 %v4251, %v314
        %v4581 = vmul.f32 %v4253, %v315
        %v4582 = vmul.f32 %v4255, %v316
        %v4583 = vmul.f32 %v4257, %v317
        %v4584 = vmul.f32 %v4259, %v318
        %v4585 = vmul.f32 %v4261, %v319
        %v4586 = vmul.f32 %v4263, %v320
        %v4587 = vmul.f32 %v4265, %v321
        %v4588 = vmul.f32 %v4267, %v322
        %v4589 = vmul.f32 %v4269, %v323
        %v4590 = vmul.f32 %v4271, %v324
        %v4591 = vmul.f32 %v4273, %v325
        %v4592 = vmul.f32 %v4275, %v326
        %v4593 = vmul.f32 %v4277, %v327
        %v4594 = vmul.f32 %v4279, %v328
        %v4595 = vmul.f32 %v4281, %v329
        %v4596 = vmul.f32 %v4283, %v330
        %v4597 = vmul.f32 %v4285, %v331
        %v4598 = vmul.f32 %v4287, %v332
        %v4599 = vmul.f32 %v4289, %v333
        %v4600 = vmul.f32 %v4291, %v334
        %v4601 = vmul.f32 %v4293, %v335
        %v4602 = vmul.f32 %v4295, %v336
        %v4603 = vmul.f32 %v4297, %v337
        %v4604 = vmul.f32 %v4299, %v338
        %v4605 = vmul.f32 %v4301, %v339
        %v4606 = vmul.f32 %v4303, %v340
        %v4607 = vmul.f32 %v4305, %v341
        %v4608 = vmul.f32 %v4307, %v342
        %v4609 = vmul.f32 %v4309, %v343
        %v4610 = vmul.f32 %v4311, %v344
        %v4611 = vmul.f32 %v4313, %v345
        %v4612 = vmul.f32 %v4315, %v346
        %v4613 = vmul.f32 %v4317, %v347
        %v4614 = vmul.f32 %v4319, %v348
        %v4615 = vmul.f32 %v4321, %v349
        %v4616 = vmul.f32 %v4323, %v350
        %v4617 = vmul.f32 %v4325, %v351
        %v4618 = vmul.f32 %v4327, %v352
        %v4619 = vmul.f32 %v4329, %v353
        %v4620 = vmul.f32 %v4331, %v354
        %v4621 = vmul.f32 %v4333, %v355
        %v4622 = vmul.f32 %v4335, %v356
        %v4623 = vmul.f32 %v4337, %v357
        %v4624 = vmul.f32 %v4339, %v358
        %v4625 = vmul.f32 %v4341, %v359
        %v4626 = vmul.f32 %v4343, %v360
        %v4627 = vmul.f32 %v4345, %v361
        %v4628 = vmul.f32 %v4347, %v362
        %v4629 = vmul.f32 %v4349, %v363
        %v4630 = vmul.f32 %v4351, %v364
        %v4631 = vmul.f32 %v4353, %v365
        %v4632 = vmul.f32 %v4355, %v366
        %v4633 = vmul.f32 %v4357, %v367
        %v4634 = vmul.f32 %v4359, %v368
        %v4635 = vmul.f32 %v4361, %v369
        %v4636 = vmul.f32 %v4363, %v370
        %v4637 = vmul.f32 %v4365, %v371
        %v4638 = vmul.f32 %v4367, %v372
        %v4639 = vmul.f32 %v4369, %v373
        %v4640 = vmul.f32 %v4371, %v374
        %v4641 = vmul.f32 %v4373, %v375
        %v4642 = vmul.f32 %v4375, %v376
        %v4643 = vmul.f32 %v4377, %v377
        %v4644 = vmul.f32 %v4379, %v378
        %v4645 = vmul.f32 %v4381, %v379
        %v4646 = vmul.f32 %v4383, %v380
        %v4647 = vmul.f32 %v4385, %v381
        %v4648 = vmul.f32 %v4387, %v382
        %v4649 = vmul.f32 %v4389, %v383
        %v4650 = vmul.f32 %v4391, %v384
        %v4651 = vmul.f32 %v4393, %v385
        %v4652 = vmul.f32 %v4395, %v386
        %v4653 = vmul.f32 %v4397, %v387
        %v4654 = vmul.f32 %v4399, %v388
        %v4655 = vmul.f32 %v4401, %v389
        %v4656 = vmul.f32 %v4403, %v390
        %v4657 = vmul.f32 %v4405, %v391
        %v4658 = vmul.f32 %v4407, %v392
        %v4659 = vmul.f32 %v4409, %v393
        %v4660 = vmul.f32 %v4411, %v394
        %v4661 = vmul.f32 %v4413, %v395
        %v4662 = vmul.f32 %v4415, %v396
        %v4663 = vmul.f32 %v4417, %v397
        %v4664 = vmul.f32 %v4419, %v398
        %v4665 = vmul.f32 %v4421, %v399
        %v4666 = vmul.f32 %v4423, %v400
        %v4667 = vmul.f32 %v4425, %v401
        %v4668 = vmul.f32 %v4427, %v402
        %v4669 = vmul.f32 %v4429, %v403
        %v4670 = vmul.f32 %v4431, %v404
        %v4671 = vmul.f32 %v4433, %v405
        %v4672 = vmul.f32 %v4435, %v406
        %v4673 = vmul.f32 %v4437, %v407
        %v4674 = vmul.f32 %v4439, %v408
        %v4675 = vmul.f32 %v4441, %v409
        %v4676 = vmul.f32 %v4443, %v410
        %v4677 = vmul.f32 %v4445, %v411
        %v4678 = vmul.f32 %v4447, %v412
        %v4679 = vmul.f32 %v4449, %v413
        %v4680 = vmul.f32 %v4451, %v414
        %v4681 = vmul.f32 %v4453, %v415
        %v4682 = vmul.f32 %v4455, %v416
        %v4683 = vmul.f32 %v4457, %v417
        %v4684 = vmul.f32 %v4459, %v418
        %v4685 = vmul.f32 %v4461, %v419
        %v4686 = vmul.f32 %v4463, %v420
        %v4687 = vmul.f32 %v4465, %v421
        %v4688 = vmul.f32 %v4467, %v422
        %v4689 = vmul.f32 %v4469, %v423
        %v4690 = vmul.f32 %v4471, %v424
        %v4691 = vmul.f32 %v4473, %v425
        %v4692 = vmul.f32 %v4475, %v426
        %v4693 = vmul.f32 %v4477, %v427
        %v4694 = vmul.f32 %v4479, %v428
        %v4695 = vmul.f32 %v4481, %v429
        %v4696 = vmul.f32 %v4483, %v430
        %v4697 = vmul.f32 %v4485, %v431
        %v4698 = vmul.f32 %v4487, %v432
        %v4699 = vmul.f32 %v4489, %v433
        %v4700 = vmul.f32 %v4491, %v434
        %v4701 = vmul.f32 %v4493, %v435
        %v4702 = vmul.f32 %v4495, %v436
        %v4703 = vmul.f32 %v4497, %v437
        %v4704 = vmul.f32 %v4499, %v438
        %v4705 = vmul.f32 %v4501, %v439
        %v4706 = vmul.f32 %v4503, %v440
        %v4707 = vmul.f32 %v4505, %v441
        %v4708 = vmul.f32 %v4507, %v442
        %v4709 = vmul.f32 %v4509, %v443
        %v4710 = vmul.f32 %v4511, %v444
        %v4711 = vmul.f32 %v4513, %v445
        %v4712 = vmul.f32 %v4515, %v446
        %v4713 = vmul.f32 %v4517, %v447
        %v4714 = vmul.f32 %v4519, %v448
        %v4715 = vmul.f32 %v4521, %v449
        %v4716 = vmul.f32 %v4523, %v450
        %v4717 = vsub.f32 1.0, %v4141
        %v4718 = vsub.f32 1.0, %v4143
        %v4719 = vsub.f32 1.0, %v4145
        %v4720 = vsub.f32 1.0, %v4147
        %v4721 = vsub.f32 1.0, %v4149
        %v4722 = vsub.f32 1.0, %v4151
        %v4723 = vsub.f32 1.0, %v4153
        %v4724 = vsub.f32 1.0, %v4155
        %v4725 = vsub.f32 1.0, %v4157
        %v4726 = vsub.f32 1.0, %v4159
        %v4727 = vsub.f32 1.0, %v4161
        %v4728 = vsub.f32 1.0, %v4163
        %v4729 = vsub.f32 1.0, %v4165
        %v4730 = vsub.f32 1.0, %v4167
        %v4731 = vsub.f32 1.0, %v4169
        %v4732 = vsub.f32 1.0, %v4171
        %v4733 = vsub.f32 1.0, %v4173
        %v4734 = vsub.f32 1.0, %v4175
        %v4735 = vsub.f32 1.0, %v4177
        %v4736 = vsub.f32 1.0, %v4179
        %v4737 = vsub.f32 1.0, %v4181
        %v4738 = vsub.f32 1.0, %v4183
        %v4739 = vsub.f32 1.0, %v4185
        %v4740 = vsub.f32 1.0, %v4187
        %v4741 = vsub.f32 1.0, %v4189
        %v4742 = vsub.f32 1.0, %v4191
        %v4743 = vsub.f32 1.0, %v4193
        %v4744 = vsub.f32 1.0, %v4195
        %v4745 = vsub.f32 1.0, %v4197
        %v4746 = vsub.f32 1.0, %v4199
        %v4747 = vsub.f32 1.0, %v4201
        %v4748 = vsub.f32 1.0, %v4203
        %v4749 = vsub.f32 1.0, %v4205
        %v4750 = vsub.f32 1.0, %v4207
        %v4751 = vsub.f32 1.0, %v4209
        %v4752 = vsub.f32 1.0, %v4211
        %v4753 = vsub.f32 1.0, %v4213
        %v4754 = vsub.f32 1.0, %v4215
        %v4755 = vsub.f32 1.0, %v4217
        %v4756 = vsub.f32 1.0, %v4219
        %v4757 = vsub.f32 1.0, %v4221
        %v4758 = vsub.f32 1.0, %v4223
        %v4759 = vsub.f32 1.0, %v4225
        %v4760 = vsub.f32 1.0, %v4227
        %v4761 = vsub.f32 1.0, %v4229
        %v4762 = vsub.f32 1.0, %v4231
        %v4763 = vsub.f32 1.0, %v4233
        %v4764 = vsub.f32 1.0, %v4235
        %v4765 = vsub.f32 1.0, %v4237
        %v4766 = vsub.f32 1.0, %v4239
        %v4767 = vsub.f32 1.0, %v4241
        %v4768 = vsub.f32 1.0, %v4243
        %v4769 = vsub.f32 1.0, %v4245
        %v4770 = vsub.f32 1.0, %v4247
        %v4771 = vsub.f32 1.0, %v4249
        %v4772 = vsub.f32 1.0, %v4251
        %v4773 = vsub.f32 1.0, %v4253
        %v4774 = vsub.f32 1.0, %v4255
        %v4775 = vsub.f32 1.0, %v4257
        %v4776 = vsub.f32 1.0, %v4259
        %v4777 = vsub.f32 1.0, %v4261
        %v4778 = vsub.f32 1.0, %v4263
        %v4779 = vsub.f32 1.0, %v4265
        %v4780 = vsub.f32 1.0, %v4267
        %v4781 = vsub.f32 1.0, %v4269
        %v4782 = vsub.f32 1.0, %v4271
        %v4783 = vsub.f32 1.0, %v4273
        %v4784 = vsub.f32 1.0, %v4275
        %v4785 = vsub.f32 1.0, %v4277
        %v4786 = vsub.f32 1.0, %v4279
        %v4787 = vsub.f32 1.0, %v4281
        %v4788 = vsub.f32 1.0, %v4283
        %v4789 = vsub.f32 1.0, %v4285
        %v4790 = vsub.f32 1.0, %v4287
        %v4791 = vsub.f32 1.0, %v4289
        %v4792 = vsub.f32 1.0, %v4291
        %v4793 = vsub.f32 1.0, %v4293
        %v4794 = vsub.f32 1.0, %v4295
        %v4795 = vsub.f32 1.0, %v4297
        %v4796 = vsub.f32 1.0, %v4299
        %v4797 = vsub.f32 1.0, %v4301
        %v4798 = vsub.f32 1.0, %v4303
        %v4799 = vsub.f32 1.0, %v4305
        %v4800 = vsub.f32 1.0, %v4307
        %v4801 = vsub.f32 1.0, %v4309
        %v4802 = vsub.f32 1.0, %v4311
        %v4803 = vsub.f32 1.0, %v4313
        %v4804 = vsub.f32 1.0, %v4315
        %v4805 = vsub.f32 1.0, %v4317
        %v4806 = vsub.f32 1.0, %v4319
        %v4807 = vsub.f32 1.0, %v4321
        %v4808 = vsub.f32 1.0, %v4323
        %v4809 = vsub.f32 1.0, %v4325
        %v4810 = vsub.f32 1.0, %v4327
        %v4811 = vsub.f32 1.0, %v4329
        %v4812 = vsub.f32 1.0, %v4331
        %v4813 = vsub.f32 1.0, %v4333
        %v4814 = vsub.f32 1.0, %v4335
        %v4815 = vsub.f32 1.0, %v4337
        %v4816 = vsub.f32 1.0, %v4339
        %v4817 = vsub.f32 1.0, %v4341
        %v4818 = vsub.f32 1.0, %v4343
        %v4819 = vsub.f32 1.0, %v4345
        %v4820 = vsub.f32 1.0, %v4347
        %v4821 = vsub.f32 1.0, %v4349
        %v4822 = vsub.f32 1.0, %v4351
        %v4823 = vsub.f32 1.0, %v4353
        %v4824 = vsub.f32 1.0, %v4355
        %v4825 = vsub.f32 1.0, %v4357
        %v4826 = vsub.f32 1.0, %v4359
        %v4827 = vsub.f32 1.0, %v4361
        %v4828 = vsub.f32 1.0, %v4363
        %v4829 = vsub.f32 1.0, %v4365
        %v4830 = vsub.f32 1.0, %v4367
        %v4831 = vsub.f32 1.0, %v4369
        %v4832 = vsub.f32 1.0, %v4371
        %v4833 = vsub.f32 1.0, %v4373
        %v4834 = vsub.f32 1.0, %v4375
        %v4835 = vsub.f32 1.0, %v4377
        %v4836 = vsub.f32 1.0, %v4379
        %v4837 = vsub.f32 1.0, %v4381
        %v4838 = vsub.f32 1.0, %v4383
        %v4839 = vsub.f32 1.0, %v4385
        %v4840 = vsub.f32 1.0, %v4387
        %v4841 = vsub.f32 1.0, %v4389
        %v4842 = vsub.f32 1.0, %v4391
        %v4843 = vsub.f32 1.0, %v4393
        %v4844 = vsub.f32 1.0, %v4395
        %v4845 = vsub.f32 1.0, %v4397
        %v4846 = vsub.f32 1.0, %v4399
        %v4847 = vsub.f32 1.0, %v4401
        %v4848 = vsub.f32 1.0, %v4403
        %v4849 = vsub.f32 1.0, %v4405
        %v4850 = vsub.f32 1.0, %v4407
        %v4851 = vsub.f32 1.0, %v4409
        %v4852 = vsub.f32 1.0, %v4411
        %v4853 = vsub.f32 1.0, %v4413
        %v4854 = vsub.f32 1.0, %v4415
        %v4855 = vsub.f32 1.0, %v4417
        %v4856 = vsub.f32 1.0, %v4419
        %v4857 = vsub.f32 1.0, %v4421
        %v4858 = vsub.f32 1.0, %v4423
        %v4859 = vsub.f32 1.0, %v4425
        %v4860 = vsub.f32 1.0, %v4427
        %v4861 = vsub.f32 1.0, %v4429
        %v4862 = vsub.f32 1.0, %v4431
        %v4863 = vsub.f32 1.0, %v4433
        %v4864 = vsub.f32 1.0, %v4435
        %v4865 = vsub.f32 1.0, %v4437
        %v4866 = vsub.f32 1.0, %v4439
        %v4867 = vsub.f32 1.0, %v4441
        %v4868 = vsub.f32 1.0, %v4443
        %v4869 = vsub.f32 1.0, %v4445
        %v4870 = vsub.f32 1.0, %v4447
        %v4871 = vsub.f32 1.0, %v4449
        %v4872 = vsub.f32 1.0, %v4451
        %v4873 = vsub.f32 1.0, %v4453
        %v4874 = vsub.f32 1.0, %v4455
        %v4875 = vsub.f32 1.0, %v4457
        %v4876 = vsub.f32 1.0, %v4459
        %v4877 = vsub.f32 1.0, %v4461
        %v4878 = vsub.f32 1.0, %v4463
        %v4879 = vsub.f32 1.0, %v4465
        %v4880 = vsub.f32 1.0, %v4467
        %v4881 = vsub.f32 1.0, %v4469
        %v4882 = vsub.f32 1.0, %v4471
        %v4883 = vsub.f32 1.0, %v4473
        %v4884 = vsub.f32 1.0, %v4475
        %v4885 = vsub.f32 1.0, %v4477
        %v4886 = vsub.f32 1.0, %v4479
        %v4887 = vsub.f32 1.0, %v4481
        %v4888 = vsub.f32 1.0, %v4483
        %v4889 = vsub.f32 1.0, %v4485
        %v4890 = vsub.f32 1.0, %v4487
        %v4891 = vsub.f32 1.0, %v4489
        %v4892 = vsub.f32 1.0, %v4491
        %v4893 = vsub.f32 1.0, %v4493
        %v4894 = vsub.f32 1.0, %v4495
        %v4895 = vsub.f32 1.0, %v4497
        %v4896 = vsub.f32 1.0, %v4499
        %v4897 = vsub.f32 1.0, %v4501
        %v4898 = vsub.f32 1.0, %v4503
        %v4899 = vsub.f32 1.0, %v4505
        %v4900 = vsub.f32 1.0, %v4507
        %v4901 = vsub.f32 1.0, %v4509
        %v4902 = vsub.f32 1.0, %v4511
        %v4903 = vsub.f32 1.0, %v4513
        %v4904 = vsub.f32 1.0, %v4515
        %v4905 = vsub.f32 1.0, %v4517
        %v4906 = vsub.f32 1.0, %v4519
        %v4907 = vsub.f32 1.0, %v4521
        %v4908 = vsub.f32 1.0, %v4523
        %v4910 = vlaneseq
        %v4911 = vshrl.u32 %v4910, 7
        %v4912 = vsub.s32 0, %v4911
        %v4913 = vrot.slane %v4524, %v4912
        %v4914 = vlaneseq
        %v4915 = vshrl.u32 %v4914, 7
        %v4916 = vsub.s32 1, %v4915
        %v4917 = vrot.slane %v4524, %v4916
        %v4918 = vlaneseq
        %v4919 = vshrl.u32 %v4918, 7
        %v4920 = vsub.s32 2, %v4919
        %v4921 = vrot.slane %v4524, %v4920
        %v4922 = vlaneseq
        %v4923 = vshrl.u32 %v4922, 7
        %v4924 = vsub.s32 3, %v4923
        %v4925 = vrot.slane %v4524, %v4924
        %v4926 = vlaneseq
        %v4927 = vshrl.u32 %v4926, 7
        %v4928 = vsub.s32 4, %v4927
        %v4929 = vrot.slane %v4524, %v4928
        %v4930 = vlaneseq
        %v4931 = vshrl.u32 %v4930, 7
        %v4932 = vsub.s32 5, %v4931
        %v4933 = vrot.slane %v4524, %v4932
        %v4940 = vmul.f32 %v4717, %v4913
        %v4941 = vmul.f32 %v4718, %v4917
        %v4942 = vmul.f32 %v4719, %v4921
        %v4943 = vmul.f32 %v4720, %v4925
        %v4944 = vmul.f32 %v4721, %v4929
        %v4945 = vmul.f32 %v4722, %v4933
        %v4946 = vmul.f32 %v4723, %v4913
        %v4947 = vmul.f32 %v4724, %v4917
        %v4948 = vmul.f32 %v4725, %v4921
        %v4949 = vmul.f32 %v4726, %v4925
        %v4950 = vmul.f32 %v4727, %v4929
        %v4951 = vmul.f32 %v4728, %v4933
        %v4952 = vmul.f32 %v4729, %v4913
        %v4953 = vmul.f32 %v4730, %v4917
        %v4954 = vmul.f32 %v4731, %v4921
        %v4955 = vmul.f32 %v4732, %v4925
        %v4956 = vmul.f32 %v4733, %v4929
        %v4957 = vmul.f32 %v4734, %v4933
        %v4958 = vmul.f32 %v4735, %v4913
        %v4959 = vmul.f32 %v4736, %v4917
        %v4960 = vmul.f32 %v4737, %v4921
        %v4961 = vmul.f32 %v4738, %v4925
        %v4962 = vmul.f32 %v4739, %v4929
        %v4963 = vmul.f32 %v4740, %v4933
        %v4964 = vmul.f32 %v4741, %v4913
        %v4965 = vmul.f32 %v4742, %v4917
        %v4966 = vmul.f32 %v4743, %v4921
        %v4967 = vmul.f32 %v4744, %v4925
        %v4968 = vmul.f32 %v4745, %v4929
        %v4969 = vmul.f32 %v4746, %v4933
        %v4970 = vmul.f32 %v4747, %v4913
        %v4971 = vmul.f32 %v4748, %v4917
        %v4972 = vmul.f32 %v4749, %v4921
        %v4973 = vmul.f32 %v4750, %v4925
        %v4974 = vmul.f32 %v4751, %v4929
        %v4975 = vmul.f32 %v4752, %v4933
        %v4976 = vmul.f32 %v4753, %v4913
        %v4977 = vmul.f32 %v4754, %v4917
        %v4978 = vmul.f32 %v4755, %v4921
        %v4979 = vmul.f32 %v4756, %v4925
        %v4980 = vmul.f32 %v4757, %v4929
        %v4981 = vmul.f32 %v4758, %v4933
        %v4982 = vmul.f32 %v4759, %v4913
        %v4983 = vmul.f32 %v4760, %v4917
        %v4984 = vmul.f32 %v4761, %v4921
        %v4985 = vmul.f32 %v4762, %v4925
        %v4986 = vmul.f32 %v4763, %v4929
        %v4987 = vmul.f32 %v4764, %v4933
        %v4988 = vmul.f32 %v4765, %v4913
        %v4989 = vmul.f32 %v4766, %v4917
        %v4990 = vmul.f32 %v4767, %v4921
        %v4991 = vmul.f32 %v4768, %v4925
        %v4992 = vmul.f32 %v4769, %v4929
        %v4993 = vmul.f32 %v4770, %v4933
        %v4994 = vmul.f32 %v4771, %v4913
        %v4995 = vmul.f32 %v4772, %v4917
        %v4996 = vmul.f32 %v4773, %v4921
        %v4997 = vmul.f32 %v4774, %v4925
        %v4998 = vmul.f32 %v4775, %v4929
        %v4999 = vmul.f32 %v4776, %v4933
        %v5000 = vmul.f32 %v4777, %v4913
        %v5001 = vmul.f32 %v4778, %v4917
        %v5002 = vmul.f32 %v4779, %v4921
        %v5003 = vmul.f32 %v4780, %v4925
        %v5004 = vmul.f32 %v4781, %v4929
        %v5005 = vmul.f32 %v4782, %v4933
        %v5006 = vmul.f32 %v4783, %v4913
        %v5007 = vmul.f32 %v4784, %v4917
        %v5008 = vmul.f32 %v4785, %v4921
        %v5009 = vmul.f32 %v4786, %v4925
        %v5010 = vmul.f32 %v4787, %v4929
        %v5011 = vmul.f32 %v4788, %v4933
        %v5012 = vmul.f32 %v4789, %v4913
        %v5013 = vmul.f32 %v4790, %v4917
        %v5014 = vmul.f32 %v4791, %v4921
        %v5015 = vmul.f32 %v4792, %v4925
        %v5016 = vmul.f32 %v4793, %v4929
        %v5017 = vmul.f32 %v4794, %v4933
        %v5018 = vmul.f32 %v4795, %v4913
        %v5019 = vmul.f32 %v4796, %v4917
        %v5020 = vmul.f32 %v4797, %v4921
        %v5021 = vmul.f32 %v4798, %v4925
        %v5022 = vmul.f32 %v4799, %v4929
        %v5023 = vmul.f32 %v4800, %v4933
        %v5024 = vmul.f32 %v4801, %v4913
        %v5025 = vmul.f32 %v4802, %v4917
        %v5026 = vmul.f32 %v4803, %v4921
        %v5027 = vmul.f32 %v4804, %v4925
        %v5028 = vmul.f32 %v4805, %v4929
        %v5029 = vmul.f32 %v4806, %v4933
        %v5030 = vmul.f32 %v4807, %v4913
        %v5031 = vmul.f32 %v4808, %v4917
        %v5032 = vmul.f32 %v4809, %v4921
        %v5033 = vmul.f32 %v4810, %v4925
        %v5034 = vmul.f32 %v4811, %v4929
        %v5035 = vmul.f32 %v4812, %v4933
        %v5036 = vmul.f32 %v4813, %v4913
        %v5037 = vmul.f32 %v4814, %v4917
        %v5038 = vmul.f32 %v4815, %v4921
        %v5039 = vmul.f32 %v4816, %v4925
        %v5040 = vmul.f32 %v4817, %v4929
        %v5041 = vmul.f32 %v4818, %v4933
        %v5042 = vmul.f32 %v4819, %v4913
        %v5043 = vmul.f32 %v4820, %v4917
        %v5044 = vmul.f32 %v4821, %v4921
        %v5045 = vmul.f32 %v4822, %v4925
        %v5046 = vmul.f32 %v4823, %v4929
        %v5047 = vmul.f32 %v4824, %v4933
        %v5048 = vmul.f32 %v4825, %v4913
        %v5049 = vmul.f32 %v4826, %v4917
        %v5050 = vmul.f32 %v4827, %v4921
        %v5051 = vmul.f32 %v4828, %v4925
        %v5052 = vmul.f32 %v4829, %v4929
        %v5053 = vmul.f32 %v4830, %v4933
        %v5054 = vmul.f32 %v4831, %v4913
        %v5055 = vmul.f32 %v4832, %v4917
        %v5056 = vmul.f32 %v4833, %v4921
        %v5057 = vmul.f32 %v4834, %v4925
        %v5058 = vmul.f32 %v4835, %v4929
        %v5059 = vmul.f32 %v4836, %v4933
        %v5060 = vmul.f32 %v4837, %v4913
        %v5061 = vmul.f32 %v4838, %v4917
        %v5062 = vmul.f32 %v4839, %v4921
        %v5063 = vmul.f32 %v4840, %v4925
        %v5064 = vmul.f32 %v4841, %v4929
        %v5065 = vmul.f32 %v4842, %v4933
        %v5066 = vmul.f32 %v4843, %v4913
        %v5067 = vmul.f32 %v4844, %v4917
        %v5068 = vmul.f32 %v4845, %v4921
        %v5069 = vmul.f32 %v4846, %v4925
        %v5070 = vmul.f32 %v4847, %v4929
        %v5071 = vmul.f32 %v4848, %v4933
        %v5072 = vmul.f32 %v4849, %v4913
        %v5073 = vmul.f32 %v4850, %v4917
        %v5074 = vmul.f32 %v4851, %v4921
        %v5075 = vmul.f32 %v4852, %v4925
        %v5076 = vmul.f32 %v4853, %v4929
        %v5077 = vmul.f32 %v4854, %v4933
        %v5078 = vmul.f32 %v4855, %v4913
        %v5079 = vmul.f32 %v4856, %v4917
        %v5080 = vmul.f32 %v4857, %v4921
        %v5081 = vmul.f32 %v4858, %v4925
        %v5082 = vmul.f32 %v4859, %v4929
        %v5083 = vmul.f32 %v4860, %v4933
        %v5084 = vmul.f32 %v4861, %v4913
        %v5085 = vmul.f32 %v4862, %v4917
        %v5086 = vmul.f32 %v4863, %v4921
        %v5087 = vmul.f32 %v4864, %v4925
        %v5088 = vmul.f32 %v4865, %v4929
        %v5089 = vmul.f32 %v4866, %v4933
        %v5090 = vmul.f32 %v4867, %v4913
        %v5091 = vmul.f32 %v4868, %v4917
        %v5092 = vmul.f32 %v4869, %v4921
        %v5093 = vmul.f32 %v4870, %v4925
        %v5094 = vmul.f32 %v4871, %v4929
        %v5095 = vmul.f32 %v4872, %v4933
        %v5096 = vmul.f32 %v4873, %v4913
        %v5097 = vmul.f32 %v4874, %v4917
        %v5098 = vmul.f32 %v4875, %v4921
        %v5099 = vmul.f32 %v4876, %v4925
        %v5100 = vmul.f32 %v4877, %v4929
        %v5101 = vmul.f32 %v4878, %v4933
        %v5102 = vmul.f32 %v4879, %v4913
        %v5103 = vmul.f32 %v4880, %v4917
        %v5104 = vmul.f32 %v4881, %v4921
        %v5105 = vmul.f32 %v4882, %v4925
        %v5106 = vmul.f32 %v4883, %v4929
        %v5107 = vmul.f32 %v4884, %v4933
        %v5108 = vmul.f32 %v4885, %v4913
        %v5109 = vmul.f32 %v4886, %v4917
        %v5110 = vmul.f32 %v4887, %v4921
        %v5111 = vmul.f32 %v4888, %v4925
        %v5112 = vmul.f32 %v4889, %v4929
        %v5113 = vmul.f32 %v4890, %v4933
        %v5114 = vmul.f32 %v4891, %v4913
        %v5115 = vmul.f32 %v4892, %v4917
        %v5116 = vmul.f32 %v4893, %v4921
        %v5117 = vmul.f32 %v4894, %v4925
        %v5118 = vmul.f32 %v4895, %v4929
        %v5119 = vmul.f32 %v4896, %v4933
        %v5120 = vmul.f32 %v4897, %v4913
        %v5121 = vmul.f32 %v4898, %v4917
        %v5122 = vmul.f32 %v4899, %v4921
        %v5123 = vmul.f32 %v4900, %v4925
        %v5124 = vmul.f32 %v4901, %v4929
        %v5125 = vmul.f32 %v4902, %v4933
        %v5126 = vmul.f32 %v4903, %v4913
        %v5127 = vmul.f32 %v4904, %v4917
        %v5128 = vmul.f32 %v4905, %v4921
        %v5129 = vmul.f32 %v4906, %v4925
        %v5130 = vmul.f32 %v4907, %v4929
        %v5131 = vmul.f32 %v4908, %v4933
        %v5132 = vadd.f32 %v4525, %v4940
        %v5133 = vadd.f32 %v4526, %v4941
        %v5134 = vadd.f32 %v4527, %v4942
        %v5135 = vadd.f32 %v4528, %v4943
        %v5136 = vadd.f32 %v4529, %v4944
        %v5137 = vadd.f32 %v4530, %v4945
        %v5138 = vadd.f32 %v4531, %v4946
        %v5139 = vadd.f32 %v4532, %v4947
        %v5140 = vadd.f32 %v4533, %v4948
        %v5141 = vadd.f32 %v4534, %v4949
        %v5142 = vadd.f32 %v4535, %v4950
        %v5143 = vadd.f32 %v4536, %v4951
        %v5144 = vadd.f32 %v4537, %v4952
        %v5145 = vadd.f32 %v4538, %v4953
        %v5146 = vadd.f32 %v4539, %v4954
        %v5147 = vadd.f32 %v4540, %v4955
        %v5148 = vadd.f32 %v4541, %v4956
        %v5149 = vadd.f32 %v4542, %v4957
        %v5150 = vadd.f32 %v4543, %v4958
        %v5151 = vadd.f32 %v4544, %v4959
        %v5152 = vadd.f32 %v4545, %v4960
        %v5153 = vadd.f32 %v4546, %v4961
        %v5154 = vadd.f32 %v4547, %v4962
        %v5155 = vadd.f32 %v4548, %v4963
        %v5156 = vadd.f32 %v4549, %v4964
        %v5157 = vadd.f32 %v4550, %v4965
        %v5158 = vadd.f32 %v4551, %v4966
        %v5159 = vadd.f32 %v4552, %v4967
        %v5160 = vadd.f32 %v4553, %v4968
        %v5161 = vadd.f32 %v4554, %v4969
        %v5162 = vadd.f32 %v4555, %v4970
        %v5163 = vadd.f32 %v4556, %v4971
        %v5164 = vadd.f32 %v4557, %v4972
        %v5165 = vadd.f32 %v4558, %v4973
        %v5166 = vadd.f32 %v4559, %v4974
        %v5167 = vadd.f32 %v4560, %v4975
        %v5168 = vadd.f32 %v4561, %v4976
        %v5169 = vadd.f32 %v4562, %v4977
        %v5170 = vadd.f32 %v4563, %v4978
        %v5171 = vadd.f32 %v4564, %v4979
        %v5172 = vadd.f32 %v4565, %v4980
        %v5173 = vadd.f32 %v4566, %v4981
        %v5174 = vadd.f32 %v4567, %v4982
        %v5175 = vadd.f32 %v4568, %v4983
        %v5176 = vadd.f32 %v4569, %v4984
        %v5177 = vadd.f32 %v4570, %v4985
        %v5178 = vadd.f32 %v4571, %v4986
        %v5179 = vadd.f32 %v4572, %v4987
        %v5180 = vadd.f32 %v4573, %v4988
        %v5181 = vadd.f32 %v4574, %v4989
        %v5182 = vadd.f32 %v4575, %v4990
        %v5183 = vadd.f32 %v4576, %v4991
        %v5184 = vadd.f32 %v4577, %v4992
        %v5185 = vadd.f32 %v4578, %v4993
        %v5186 = vadd.f32 %v4579, %v4994
        %v5187 = vadd.f32 %v4580, %v4995
        %v5188 = vadd.f32 %v4581, %v4996
        %v5189 = vadd.f32 %v4582, %v4997
        %v5190 = vadd.f32 %v4583, %v4998
        %v5191 = vadd.f32 %v4584, %v4999
        %v5192 = vadd.f32 %v4585, %v5000
        %v5193 = vadd.f32 %v4586, %v5001
        %v5194 = vadd.f32 %v4587, %v5002
        %v5195 = vadd.f32 %v4588, %v5003
        %v5196 = vadd.f32 %v4589, %v5004
        %v5197 = vadd.f32 %v4590, %v5005
        %v5198 = vadd.f32 %v4591, %v5006
        %v5199 = vadd.f32 %v4592, %v5007
        %v5200 = vadd.f32 %v4593, %v5008
        %v5201 = vadd.f32 %v4594, %v5009
        %v5202 = vadd.f32 %v4595, %v5010
        %v5203 = vadd.f32 %v4596, %v5011
        %v5204 = vadd.f32 %v4597, %v5012
        %v5205 = vadd.f32 %v4598, %v5013
        %v5206 = vadd.f32 %v4599, %v5014
        %v5207 = vadd.f32 %v4600, %v5015
        %v5208 = vadd.f32 %v4601, %v5016
        %v5209 = vadd.f32 %v4602, %v5017
        %v5210 = vadd.f32 %v4603, %v5018
        %v5211 = vadd.f32 %v4604, %v5019
        %v5212 = vadd.f32 %v4605, %v5020
        %v5213 = vadd.f32 %v4606, %v5021
        %v5214 = vadd.f32 %v4607, %v5022
        %v5215 = vadd.f32 %v4608, %v5023
        %v5216 = vadd.f32 %v4609, %v5024
        %v5217 = vadd.f32 %v4610, %v5025
        %v5218 = vadd.f32 %v4611, %v5026
        %v5219 = vadd.f32 %v4612, %v5027
        %v5220 = vadd.f32 %v4613, %v5028
        %v5221 = vadd.f32 %v4614, %v5029
        %v5222 = vadd.f32 %v4615, %v5030
        %v5223 = vadd.f32 %v4616, %v5031
        %v5224 = vadd.f32 %v4617, %v5032
        %v5225 = vadd.f32 %v4618, %v5033
        %v5226 = vadd.f32 %v4619, %v5034
        %v5227 = vadd.f32 %v4620, %v5035
        %v5228 = vadd.f32 %v4621, %v5036
        %v5229 = vadd.f32 %v4622, %v5037
        %v5230 = vadd.f32 %v4623, %v5038
        %v5231 = vadd.f32 %v4624, %v5039
        %v5232 = vadd.f32 %v4625, %v5040
        %v5233 = vadd.f32 %v4626, %v5041
        %v5234 = vadd.f32 %v4627, %v5042
        %v5235 = vadd.f32 %v4628, %v5043
        %v5236 = vadd.f32 %v4629, %v5044
        %v5237 = vadd.f32 %v4630, %v5045
        %v5238 = vadd.f32 %v4631, %v5046
        %v5239 = vadd.f32 %v4632, %v5047
        %v5240 = vadd.f32 %v4633, %v5048
        %v5241 = vadd.f32 %v4634, %v5049
        %v5242 = vadd.f32 %v4635, %v5050
        %v5243 = vadd.f32 %v4636, %v5051
        %v5244 = vadd.f32 %v4637, %v5052
        %v5245 = vadd.f32 %v4638, %v5053
        %v5246 = vadd.f32 %v4639, %v5054
        %v5247 = vadd.f32 %v4640, %v5055
        %v5248 = vadd.f32 %v4641, %v5056
        %v5249 = vadd.f32 %v4642, %v5057
        %v5250 = vadd.f32 %v4643, %v5058
        %v5251 = vadd.f32 %v4644, %v5059
        %v5252 = vadd.f32 %v4645, %v5060
        %v5253 = vadd.f32 %v4646, %v5061
        %v5254 = vadd.f32 %v4647, %v5062
        %v5255 = vadd.f32 %v4648, %v5063
        %v5256 = vadd.f32 %v4649, %v5064
        %v5257 = vadd.f32 %v4650, %v5065
        %v5258 = vadd.f32 %v4651, %v5066
        %v5259 = vadd.f32 %v4652, %v5067
        %v5260 = vadd.f32 %v4653, %v5068
        %v5261 = vadd.f32 %v4654, %v5069
        %v5262 = vadd.f32 %v4655, %v5070
        %v5263 = vadd.f32 %v4656, %v5071
        %v5264 = vadd.f32 %v4657, %v5072
        %v5265 = vadd.f32 %v4658, %v5073
        %v5266 = vadd.f32 %v4659, %v5074
        %v5267 = vadd.f32 %v4660, %v5075
        %v5268 = vadd.f32 %v4661, %v5076
        %v5269 = vadd.f32 %v4662, %v5077
        %v5270 = vadd.f32 %v4663, %v5078
        %v5271 = vadd.f32 %v4664, %v5079
        %v5272 = vadd.f32 %v4665, %v5080
        %v5273 = vadd.f32 %v4666, %v5081
        %v5274 = vadd.f32 %v4667, %v5082
        %v5275 = vadd.f32 %v4668, %v5083
        %v5276 = vadd.f32 %v4669, %v5084
        %v5277 = vadd.f32 %v4670, %v5085
        %v5278 = vadd.f32 %v4671, %v5086
        %v5279 = vadd.f32 %v4672, %v5087
        %v5280 = vadd.f32 %v4673, %v5088
        %v5281 = vadd.f32 %v4674, %v5089
        %v5282 = vadd.f32 %v4675, %v5090
        %v5283 = vadd.f32 %v4676, %v5091
        %v5284 = vadd.f32 %v4677, %v5092
        %v5285 = vadd.f32 %v4678, %v5093
        %v5286 = vadd.f32 %v4679, %v5094
        %v5287 = vadd.f32 %v4680, %v5095
        %v5288 = vadd.f32 %v4681, %v5096
        %v5289 = vadd.f32 %v4682, %v5097
        %v5290 = vadd.f32 %v4683, %v5098
        %v5291 = vadd.f32 %v4684, %v5099
        %v5292 = vadd.f32 %v4685, %v5100
        %v5293 = vadd.f32 %v4686, %v5101
        %v5294 = vadd.f32 %v4687, %v5102
        %v5295 = vadd.f32 %v4688, %v5103
        %v5296 = vadd.f32 %v4689, %v5104
        %v5297 = vadd.f32 %v4690, %v5105
        %v5298 = vadd.f32 %v4691, %v5106
        %v5299 = vadd.f32 %v4692, %v5107
        %v5300 = vadd.f32 %v4693, %v5108
        %v5301 = vadd.f32 %v4694, %v5109
        %v5302 = vadd.f32 %v4695, %v5110
        %v5303 = vadd.f32 %v4696, %v5111
        %v5304 = vadd.f32 %v4697, %v5112
        %v5305 = vadd.f32 %v4698, %v5113
        %v5306 = vadd.f32 %v4699, %v5114
        %v5307 = vadd.f32 %v4700, %v5115
        %v5308 = vadd.f32 %v4701, %v5116
        %v5309 = vadd.f32 %v4702, %v5117
        %v5310 = vadd.f32 %v4703, %v5118
        %v5311 = vadd.f32 %v4704, %v5119
        %v5312 = vadd.f32 %v4705, %v5120
        %v5313 = vadd.f32 %v4706, %v5121
        %v5314 = vadd.f32 %v4707, %v5122
        %v5315 = vadd.f32 %v4708, %v5123
        %v5316 = vadd.f32 %v4709, %v5124
        %v5317 = vadd.f32 %v4710, %v5125
        %v5318 = vadd.f32 %v4711, %v5126
        %v5319 = vadd.f32 %v4712, %v5127
        %v5320 = vadd.f32 %v4713, %v5128
        %v5321 = vadd.f32 %v4714, %v5129
        %v5322 = vadd.f32 %v4715, %v5130
        %v5323 = vadd.f32 %v4716, %v5131
        %5324 = vst [vmem:[%s256] sm:$0xff] %v5132
        %5325 = vst [vmem:[%s256 + $0x8] sm:$0xff] %v5133
        %5326 = vst [vmem:[%s256 + $0x10] sm:$0xff] %v5134
        %5327 = vst [vmem:[%s256 + $0x18] sm:$0xff] %v5135
        %5328 = vst [vmem:[%s256 + $0x20] sm:$0xff] %v5136
        %5329 = vst [vmem:[%s256 + $0x28] sm:$0xff] %v5137
        %5330 = vst [vmem:[%s256 + $0x30] sm:$0xff] %v5138
        %5331 = vst [vmem:[%s256 + $0x38] sm:$0xff] %v5139
        %5332 = vst [vmem:[%s256 + $0x40] sm:$0xff] %v5140
        %5333 = vst [vmem:[%s256 + $0x48] sm:$0xff] %v5141
        %5334 = vst [vmem:[%s256 + $0x50] sm:$0xff] %v5142
        %5335 = vst [vmem:[%s256 + $0x58] sm:$0xff] %v5143
        %5336 = vst [vmem:[%s256 + $0x60] sm:$0xff] %v5144
        %5337 = vst [vmem:[%s256 + $0x68] sm:$0xff] %v5145
        %5338 = vst [vmem:[%s256 + $0x70] sm:$0xff] %v5146
        %5339 = vst [vmem:[%s256 + $0x78] sm:$0xff] %v5147
        %5340 = vst [vmem:[%s256 + $0x80] sm:$0xff] %v5148
        %5341 = vst [vmem:[%s256 + $0x88] sm:$0xff] %v5149
        %5342 = vst [vmem:[%s256 + $0x90] sm:$0xff] %v5150
        %5343 = vst [vmem:[%s256 + $0x98] sm:$0xff] %v5151
        %5344 = vst [vmem:[%s256 + $0xa0] sm:$0xff] %v5152
        %5345 = vst [vmem:[%s256 + $0xa8] sm:$0xff] %v5153
        %5346 = vst [vmem:[%s256 + $0xb0] sm:$0xff] %v5154
        %5347 = vst [vmem:[%s256 + $0xb8] sm:$0xff] %v5155
        %5348 = vst [vmem:[%s256 + $0xc0] sm:$0xff] %v5156
        %5349 = vst [vmem:[%s256 + $0xc8] sm:$0xff] %v5157
        %5350 = vst [vmem:[%s256 + $0xd0] sm:$0xff] %v5158
        %5351 = vst [vmem:[%s256 + $0xd8] sm:$0xff] %v5159
        %5352 = vst [vmem:[%s256 + $0xe0] sm:$0xff] %v5160
        %5353 = vst [vmem:[%s256 + $0xe8] sm:$0xff] %v5161
        %5354 = vst [vmem:[%s256 + $0xf0] sm:$0xff] %v5162
        %5355 = vst [vmem:[%s256 + $0xf8] sm:$0xff] %v5163
        %5356 = vst [vmem:[%s256 + $0x100] sm:$0xff] %v5164
        %5357 = vst [vmem:[%s256 + $0x108] sm:$0xff] %v5165
        %5358 = vst [vmem:[%s256 + $0x110] sm:$0xff] %v5166
        %5359 = vst [vmem:[%s256 + $0x118] sm:$0xff] %v5167
        %5360 = vst [vmem:[%s256 + $0x120] sm:$0xff] %v5168
        %5361 = vst [vmem:[%s256 + $0x128] sm:$0xff] %v5169
        %5362 = vst [vmem:[%s256 + $0x130] sm:$0xff] %v5170
        %5363 = vst [vmem:[%s256 + $0x138] sm:$0xff] %v5171
        %5364 = vst [vmem:[%s256 + $0x140] sm:$0xff] %v5172
        %5365 = vst [vmem:[%s256 + $0x148] sm:$0xff] %v5173
        %5366 = vst [vmem:[%s256 + $0x150] sm:$0xff] %v5174
        %5367 = vst [vmem:[%s256 + $0x158] sm:$0xff] %v5175
        %5368 = vst [vmem:[%s256 + $0x160] sm:$0xff] %v5176
        %5369 = vst [vmem:[%s256 + $0x168] sm:$0xff] %v5177
        %5370 = vst [vmem:[%s256 + $0x170] sm:$0xff] %v5178
        %5371 = vst [vmem:[%s256 + $0x178] sm:$0xff] %v5179
        %5372 = vst [vmem:[%s256 + $0x180] sm:$0xff] %v5180
        %5373 = vst [vmem:[%s256 + $0x188] sm:$0xff] %v5181
        %5374 = vst [vmem:[%s256 + $0x190] sm:$0xff] %v5182
        %5375 = vst [vmem:[%s256 + $0x198] sm:$0xff] %v5183
        %5376 = vst [vmem:[%s256 + $0x1a0] sm:$0xff] %v5184
        %5377 = vst [vmem:[%s256 + $0x1a8] sm:$0xff] %v5185
        %5378 = vst [vmem:[%s256 + $0x1b0] sm:$0xff] %v5186
        %5379 = vst [vmem:[%s256 + $0x1b8] sm:$0xff] %v5187
        %5380 = vst [vmem:[%s256 + $0x1c0] sm:$0xff] %v5188
        %5381 = vst [vmem:[%s256 + $0x1c8] sm:$0xff] %v5189
        %5382 = vst [vmem:[%s256 + $0x1d0] sm:$0xff] %v5190
        %5383 = vst [vmem:[%s256 + $0x1d8] sm:$0xff] %v5191
        %5384 = vst [vmem:[%s256 + $0x1e0] sm:$0xff] %v5192
        %5385 = vst [vmem:[%s256 + $0x1e8] sm:$0xff] %v5193
        %5386 = vst [vmem:[%s256 + $0x1f0] sm:$0xff] %v5194
        %5387 = vst [vmem:[%s256 + $0x1f8] sm:$0xff] %v5195
        %5388 = vst [vmem:[%s256 + $0x200] sm:$0xff] %v5196
        %5389 = vst [vmem:[%s256 + $0x208] sm:$0xff] %v5197
        %5390 = vst [vmem:[%s256 + $0x210] sm:$0xff] %v5198
        %5391 = vst [vmem:[%s256 + $0x218] sm:$0xff] %v5199
        %5392 = vst [vmem:[%s256 + $0x220] sm:$0xff] %v5200
        %5393 = vst [vmem:[%s256 + $0x228] sm:$0xff] %v5201
        %5394 = vst [vmem:[%s256 + $0x230] sm:$0xff] %v5202
        %5395 = vst [vmem:[%s256 + $0x238] sm:$0xff] %v5203
        %5396 = vst [vmem:[%s256 + $0x240] sm:$0xff] %v5204
        %5397 = vst [vmem:[%s256 + $0x248] sm:$0xff] %v5205
        %5398 = vst [vmem:[%s256 + $0x250] sm:$0xff] %v5206
        %5399 = vst [vmem:[%s256 + $0x258] sm:$0xff] %v5207
        %5400 = vst [vmem:[%s256 + $0x260] sm:$0xff] %v5208
        %5401 = vst [vmem:[%s256 + $0x268] sm:$0xff] %v5209
        %5402 = vst [vmem:[%s256 + $0x270] sm:$0xff] %v5210
        %5403 = vst [vmem:[%s256 + $0x278] sm:$0xff] %v5211
        %5404 = vst [vmem:[%s256 + $0x280] sm:$0xff] %v5212
        %5405 = vst [vmem:[%s256 + $0x288] sm:$0xff] %v5213
        %5406 = vst [vmem:[%s256 + $0x290] sm:$0xff] %v5214
        %5407 = vst [vmem:[%s256 + $0x298] sm:$0xff] %v5215
        %5408 = vst [vmem:[%s256 + $0x2a0] sm:$0xff] %v5216
        %5409 = vst [vmem:[%s256 + $0x2a8] sm:$0xff] %v5217
        %5410 = vst [vmem:[%s256 + $0x2b0] sm:$0xff] %v5218
        %5411 = vst [vmem:[%s256 + $0x2b8] sm:$0xff] %v5219
        %5412 = vst [vmem:[%s256 + $0x2c0] sm:$0xff] %v5220
        %5413 = vst [vmem:[%s256 + $0x2c8] sm:$0xff] %v5221
        %5414 = vst [vmem:[%s256 + $0x2d0] sm:$0xff] %v5222
        %5415 = vst [vmem:[%s256 + $0x2d8] sm:$0xff] %v5223
        %5416 = vst [vmem:[%s256 + $0x2e0] sm:$0xff] %v5224
        %5417 = vst [vmem:[%s256 + $0x2e8] sm:$0xff] %v5225
        %5418 = vst [vmem:[%s256 + $0x2f0] sm:$0xff] %v5226
        %5419 = vst [vmem:[%s256 + $0x2f8] sm:$0xff] %v5227
        %5420 = vst [vmem:[%s256 + $0x300] sm:$0xff] %v5228
        %5421 = vst [vmem:[%s256 + $0x308] sm:$0xff] %v5229
        %5422 = vst [vmem:[%s256 + $0x310] sm:$0xff] %v5230
        %5423 = vst [vmem:[%s256 + $0x318] sm:$0xff] %v5231
        %5424 = vst [vmem:[%s256 + $0x320] sm:$0xff] %v5232
        %5425 = vst [vmem:[%s256 + $0x328] sm:$0xff] %v5233
        %5426 = vst [vmem:[%s256 + $0x330] sm:$0xff] %v5234
        %5427 = vst [vmem:[%s256 + $0x338] sm:$0xff] %v5235
        %5428 = vst [vmem:[%s256 + $0x340] sm:$0xff] %v5236
        %5429 = vst [vmem:[%s256 + $0x348] sm:$0xff] %v5237
        %5430 = vst [vmem:[%s256 + $0x350] sm:$0xff] %v5238
        %5431 = vst [vmem:[%s256 + $0x358] sm:$0xff] %v5239
        %5432 = vst [vmem:[%s256 + $0x360] sm:$0xff] %v5240
        %5433 = vst [vmem:[%s256 + $0x368] sm:$0xff] %v5241
        %5434 = vst [vmem:[%s256 + $0x370] sm:$0xff] %v5242
        %5435 = vst [vmem:[%s256 + $0x378] sm:$0xff] %v5243
        %5436 = vst [vmem:[%s256 + $0x380] sm:$0xff] %v5244
        %5437 = vst [vmem:[%s256 + $0x388] sm:$0xff] %v5245
        %5438 = vst [vmem:[%s256 + $0x390] sm:$0xff] %v5246
        %5439 = vst [vmem:[%s256 + $0x398] sm:$0xff] %v5247
        %5440 = vst [vmem:[%s256 + $0x3a0] sm:$0xff] %v5248
        %5441 = vst [vmem:[%s256 + $0x3a8] sm:$0xff] %v5249
        %5442 = vst [vmem:[%s256 + $0x3b0] sm:$0xff] %v5250
        %5443 = vst [vmem:[%s256 + $0x3b8] sm:$0xff] %v5251
        %5444 = vst [vmem:[%s256 + $0x3c0] sm:$0xff] %v5252
        %5445 = vst [vmem:[%s256 + $0x3c8] sm:$0xff] %v5253
        %5446 = vst [vmem:[%s256 + $0x3d0] sm:$0xff] %v5254
        %5447 = vst [vmem:[%s256 + $0x3d8] sm:$0xff] %v5255
        %5448 = vst [vmem:[%s256 + $0x3e0] sm:$0xff] %v5256
        %5449 = vst [vmem:[%s256 + $0x3e8] sm:$0xff] %v5257
        %5450 = vst [vmem:[%s256 + $0x3f0] sm:$0xff] %v5258
        %5451 = vst [vmem:[%s256 + $0x3f8] sm:$0xff] %v5259
        %5452 = vst [vmem:[%s256 + $0x400] sm:$0xff] %v5260
        %5453 = vst [vmem:[%s256 + $0x408] sm:$0xff] %v5261
        %5454 = vst [vmem:[%s256 + $0x410] sm:$0xff] %v5262
        %5455 = vst [vmem:[%s256 + $0x418] sm:$0xff] %v5263
        %5456 = vst [vmem:[%s256 + $0x420] sm:$0xff] %v5264
        %5457 = vst [vmem:[%s256 + $0x428] sm:$0xff] %v5265
        %5458 = vst [vmem:[%s256 + $0x430] sm:$0xff] %v5266
        %5459 = vst [vmem:[%s256 + $0x438] sm:$0xff] %v5267
        %5460 = vst [vmem:[%s256 + $0x440] sm:$0xff] %v5268
        %5461 = vst [vmem:[%s256 + $0x448] sm:$0xff] %v5269
        %5462 = vst [vmem:[%s256 + $0x450] sm:$0xff] %v5270
        %5463 = vst [vmem:[%s256 + $0x458] sm:$0xff] %v5271
        %5464 = vst [vmem:[%s256 + $0x460] sm:$0xff] %v5272
        %5465 = vst [vmem:[%s256 + $0x468] sm:$0xff] %v5273
        %5466 = vst [vmem:[%s256 + $0x470] sm:$0xff] %v5274
        %5467 = vst [vmem:[%s256 + $0x478] sm:$0xff] %v5275
        %5468 = vst [vmem:[%s256 + $0x480] sm:$0xff] %v5276
        %5469 = vst [vmem:[%s256 + $0x488] sm:$0xff] %v5277
        %5470 = vst [vmem:[%s256 + $0x490] sm:$0xff] %v5278
        %5471 = vst [vmem:[%s256 + $0x498] sm:$0xff] %v5279
        %5472 = vst [vmem:[%s256 + $0x4a0] sm:$0xff] %v5280
        %5473 = vst [vmem:[%s256 + $0x4a8] sm:$0xff] %v5281
        %5474 = vst [vmem:[%s256 + $0x4b0] sm:$0xff] %v5282
        %5475 = vst [vmem:[%s256 + $0x4b8] sm:$0xff] %v5283
        %5476 = vst [vmem:[%s256 + $0x4c0] sm:$0xff] %v5284
        %5477 = vst [vmem:[%s256 + $0x4c8] sm:$0xff] %v5285
        %5478 = vst [vmem:[%s256 + $0x4d0] sm:$0xff] %v5286
        %5479 = vst [vmem:[%s256 + $0x4d8] sm:$0xff] %v5287
        %5480 = vst [vmem:[%s256 + $0x4e0] sm:$0xff] %v5288
        %5481 = vst [vmem:[%s256 + $0x4e8] sm:$0xff] %v5289
        %5482 = vst [vmem:[%s256 + $0x4f0] sm:$0xff] %v5290
        %5483 = vst [vmem:[%s256 + $0x4f8] sm:$0xff] %v5291
        %5484 = vst [vmem:[%s256 + $0x500] sm:$0xff] %v5292
        %5485 = vst [vmem:[%s256 + $0x508] sm:$0xff] %v5293
        %5486 = vst [vmem:[%s256 + $0x510] sm:$0xff] %v5294
        %5487 = vst [vmem:[%s256 + $0x518] sm:$0xff] %v5295
        %5488 = vst [vmem:[%s256 + $0x520] sm:$0xff] %v5296
        %5489 = vst [vmem:[%s256 + $0x528] sm:$0xff] %v5297
        %5490 = vst [vmem:[%s256 + $0x530] sm:$0xff] %v5298
        %5491 = vst [vmem:[%s256 + $0x538] sm:$0xff] %v5299
        %5492 = vst [vmem:[%s256 + $0x540] sm:$0xff] %v5300
        %5493 = vst [vmem:[%s256 + $0x548] sm:$0xff] %v5301
        %5494 = vst [vmem:[%s256 + $0x550] sm:$0xff] %v5302
        %5495 = vst [vmem:[%s256 + $0x558] sm:$0xff] %v5303
        %5496 = vst [vmem:[%s256 + $0x560] sm:$0xff] %v5304
        %5497 = vst [vmem:[%s256 + $0x568] sm:$0xff] %v5305
        %5498 = vst [vmem:[%s256 + $0x570] sm:$0xff] %v5306
        %5499 = vst [vmem:[%s256 + $0x578] sm:$0xff] %v5307
        %5500 = vst [vmem:[%s256 + $0x580] sm:$0xff] %v5308
        %5501 = vst [vmem:[%s256 + $0x588] sm:$0xff] %v5309
        %5502 = vst [vmem:[%s256 + $0x590] sm:$0xff] %v5310
        %5503 = vst [vmem:[%s256 + $0x598] sm:$0xff] %v5311
        %5504 = vst [vmem:[%s256 + $0x5a0] sm:$0xff] %v5312
        %5505 = vst [vmem:[%s256 + $0x5a8] sm:$0xff] %v5313
        %5506 = vst [vmem:[%s256 + $0x5b0] sm:$0xff] %v5314
        %5507 = vst [vmem:[%s256 + $0x5b8] sm:$0xff] %v5315
        %5508 = vst [vmem:[%s256 + $0x5c0] sm:$0xff] %v5316
        %5509 = vst [vmem:[%s256 + $0x5c8] sm:$0xff] %v5317
        %5510 = vst [vmem:[%s256 + $0x5d0] sm:$0xff] %v5318
        %5511 = vst [vmem:[%s256 + $0x5d8] sm:$0xff] %v5319
        %5512 = vst [vmem:[%s256 + $0x5e0] sm:$0xff] %v5320
        %5513 = vst [vmem:[%s256 + $0x5e8] sm:$0xff] %v5321
        %5514 = vst [vmem:[%s256 + $0x5f0] sm:$0xff] %v5322
        %5515 = vst [vmem:[%s256 + $0x5f8] sm:$0xff] %v5323
        %s5516 = sand.u32 %s120, 1
        %s5517 = scalar_lea.sflag [#allocation4], %s5516
        %s5518 = sand.u32 %s120, 1
        %s5519 = smul.addr %s5518, 1536
        %s5520 = scalar_lea.vmem [#allocation10], %s5519
        // Predicated region
        $region53: #{tpu_custom_call.1} parent=35 // pred_check
          %p5521 = pneg %p130
        $region54: #{tpu_custom_call.1} parent=35 // pred_check_branch
          %5523 = sbr.rel (%p5521) target = $region56
        $region55: #{tpu_custom_call.1} parent=35 // pred_region
          %s5524 = smul.u32 32, %s23
          %s5526 = ssub.s32 24576, 24576
          %5527 = vsyncadd %s5517, %s5526
          %s5528 = smul.addr %s5524, 6
          %s5529 = smul.addr %s5528, 128
          %s5530 = scalar_lea.hbm %s4, %s5529
          %s5531 = sshll.u32 %s5520, 4
          %s5532 = int_to_ptr.vmem [resolvable:$true] %s5531
          %5537 = dma.vmem_to_hbm [thread:$0]  %s5532, 24576, %s5530, %s5517, 768, 768, 48
        $region56: #{tpu_custom_call.1} parent=35 // pred_fallthru
          _
      $region36: #{tpu_custom_call.1} parent=5 // pred_fallthru
        _
      %p5538 = scmp.le.s32.totalorder 2, %s18
      // Predicated region
      $region57: #{tpu_custom_call.1} parent=5 // pred_check
        %p5539 = pneg %p5538
      $region58: #{tpu_custom_call.1} parent=5 // pred_check_branch
        %5541 = sbr.rel (%p5539) target = $region60
      $region59: #{tpu_custom_call.1} parent=5 // pred_region
        %s5542 = ssub.s32 %s18, 2
        // Predicated region
        $region61: #{tpu_custom_call.1} parent=59 // pred_check
          %p5543 = pneg %p136
        $region62: #{tpu_custom_call.1} parent=59 // pred_check_branch
          %5545 = sbr.rel (%p5543) target = $region64
        $region63: #{tpu_custom_call.1} parent=59 // pred_region
          %s5546 = sand.u32 %s121, 1
          %s5547 = scalar_lea.sflag [#allocation4], %s5546
          %s5548 = sand.u32 %s121, 1
          %s5549 = smul.addr %s5548, 1536
          %s5550 = scalar_lea.vmem [#allocation10], %s5549
          %5551 = dma.done %s5547, 24576
        $region64: #{tpu_custom_call.1} parent=59 // pred_fallthru
          _
      $region60: #{tpu_custom_call.1} parent=5 // pred_fallthru
        _
    $region6: #{tpu_custom_call.1} parent=1 // loop_footer
      %s22 = sadd.s32 1, %s18
    $region7: #{tpu_custom_call.1} parent=1 // loop_footer_branch
      %17 = sbr.rel target = $region3
    $region8: #{tpu_custom_call.1} parent=1 // loop_exit
      _
    %5552 = vsyncpa [#allocation3], 1
    %s5553 = scalar_lea.sflag [#allocation3], 1
    %5554 = vsyncpa %s5553, 1
    %5555 = vsyncpa [#allocation6], 1
    %5556 = vsyncpa [#allocation9], 1
    %5557 = vsyncpa [#allocation4], 1
    %s5558 = scalar_lea.sflag [#allocation4], 1
    %5559 = vsyncpa %s5558, 1

</llo_original>
